<compile_context>
chip_gen: v5e
topology: v5e:2x2
jax: 0.10.0
libtpu: 0.0.40
codegen_flags: <defaults>
</compile_context>

<pallas_src>
import jax
import jax.numpy as jnp
from jax.experimental import pallas as pl
from jax.experimental.pallas import tpu as pltpu

# ---------------- model dimensions (small, synthetic) ----------------
C_IN = 3      # RGB input
C_STEM = 16   # stem conv out channels
C_EXP = 32    # MBConv expansion channels
C_SE = 8      # squeeze-excite bottleneck
C_PROJ = 24   # MBConv project channels
C_HEAD = 64   # efficientnet._conv_head.out_channels -> classifier in_features
LANE = 128    # TPU lane width; every channel dim is zero-padded to this

_WEIGHT_KEYS = ("stem_w", "stem_b", "exp_w", "exp_b", "dw_w", "dw_b",
                "se1_w", "se1_b", "se2_w", "se2_b", "proj_w", "proj_b",
                "head_w", "head_b", "cls_w", "cls_b")


def _swish(v):
    return v * jax.nn.sigmoid(v)


# ---------------- fused Pallas kernel (one grid step == one image) ----------------
def _efficientnet_gen_kernel(
        x_ref,                                      # (4, ph, pw, C_IN)  stride-2 phase split
        stem_w_ref, stem_b_ref,                     # (3,3,C_IN,LANE) f32, (1,LANE) f32
        exp_w_ref, exp_b_ref,                       # (LANE,LANE) bf16,   (1,LANE) f32
        dw_w_ref, dw_b_ref,                         # (3,3,LANE) f32,     (1,LANE) f32
        se1_w_ref, se1_b_ref,                       # (LANE,LANE) bf16,   (1,LANE) f32
        se2_w_ref, se2_b_ref,
        proj_w_ref, proj_b_ref,
        head_w_ref, head_b_ref,
        cls_w_ref, cls_b_ref,                       # (1,LANE) f32, (1,LANE) f32
        out_ref,                                    # (1, LANE) f32 (logit broadcast on lanes)
        dwpad_ref):                                 # VMEM scratch (ho+2, wo+2, LANE) f32
    f32 = jnp.float32
    bf16 = jnp.bfloat16
    _, ph, pw, c_in = x_ref.shape
    ho, wo = ph - 1, pw - 1
    lane = out_ref.shape[-1]
    m = ho * wo

    # ---- stem: 3x3 stride-2 conv (+ folded BN bias) + swish, as 9 accumulated tap matmuls.
    # x_ref holds the 4 stride-2 phases of the zero-padded input; each tap is a
    # unit-stride window of one phase (no im2col blow-up, input loaded once).
    xv = x_ref[...]                                 # (4, ph, pw, C_IN)
    sw = stem_w_ref[...]                            # (3, 3, C_IN, LANE)
    acc = stem_b_ref[...]                           # bias folded into the accumulator init
    for ky in range(3):
        for kx in range(3):
            phase = 2 * (ky % 2) + (kx % 2)
            tap = xv[phase, ky // 2:ky // 2 + ho, kx // 2:kx // 2 + wo, :]   # (ho, wo, C_IN)
            acc = acc + jnp.dot(tap.reshape(m, c_in), sw[ky, kx],
                                preferred_element_type=f32)
    h = _swish(acc)                                                          # (m, LANE) f32

    # ---- MBConv expand 1x1 + swish (bf16 MXU, f32 accumulation) ----
    e = _swish(jnp.dot(h.astype(bf16), exp_w_ref[...],
                       preferred_element_type=f32) + exp_b_ref[...])         # (m, LANE)

    # ---- depthwise 3x3 stride-1 + swish; zero halo kept in a small VMEM scratch.
    # The scratch is per-core state -> re-zero it every step (batch axis may be
    # core-parallel, so a "zero only on program_id==0" init would be unsafe).
    dwpad_ref[...] = jnp.zeros(dwpad_ref.shape, f32)
    dwpad_ref[1:ho + 1, 1:wo + 1, :] = e.reshape(ho, wo, lane)
    ev = dwpad_ref[...]                                                      # (ho+2, wo+2, LANE)
    dwv = dw_w_ref[...]                                                      # (3, 3, LANE)
    dacc = dw_b_ref[...].reshape(1, 1, lane)                                 # bias as init
    for ky in range(3):
        for kx in range(3):
            dacc = dacc + ev[ky:ky + ho, kx:kx + wo, :] * dwv[ky, kx, :]
    d = _swish(dacc).reshape(m, lane)                                        # (m, LANE)

    # ---- squeeze-excite: GAP + two tiny matmuls + sigmoid gate, fused in-kernel ----
    s = jnp.sum(d, axis=0, keepdims=True) * (1.0 / m)                        # (1, LANE)
    s = _swish(jnp.dot(s.astype(bf16), se1_w_ref[...],
                       preferred_element_type=f32) + se1_b_ref[...])
    g = jax.nn.sigmoid(jnp.dot(s.astype(bf16), se2_w_ref[...],
                               preferred_element_type=f32) + se2_b_ref[...])
    d = d * g                                                                # channel re-weight

    # ---- MBConv project 1x1 (no activation) ----
    p = jnp.dot(d.astype(bf16), proj_w_ref[...],
                preferred_element_type=f32) + proj_b_ref[...]

    # ---- head 1x1 conv + swish ----
    hd = _swish(jnp.dot(p.astype(bf16), head_w_ref[...],
                        preferred_element_type=f32) + head_b_ref[...])       # (m, LANE)

    # ---- global avg pool -> flatten -> dropout(identity, eval) -> Linear(C_HEAD, 1) ----
    # TODO(synk): training-mode dropout not implemented; eval-mode identity is used.
    feat = jnp.sum(hd, axis=0, keepdims=True) * (1.0 / m)                    # (1, LANE)
    logit = jnp.sum(feat * cls_w_ref[...], axis=-1, keepdims=True)           # (1, 1)
    out_ref[...] = (jnp.broadcast_to(logit, (1, lane)) + cls_b_ref[...]).astype(out_ref.dtype)


def _const_index_map(ndim):
    return lambda i: (0,) * ndim


@jax.jit
def efficientnet_gen_forward(packed, x_nchw):
    """EfficientNetGen.forward: NCHW input -> (N, 1) logits."""
    x = jnp.transpose(x_nchw, (0, 2, 3, 1)).astype(jnp.float32)              # NHWC
    n, h, w, c = x.shape
    assert h % 2 == 0 and w % 2 == 0, "even spatial dims expected"
    ho, wo = h // 2, w // 2                                                  # stem stride 2
    ph, pw = ho + 1, wo + 1
    m = ho * wo

    # Stride-2 phase split (space-to-depth) of the zero-padded input: a 1x relayout, not
    # an im2col expansion.  xph[4*b + 2*pr + pc, a, bb, :] == xpad[b, 2a+pr, 2bb+pc, :]
    xp = jnp.pad(x, ((0, 0), (1, 1), (1, 1), (0, 0)))
    xph = (xp.reshape(n, ph, 2, pw, 2, c)
             .transpose(0, 2, 4, 1, 3, 5)
             .reshape(n * 4, ph, pw, c))

    in_specs = [pl.BlockSpec((4, ph, pw, c), lambda i: (i, 0, 0, 0))]
    weights = []
    for k in _WEIGHT_KEYS:
        wk = packed[k]
        # whole-array VMEM block, constant index map -> DMA'd once, not per grid step
        in_specs.append(pl.BlockSpec(wk.shape, _const_index_map(wk.ndim)))
        weights.append(wk)

    # Advisory cost estimate so XLA schedules around the fused custom call sensibly.
    flops_per_img = 2 * m * LANE * (9 * C_IN + 3 * LANE) + 2 * 9 * m * LANE + 4 * LANE * LANE
    trans_per_img = 4 * m * LANE + 3 * LANE
    bytes_weights = sum(int(v.size) * v.dtype.itemsize for v in weights)
    cost = pl.CostEstimate(
        flops=n * flops_per_img,
        transcendentals=n * trans_per_img,
        bytes_accessed=bytes_weights + int(xph.size) * 4 + n * LANE * 4,
    )

    out = pl.pallas_call(
        _efficientnet_gen_kernel,
        out_shape=jax.ShapeDtypeStruct((n, 1, LANE), jnp.float32),
        grid_spec=pltpu.PrefetchScalarGridSpec(
            num_scalar_prefetch=0,
            grid=(n,),
            in_specs=in_specs,
            out_specs=pl.BlockSpec((None, 1, LANE), lambda i: (i, 0, 0)),
            scratch_shapes=[pltpu.VMEM((ho + 2, wo + 2, LANE), jnp.float32)],
        ),
        compiler_params=pltpu.CompilerParams(
            dimension_semantics=("parallel",),            # shard batch across TCs (v7x)
            vmem_limit_bytes=32 * 1024 * 1024,            # explicit; per-step use is ~3 MB
        ),
        cost_estimate=cost,
    )(xph, *weights)

    return out[:, 0, :1]                                  # (N, 1) logit


# ---------------- parameters ----------------
def init_params(key):
    ks = jax.random.split(key, 16)

    def cw(k, *shape):
        fan_in = 1
        for s in shape[:-1]:
            fan_in *= s
        return jax.random.normal(k, shape, jnp.float32) / jnp.sqrt(float(fan_in))

    def bias(k, cdim):
        return 0.01 * jax.random.normal(k, (cdim,), jnp.float32)

    p = {}
    # BN layers are folded into the conv weights/biases (inference mode).
    p["stem_w"] = cw(ks[0], 3, 3, C_IN, C_STEM)
    p["stem_b"] = bias(ks[1], C_STEM)
    p["exp_w"] = cw(ks[2], C_STEM, C_EXP)
    p["exp_b"] = bias(ks[3], C_EXP)
    p["dw_w"] = jax.random.normal(ks[4], (3, 3, C_EXP), jnp.float32) / 3.0
    p["dw_b"] = bias(ks[5], C_EXP)
    p["se1_w"] = cw(ks[6], C_EXP, C_SE)
    p["se1_b"] = bias(ks[7], C_SE)
    p["se2_w"] = cw(ks[8], C_SE, C_EXP)
    p["se2_b"] = bias(ks[9], C_EXP)
    p["proj_w"] = cw(ks[10], C_EXP, C_PROJ)
    p["proj_b"] = bias(ks[11], C_PROJ)
    p["head_w"] = cw(ks[12], C_PROJ, C_HEAD)
    p["head_b"] = bias(ks[13], C_HEAD)
    # nn.Linear(C_HEAD, 1): stored as (C_HEAD, 1) so y = x @ W + b
    p["cls_w"] = cw(ks[14], C_HEAD, 1)
    p["cls_b"] = bias(ks[15], 1)
    return p


def _pad_to(a, shape, dtype):
    out = jnp.zeros(shape, a.dtype)
    out = out.at[tuple(slice(0, s) for s in a.shape)].set(a)
    return out.astype(dtype)


def pack_params(p):
    """Zero-pad all channel dims to LANE (lane-dense) and cast MXU weights to bf16."""
    bf16, f32 = jnp.bfloat16, jnp.float32
    q = {}
    q["stem_w"] = _pad_to(p["stem_w"], (3, 3, C_IN, LANE), f32)
    q["stem_b"] = _pad_to(p["stem_b"][None, :], (1, LANE), f32)
    q["exp_w"] = _pad_to(p["exp_w"], (LANE, LANE), bf16)
    q["exp_b"] = _pad_to(p["exp_b"][None, :], (1, LANE), f32)
    q["dw_w"] = _pad_to(p["dw_w"], (3, 3, LANE), f32)
    q["dw_b"] = _pad_to(p["dw_b"][None, :], (1, LANE), f32)
    q["se1_w"] = _pad_to(p["se1_w"], (LANE, LANE), bf16)
    q["se1_b"] = _pad_to(p["se1_b"][None, :], (1, LANE), f32)
    q["se2_w"] = _pad_to(p["se2_w"], (LANE, LANE), bf16)
    q["se2_b"] = _pad_to(p["se2_b"][None, :], (1, LANE), f32)
    q["proj_w"] = _pad_to(p["proj_w"], (LANE, LANE), bf16)
    q["proj_b"] = _pad_to(p["proj_b"][None, :], (1, LANE), f32)
    q["head_w"] = _pad_to(p["head_w"], (LANE, LANE), bf16)
    q["head_b"] = _pad_to(p["head_b"][None, :], (1, LANE), f32)
    q["cls_w"] = _pad_to(p["cls_w"].T, (1, LANE), f32)        # row vector, VPU dot in-kernel
    q["cls_b"] = jnp.full((1, LANE), p["cls_b"][0], f32)      # bias replicated on all lanes
    return q


# ---------------- pure-JAX (XLA) reference for a numerical sanity check ----------------
def reference_forward(params, x_nchw):
    x = jnp.transpose(x_nchw, (0, 2, 3, 1)).astype(jnp.float32)

    y = jax.lax.conv_general_dilated(
        x, params["stem_w"], window_strides=(2, 2), padding=((1, 1), (1, 1)),
        dimension_numbers=("NHWC", "HWIO", "NHWC"))
    y = _swish(y + params["stem_b"])

    e = _swish(jnp.einsum("nhwc,cd->nhwd", y, params["exp_w"]) + params["exp_b"])

    ep = jnp.pad(e, ((0, 0), (1, 1), (1, 1), (0, 0)))
    hh, ww = e.shape[1], e.shape[2]
    dacc = sum(ep[:, ky:ky + hh, kx:kx + ww, :] * params["dw_w"][ky, kx]
               for ky in range(3) for kx in range(3))
    d = _swish(dacc + params["dw_b"])

    s = jnp.mean(d, axis=(1, 2))
    s = _swish(s @ params["se1_w"] + params["se1_b"])
    g = jax.nn.sigmoid(s @ params["se2_w"] + params["se2_b"])
    d = d * g[:, None, None, :]

    p = jnp.einsum("nhwc,cd->nhwd", d, params["proj_w"]) + params["proj_b"]
    hd = _swish(jnp.einsum("nhwc,cd->nhwd", p, params["head_w"]) + params["head_b"])

    feat = jnp.mean(hd, axis=(1, 2))
    return feat @ params["cls_w"] + params["cls_b"]


if __name__ == "__main__":
    key = jax.random.PRNGKey(0)
    pkey, xkey = jax.random.split(key)
    params = init_params(pkey)
    packed = pack_params(params)

    x = jax.random.normal(xkey, (2, 3, 16, 16), jnp.float32)   # NCHW, like the PyTorch module

    out = efficientnet_gen_forward(packed, x)
    out = jax.block_until_ready(out)
    assert out.shape == (2, 1), out.shape
    assert bool(jnp.all(jnp.isfinite(out)))

    # sanity check against a pure-JAX f32 reference (loose tolerance: bf16 matmuls)
    ref = reference_forward(params, x)
    assert jnp.allclose(out, ref, atol=1e-1, rtol=1e-1), (out, ref)

    print("KERNEL_OK")
</pallas_src>

<mosaic_0001>
module attributes {stable_mosaic.version = 11 : i64} {
  func.func @_efficientnet_gen_kernel(%arg0: i32, %arg1: memref<4x9x9x3xf32, #tpu.memory_space<vmem>>, %arg2: memref<3x3x3x128xf32, #tpu.memory_space<vmem>>, %arg3: memref<1x128xf32, #tpu.memory_space<vmem>>, %arg4: memref<128x128xbf16, #tpu.memory_space<vmem>>, %arg5: memref<1x128xf32, #tpu.memory_space<vmem>>, %arg6: memref<3x3x128xf32, #tpu.memory_space<vmem>>, %arg7: memref<1x128xf32, #tpu.memory_space<vmem>>, %arg8: memref<128x128xbf16, #tpu.memory_space<vmem>>, %arg9: memref<1x128xf32, #tpu.memory_space<vmem>>, %arg10: memref<128x128xbf16, #tpu.memory_space<vmem>>, %arg11: memref<1x128xf32, #tpu.memory_space<vmem>>, %arg12: memref<128x128xbf16, #tpu.memory_space<vmem>>, %arg13: memref<1x128xf32, #tpu.memory_space<vmem>>, %arg14: memref<128x128xbf16, #tpu.memory_space<vmem>>, %arg15: memref<1x128xf32, #tpu.memory_space<vmem>>, %arg16: memref<1x128xf32, #tpu.memory_space<vmem>>, %arg17: memref<1x128xf32, #tpu.memory_space<vmem>>, %arg18: memref<1x1x128xf32, #tpu.memory_space<vmem>>, %arg19: memref<10x10x128xf32, #tpu.memory_space<vmem>>) attributes {dimension_semantics = [#tpu.dimension_semantics<parallel>], iteration_bounds = array<i64: 2>, scalar_prefetch = 0 : i64, scratch_operands = 1 : i64, tpu.core_type = #tpu.core_type<tc>, window_params = [{transform_indices = @transform_0, window_bounds = array<i64: 4, 9, 9, 3>}, {pipeline_mode = #tpu.pipeline_mode<synchronous>, transform_indices = @transform_1, window_bounds = array<i64: 3, 3, 3, 128>}, {pipeline_mode = #tpu.pipeline_mode<synchronous>, transform_indices = @transform_2, window_bounds = array<i64: 1, 128>}, {pipeline_mode = #tpu.pipeline_mode<synchronous>, transform_indices = @transform_3, window_bounds = array<i64: 128, 128>}, {pipeline_mode = #tpu.pipeline_mode<synchronous>, transform_indices = @transform_4, window_bounds = array<i64: 1, 128>}, {pipeline_mode = #tpu.pipeline_mode<synchronous>, transform_indices = @transform_5, window_bounds = array<i64: 3, 3, 128>}, {pipeline_mode = #tpu.pipeline_mode<synchronous>, transform_indices = @transform_6, window_bounds = array<i64: 1, 128>}, {pipeline_mode = #tpu.pipeline_mode<synchronous>, transform_indices = @transform_7, window_bounds = array<i64: 128, 128>}, {pipeline_mode = #tpu.pipeline_mode<synchronous>, transform_indices = @transform_8, window_bounds = array<i64: 1, 128>}, {pipeline_mode = #tpu.pipeline_mode<synchronous>, transform_indices = @transform_9, window_bounds = array<i64: 128, 128>}, {pipeline_mode = #tpu.pipeline_mode<synchronous>, transform_indices = @transform_10, window_bounds = array<i64: 1, 128>}, {pipeline_mode = #tpu.pipeline_mode<synchronous>, transform_indices = @transform_11, window_bounds = array<i64: 128, 128>}, {pipeline_mode = #tpu.pipeline_mode<synchronous>, transform_indices = @transform_12, window_bounds = array<i64: 1, 128>}, {pipeline_mode = #tpu.pipeline_mode<synchronous>, transform_indices = @transform_13, window_bounds = array<i64: 128, 128>}, {pipeline_mode = #tpu.pipeline_mode<synchronous>, transform_indices = @transform_14, window_bounds = array<i64: 1, 128>}, {pipeline_mode = #tpu.pipeline_mode<synchronous>, transform_indices = @transform_15, window_bounds = array<i64: 1, 128>}, {pipeline_mode = #tpu.pipeline_mode<synchronous>, transform_indices = @transform_16, window_bounds = array<i64: 1, 128>}, {transform_indices = @transform_17, window_bounds = array<i64: 1, 1, 128>}]} {
    %c0 = arith.constant 0 : index
    %c0_0 = arith.constant 0 : index
    %c0_1 = arith.constant 0 : index
    %c0_2 = arith.constant 0 : index
    %0 = vector.load %arg1[%c0, %c0_0, %c0_1, %c0_2] : memref<4x9x9x3xf32, #tpu.memory_space<vmem>>, vector<4x9x9x3xf32>
    %c0_3 = arith.constant 0 : index
    %c0_4 = arith.constant 0 : index
    %c0_5 = arith.constant 0 : index
    %c0_6 = arith.constant 0 : index
    %1 = vector.load %arg2[%c0_3, %c0_4, %c0_5, %c0_6] : memref<3x3x3x128xf32, #tpu.memory_space<vmem>>, vector<3x3x3x128xf32>
    %c0_7 = arith.constant 0 : index
    %c0_8 = arith.constant 0 : index
    %2 = vector.load %arg3[%c0_7, %c0_8] : memref<1x128xf32, #tpu.memory_space<vmem>>, vector<1x128xf32>
    %3 = vector.extract_strided_slice %0 {offsets = [0, 0, 0, 0], sizes = [1, 8, 8, 3], strides = [1, 1, 1, 1]} : vector<4x9x9x3xf32> to vector<1x8x8x3xf32>
    %4 = vector.shape_cast %3 : vector<1x8x8x3xf32> to vector<8x8x3xf32>
    %5 = vector.shape_cast %4 : vector<8x8x3xf32> to vector<64x3xf32>
    %6 = vector.extract_strided_slice %1 {offsets = [0, 0, 0, 0], sizes = [1, 1, 3, 128], strides = [1, 1, 1, 1]} : vector<3x3x3x128xf32> to vector<1x1x3x128xf32>
    %7 = vector.shape_cast %6 : vector<1x1x3x128xf32> to vector<3x128xf32>
    %cst = arith.constant dense<0.000000e+00> : vector<64x128xf32>
    %8 = tpu.matmul %5, %7, %cst {dimension_numbers = #tpu.dot_dimension_numbers<[1], [0], [0], [1], [0, 0, 1, 1], [], []>} : vector<64x3xf32>, vector<3x128xf32>, vector<64x128xf32> -> vector<64x128xf32>
    %9 = vector.broadcast %2 : vector<1x128xf32> to vector<64x128xf32>
    %10 = arith.addf %9, %8 : vector<64x128xf32>
    %11 = vector.extract_strided_slice %0 {offsets = [1, 0, 0, 0], sizes = [1, 8, 8, 3], strides = [1, 1, 1, 1]} : vector<4x9x9x3xf32> to vector<1x8x8x3xf32>
    %12 = vector.shape_cast %11 : vector<1x8x8x3xf32> to vector<8x8x3xf32>
    %13 = vector.shape_cast %12 : vector<8x8x3xf32> to vector<64x3xf32>
    %14 = vector.extract_strided_slice %1 {offsets = [0, 1, 0, 0], sizes = [1, 1, 3, 128], strides = [1, 1, 1, 1]} : vector<3x3x3x128xf32> to vector<1x1x3x128xf32>
    %15 = vector.shape_cast %14 : vector<1x1x3x128xf32> to vector<3x128xf32>
    %cst_9 = arith.constant dense<0.000000e+00> : vector<64x128xf32>
    %16 = tpu.matmul %13, %15, %cst_9 {dimension_numbers = #tpu.dot_dimension_numbers<[1], [0], [0], [1], [0, 0, 1, 1], [], []>} : vector<64x3xf32>, vector<3x128xf32>, vector<64x128xf32> -> vector<64x128xf32>
    %17 = arith.addf %10, %16 : vector<64x128xf32>
    %18 = vector.extract_strided_slice %0 {offsets = [0, 0, 1, 0], sizes = [1, 8, 8, 3], strides = [1, 1, 1, 1]} : vector<4x9x9x3xf32> to vector<1x8x8x3xf32>
    %19 = vector.shape_cast %18 : vector<1x8x8x3xf32> to vector<8x8x3xf32>
    %20 = vector.shape_cast %19 : vector<8x8x3xf32> to vector<64x3xf32>
    %21 = vector.extract_strided_slice %1 {offsets = [0, 2, 0, 0], sizes = [1, 1, 3, 128], strides = [1, 1, 1, 1]} : vector<3x3x3x128xf32> to vector<1x1x3x128xf32>
    %22 = vector.shape_cast %21 : vector<1x1x3x128xf32> to vector<3x128xf32>
    %cst_10 = arith.constant dense<0.000000e+00> : vector<64x128xf32>
    %23 = tpu.matmul %20, %22, %cst_10 {dimension_numbers = #tpu.dot_dimension_numbers<[1], [0], [0], [1], [0, 0, 1, 1], [], []>} : vector<64x3xf32>, vector<3x128xf32>, vector<64x128xf32> -> vector<64x128xf32>
    %24 = arith.addf %17, %23 : vector<64x128xf32>
    %25 = vector.extract_strided_slice %0 {offsets = [2, 0, 0, 0], sizes = [1, 8, 8, 3], strides = [1, 1, 1, 1]} : vector<4x9x9x3xf32> to vector<1x8x8x3xf32>
    %26 = vector.shape_cast %25 : vector<1x8x8x3xf32> to vector<8x8x3xf32>
    %27 = vector.shape_cast %26 : vector<8x8x3xf32> to vector<64x3xf32>
    %28 = vector.extract_strided_slice %1 {offsets = [1, 0, 0, 0], sizes = [1, 1, 3, 128], strides = [1, 1, 1, 1]} : vector<3x3x3x128xf32> to vector<1x1x3x128xf32>
    %29 = vector.shape_cast %28 : vector<1x1x3x128xf32> to vector<3x128xf32>
    %cst_11 = arith.constant dense<0.000000e+00> : vector<64x128xf32>
    %30 = tpu.matmul %27, %29, %cst_11 {dimension_numbers = #tpu.dot_dimension_numbers<[1], [0], [0], [1], [0, 0, 1, 1], [], []>} : vector<64x3xf32>, vector<3x128xf32>, vector<64x128xf32> -> vector<64x128xf32>
    %31 = arith.addf %24, %30 : vector<64x128xf32>
    %32 = vector.extract_strided_slice %0 {offsets = [3, 0, 0, 0], sizes = [1, 8, 8, 3], strides = [1, 1, 1, 1]} : vector<4x9x9x3xf32> to vector<1x8x8x3xf32>
    %33 = vector.shape_cast %32 : vector<1x8x8x3xf32> to vector<8x8x3xf32>
    %34 = vector.shape_cast %33 : vector<8x8x3xf32> to vector<64x3xf32>
    %35 = vector.extract_strided_slice %1 {offsets = [1, 1, 0, 0], sizes = [1, 1, 3, 128], strides = [1, 1, 1, 1]} : vector<3x3x3x128xf32> to vector<1x1x3x128xf32>
    %36 = vector.shape_cast %35 : vector<1x1x3x128xf32> to vector<3x128xf32>
    %cst_12 = arith.constant dense<0.000000e+00> : vector<64x128xf32>
    %37 = tpu.matmul %34, %36, %cst_12 {dimension_numbers = #tpu.dot_dimension_numbers<[1], [0], [0], [1], [0, 0, 1, 1], [], []>} : vector<64x3xf32>, vector<3x128xf32>, vector<64x128xf32> -> vector<64x128xf32>
    %38 = arith.addf %31, %37 : vector<64x128xf32>
    %39 = vector.extract_strided_slice %0 {offsets = [2, 0, 1, 0], sizes = [1, 8, 8, 3], strides = [1, 1, 1, 1]} : vector<4x9x9x3xf32> to vector<1x8x8x3xf32>
    %40 = vector.shape_cast %39 : vector<1x8x8x3xf32> to vector<8x8x3xf32>
    %41 = vector.shape_cast %40 : vector<8x8x3xf32> to vector<64x3xf32>
    %42 = vector.extract_strided_slice %1 {offsets = [1, 2, 0, 0], sizes = [1, 1, 3, 128], strides = [1, 1, 1, 1]} : vector<3x3x3x128xf32> to vector<1x1x3x128xf32>
    %43 = vector.shape_cast %42 : vector<1x1x3x128xf32> to vector<3x128xf32>
    %cst_13 = arith.constant dense<0.000000e+00> : vector<64x128xf32>
    %44 = tpu.matmul %41, %43, %cst_13 {dimension_numbers = #tpu.dot_dimension_numbers<[1], [0], [0], [1], [0, 0, 1, 1], [], []>} : vector<64x3xf32>, vector<3x128xf32>, vector<64x128xf32> -> vector<64x128xf32>
    %45 = arith.addf %38, %44 : vector<64x128xf32>
    %46 = vector.extract_strided_slice %0 {offsets = [0, 1, 0, 0], sizes = [1, 8, 8, 3], strides = [1, 1, 1, 1]} : vector<4x9x9x3xf32> to vector<1x8x8x3xf32>
    %47 = vector.shape_cast %46 : vector<1x8x8x3xf32> to vector<8x8x3xf32>
    %48 = vector.shape_cast %47 : vector<8x8x3xf32> to vector<64x3xf32>
    %49 = vector.extract_strided_slice %1 {offsets = [2, 0, 0, 0], sizes = [1, 1, 3, 128], strides = [1, 1, 1, 1]} : vector<3x3x3x128xf32> to vector<1x1x3x128xf32>
    %50 = vector.shape_cast %49 : vector<1x1x3x128xf32> to vector<3x128xf32>
    %cst_14 = arith.constant dense<0.000000e+00> : vector<64x128xf32>
    %51 = tpu.matmul %48, %50, %cst_14 {dimension_numbers = #tpu.dot_dimension_numbers<[1], [0], [0], [1], [0, 0, 1, 1], [], []>} : vector<64x3xf32>, vector<3x128xf32>, vector<64x128xf32> -> vector<64x128xf32>
    %52 = arith.addf %45, %51 : vector<64x128xf32>
    %53 = vector.extract_strided_slice %0 {offsets = [1, 1, 0, 0], sizes = [1, 8, 8, 3], strides = [1, 1, 1, 1]} : vector<4x9x9x3xf32> to vector<1x8x8x3xf32>
    %54 = vector.shape_cast %53 : vector<1x8x8x3xf32> to vector<8x8x3xf32>
    %55 = vector.shape_cast %54 : vector<8x8x3xf32> to vector<64x3xf32>
    %56 = vector.extract_strided_slice %1 {offsets = [2, 1, 0, 0], sizes = [1, 1, 3, 128], strides = [1, 1, 1, 1]} : vector<3x3x3x128xf32> to vector<1x1x3x128xf32>
    %57 = vector.shape_cast %56 : vector<1x1x3x128xf32> to vector<3x128xf32>
    %cst_15 = arith.constant dense<0.000000e+00> : vector<64x128xf32>
    %58 = tpu.matmul %55, %57, %cst_15 {dimension_numbers = #tpu.dot_dimension_numbers<[1], [0], [0], [1], [0, 0, 1, 1], [], []>} : vector<64x3xf32>, vector<3x128xf32>, vector<64x128xf32> -> vector<64x128xf32>
    %59 = arith.addf %52, %58 : vector<64x128xf32>
    %60 = vector.extract_strided_slice %0 {offsets = [0, 1, 1, 0], sizes = [1, 8, 8, 3], strides = [1, 1, 1, 1]} : vector<4x9x9x3xf32> to vector<1x8x8x3xf32>
    %61 = vector.shape_cast %60 : vector<1x8x8x3xf32> to vector<8x8x3xf32>
    %62 = vector.shape_cast %61 : vector<8x8x3xf32> to vector<64x3xf32>
    %63 = vector.extract_strided_slice %1 {offsets = [2, 2, 0, 0], sizes = [1, 1, 3, 128], strides = [1, 1, 1, 1]} : vector<3x3x3x128xf32> to vector<1x1x3x128xf32>
    %64 = vector.shape_cast %63 : vector<1x1x3x128xf32> to vector<3x128xf32>
    %cst_16 = arith.constant dense<0.000000e+00> : vector<64x128xf32>
    %65 = tpu.matmul %62, %64, %cst_16 {dimension_numbers = #tpu.dot_dimension_numbers<[1], [0], [0], [1], [0, 0, 1, 1], [], []>} : vector<64x3xf32>, vector<3x128xf32>, vector<64x128xf32> -> vector<64x128xf32>
    %66 = arith.addf %59, %65 : vector<64x128xf32>
    %67 = arith.negf %66 : vector<64x128xf32>
    %68 = math.exp %67 : vector<64x128xf32>
    %cst_17 = arith.constant 1.000000e+00 : f32
    %69 = vector.broadcast %cst_17 : f32 to vector<64x128xf32>
    %70 = arith.addf %69, %68 : vector<64x128xf32>
    %71 = arith.divf %69, %70 : vector<64x128xf32>
    %72 = arith.mulf %66, %71 : vector<64x128xf32>
    %73 = arith.truncf %72 : vector<64x128xf32> to vector<64x128xbf16>
    %c0_18 = arith.constant 0 : index
    %c0_19 = arith.constant 0 : index
    %74 = vector.load %arg4[%c0_18, %c0_19] : memref<128x128xbf16, #tpu.memory_space<vmem>>, vector<128x128xbf16>
    %cst_20 = arith.constant dense<0.000000e+00> : vector<64x128xf32>
    %75 = tpu.matmul %73, %74, %cst_20 {dimension_numbers = #tpu.dot_dimension_numbers<[1], [0], [0], [1], [0, 0, 1, 1], [], []>} : vector<64x128xbf16>, vector<128x128xbf16>, vector<64x128xf32> -> vector<64x128xf32>
    %c0_21 = arith.constant 0 : index
    %c0_22 = arith.constant 0 : index
    %76 = vector.load %arg5[%c0_21, %c0_22] : memref<1x128xf32, #tpu.memory_space<vmem>>, vector<1x128xf32>
    %77 = vector.broadcast %76 : vector<1x128xf32> to vector<64x128xf32>
    %78 = arith.addf %75, %77 : vector<64x128xf32>
    %79 = arith.negf %78 : vector<64x128xf32>
    %80 = math.exp %79 : vector<64x128xf32>
    %cst_23 = arith.constant 1.000000e+00 : f32
    %81 = vector.broadcast %cst_23 : f32 to vector<64x128xf32>
    %82 = arith.addf %81, %80 : vector<64x128xf32>
    %83 = arith.divf %81, %82 : vector<64x128xf32>
    %84 = arith.mulf %78, %83 : vector<64x128xf32>
    %cst_24 = arith.constant 0.000000e+00 : f32
    %85 = vector.broadcast %cst_24 : f32 to vector<10x10x128xf32>
    %c0_25 = arith.constant 0 : index
    %c0_26 = arith.constant 0 : index
    %c0_27 = arith.constant 0 : index
    %86 = vector.load %arg19[%c0_25, %c0_26, %c0_27] : memref<10x10x128xf32, #tpu.memory_space<vmem>>, vector<10x10x128xf32>
    tpu.vector_store %arg19[%c0_25, %c0_26, %c0_27], %85 {strides = array<i32>} : memref<10x10x128xf32, #tpu.memory_space<vmem>>, vector<10x10x128xf32>,
    %87 = vector.shape_cast %84 : vector<64x128xf32> to vector<8x8x128xf32>
    %c1 = arith.constant 1 : index
    %c1_28 = arith.constant 1 : index
    %c0_29 = arith.constant 0 : index
    %88 = vector.load %arg19[%c1, %c1_28, %c0_29] : memref<10x10x128xf32, #tpu.memory_space<vmem>>, vector<8x8x128xf32>
    tpu.vector_store %arg19[%c1, %c1_28, %c0_29], %87 {strides = array<i32>} : memref<10x10x128xf32, #tpu.memory_space<vmem>>, vector<8x8x128xf32>,
    %c0_30 = arith.constant 0 : index
    %c0_31 = arith.constant 0 : index
    %c0_32 = arith.constant 0 : index
    %89 = vector.load %arg19[%c0_30, %c0_31, %c0_32] : memref<10x10x128xf32, #tpu.memory_space<vmem>>, vector<10x10x128xf32>
    %c0_33 = arith.constant 0 : index
    %c0_34 = arith.constant 0 : index
    %c0_35 = arith.constant 0 : index
    %90 = vector.load %arg6[%c0_33, %c0_34, %c0_35] : memref<3x3x128xf32, #tpu.memory_space<vmem>>, vector<3x3x128xf32>
    %c0_36 = arith.constant 0 : index
    %c0_37 = arith.constant 0 : index
    %91 = vector.load %arg7[%c0_36, %c0_37] : memref<1x128xf32, #tpu.memory_space<vmem>>, vector<1x128xf32>
    %92 = vector.shape_cast %91 : vector<1x128xf32> to vector<1x1x128xf32>
    %93 = vector.extract_strided_slice %89 {offsets = [0, 0, 0], sizes = [8, 8, 128], strides = [1, 1, 1]} : vector<10x10x128xf32> to vector<8x8x128xf32>
    %94 = vector.extract_strided_slice %90 {offsets = [0, 0, 0], sizes = [1, 1, 128], strides = [1, 1, 1]} : vector<3x3x128xf32> to vector<1x1x128xf32>
    %95 = vector.shape_cast %94 : vector<1x1x128xf32> to vector<128xf32>
    %96 = vector.shape_cast %95 : vector<128xf32> to vector<1x1x128xf32>
    %97 = vector.broadcast %96 : vector<1x1x128xf32> to vector<8x8x128xf32>
    %98 = arith.mulf %93, %97 : vector<8x8x128xf32>
    %99 = vector.broadcast %92 : vector<1x1x128xf32> to vector<8x8x128xf32>
    %100 = arith.addf %99, %98 : vector<8x8x128xf32>
    %101 = vector.extract_strided_slice %89 {offsets = [0, 1, 0], sizes = [8, 8, 128], strides = [1, 1, 1]} : vector<10x10x128xf32> to vector<8x8x128xf32>
    %102 = vector.extract_strided_slice %90 {offsets = [0, 1, 0], sizes = [1, 1, 128], strides = [1, 1, 1]} : vector<3x3x128xf32> to vector<1x1x128xf32>
    %103 = vector.shape_cast %102 : vector<1x1x128xf32> to vector<128xf32>
    %104 = vector.shape_cast %103 : vector<128xf32> to vector<1x1x128xf32>
    %105 = vector.broadcast %104 : vector<1x1x128xf32> to vector<8x8x128xf32>
    %106 = arith.mulf %101, %105 : vector<8x8x128xf32>
    %107 = arith.addf %100, %106 : vector<8x8x128xf32>
    %108 = vector.extract_strided_slice %89 {offsets = [0, 2, 0], sizes = [8, 8, 128], strides = [1, 1, 1]} : vector<10x10x128xf32> to vector<8x8x128xf32>
    %109 = vector.extract_strided_slice %90 {offsets = [0, 2, 0], sizes = [1, 1, 128], strides = [1, 1, 1]} : vector<3x3x128xf32> to vector<1x1x128xf32>
    %110 = vector.shape_cast %109 : vector<1x1x128xf32> to vector<128xf32>
    %111 = vector.shape_cast %110 : vector<128xf32> to vector<1x1x128xf32>
    %112 = vector.broadcast %111 : vector<1x1x128xf32> to vector<8x8x128xf32>
    %113 = arith.mulf %108, %112 : vector<8x8x128xf32>
    %114 = arith.addf %107, %113 : vector<8x8x128xf32>
    %115 = vector.extract_strided_slice %89 {offsets = [1, 0, 0], sizes = [8, 8, 128], strides = [1, 1, 1]} : vector<10x10x128xf32> to vector<8x8x128xf32>
    %116 = vector.extract_strided_slice %90 {offsets = [1, 0, 0], sizes = [1, 1, 128], strides = [1, 1, 1]} : vector<3x3x128xf32> to vector<1x1x128xf32>
    %117 = vector.shape_cast %116 : vector<1x1x128xf32> to vector<128xf32>
    %118 = vector.shape_cast %117 : vector<128xf32> to vector<1x1x128xf32>
    %119 = vector.broadcast %118 : vector<1x1x128xf32> to vector<8x8x128xf32>
    %120 = arith.mulf %115, %119 : vector<8x8x128xf32>
    %121 = arith.addf %114, %120 : vector<8x8x128xf32>
    %122 = vector.extract_strided_slice %89 {offsets = [1, 1, 0], sizes = [8, 8, 128], strides = [1, 1, 1]} : vector<10x10x128xf32> to vector<8x8x128xf32>
    %123 = vector.extract_strided_slice %90 {offsets = [1, 1, 0], sizes = [1, 1, 128], strides = [1, 1, 1]} : vector<3x3x128xf32> to vector<1x1x128xf32>
    %124 = vector.shape_cast %123 : vector<1x1x128xf32> to vector<128xf32>
    %125 = vector.shape_cast %124 : vector<128xf32> to vector<1x1x128xf32>
    %126 = vector.broadcast %125 : vector<1x1x128xf32> to vector<8x8x128xf32>
    %127 = arith.mulf %122, %126 : vector<8x8x128xf32>
    %128 = arith.addf %121, %127 : vector<8x8x128xf32>
    %129 = vector.extract_strided_slice %89 {offsets = [1, 2, 0], sizes = [8, 8, 128], strides = [1, 1, 1]} : vector<10x10x128xf32> to vector<8x8x128xf32>
    %130 = vector.extract_strided_slice %90 {offsets = [1, 2, 0], sizes = [1, 1, 128], strides = [1, 1, 1]} : vector<3x3x128xf32> to vector<1x1x128xf32>
    %131 = vector.shape_cast %130 : vector<1x1x128xf32> to vector<128xf32>
    %132 = vector.shape_cast %131 : vector<128xf32> to vector<1x1x128xf32>
    %133 = vector.broadcast %132 : vector<1x1x128xf32> to vector<8x8x128xf32>
    %134 = arith.mulf %129, %133 : vector<8x8x128xf32>
    %135 = arith.addf %128, %134 : vector<8x8x128xf32>
    %136 = vector.extract_strided_slice %89 {offsets = [2, 0, 0], sizes = [8, 8, 128], strides = [1, 1, 1]} : vector<10x10x128xf32> to vector<8x8x128xf32>
    %137 = vector.extract_strided_slice %90 {offsets = [2, 0, 0], sizes = [1, 1, 128], strides = [1, 1, 1]} : vector<3x3x128xf32> to vector<1x1x128xf32>
    %138 = vector.shape_cast %137 : vector<1x1x128xf32> to vector<128xf32>
    %139 = vector.shape_cast %138 : vector<128xf32> to vector<1x1x128xf32>
    %140 = vector.broadcast %139 : vector<1x1x128xf32> to vector<8x8x128xf32>
    %141 = arith.mulf %136, %140 : vector<8x8x128xf32>
    %142 = arith.addf %135, %141 : vector<8x8x128xf32>
    %143 = vector.extract_strided_slice %89 {offsets = [2, 1, 0], sizes = [8, 8, 128], strides = [1, 1, 1]} : vector<10x10x128xf32> to vector<8x8x128xf32>
    %144 = vector.extract_strided_slice %90 {offsets = [2, 1, 0], sizes = [1, 1, 128], strides = [1, 1, 1]} : vector<3x3x128xf32> to vector<1x1x128xf32>
    %145 = vector.shape_cast %144 : vector<1x1x128xf32> to vector<128xf32>
    %146 = vector.shape_cast %145 : vector<128xf32> to vector<1x1x128xf32>
    %147 = vector.broadcast %146 : vector<1x1x128xf32> to vector<8x8x128xf32>
    %148 = arith.mulf %143, %147 : vector<8x8x128xf32>
    %149 = arith.addf %142, %148 : vector<8x8x128xf32>
    %150 = vector.extract_strided_slice %89 {offsets = [2, 2, 0], sizes = [8, 8, 128], strides = [1, 1, 1]} : vector<10x10x128xf32> to vector<8x8x128xf32>
    %151 = vector.extract_strided_slice %90 {offsets = [2, 2, 0], sizes = [1, 1, 128], strides = [1, 1, 1]} : vector<3x3x128xf32> to vector<1x1x128xf32>
    %152 = vector.shape_cast %151 : vector<1x1x128xf32> to vector<128xf32>
    %153 = vector.shape_cast %152 : vector<128xf32> to vector<1x1x128xf32>
    %154 = vector.broadcast %153 : vector<1x1x128xf32> to vector<8x8x128xf32>
    %155 = arith.mulf %150, %154 : vector<8x8x128xf32>
    %156 = arith.addf %149, %155 : vector<8x8x128xf32>
    %157 = arith.negf %156 : vector<8x8x128xf32>
    %158 = math.exp %157 : vector<8x8x128xf32>
    %cst_38 = arith.constant 1.000000e+00 : f32
    %159 = vector.broadcast %cst_38 : f32 to vector<8x8x128xf32>
    %160 = arith.addf %159, %158 : vector<8x8x128xf32>
    %161 = arith.divf %159, %160 : vector<8x8x128xf32>
    %162 = arith.mulf %156, %161 : vector<8x8x128xf32>
    %163 = vector.shape_cast %162 : vector<8x8x128xf32> to vector<64x128xf32>
    %cst_39 = arith.constant dense<0.000000e+00> : vector<128xf32>
    %164 = vector.multi_reduction <add>, %163, %cst_39 [0] : vector<64x128xf32> to vector<128xf32>
    %165 = vector.shape_cast %164 : vector<128xf32> to vector<1x128xf32>
    %cst_40 = arith.constant 1.562500e-02 : f32
    %166 = vector.broadcast %cst_40 : f32 to vector<1x128xf32>
    %167 = arith.mulf %165, %166 : vector<1x128xf32>
    %168 = arith.truncf %167 : vector<1x128xf32> to vector<1x128xbf16>
    %c0_41 = arith.constant 0 : index
    %c0_42 = arith.constant 0 : index
    %169 = vector.load %arg8[%c0_41, %c0_42] : memref<128x128xbf16, #tpu.memory_space<vmem>>, vector<128x128xbf16>
    %cst_43 = arith.constant dense<0.000000e+00> : vector<1x128xf32>
    %170 = tpu.matmul %168, %169, %cst_43 {dimension_numbers = #tpu.dot_dimension_numbers<[1], [0], [0], [1], [0, 0, 1, 1], [], []>} : vector<1x128xbf16>, vector<128x128xbf16>, vector<1x128xf32> -> vector<1x128xf32>
    %c0_44 = arith.constant 0 : index
    %c0_45 = arith.constant 0 : index
    %171 = vector.load %arg9[%c0_44, %c0_45] : memref<1x128xf32, #tpu.memory_space<vmem>>, vector<1x128xf32>
    %172 = arith.addf %170, %171 : vector<1x128xf32>
    %173 = arith.negf %172 : vector<1x128xf32>
    %174 = math.exp %173 : vector<1x128xf32>
    %cst_46 = arith.constant 1.000000e+00 : f32
    %175 = vector.broadcast %cst_46 : f32 to vector<1x128xf32>
    %176 = arith.addf %175, %174 : vector<1x128xf32>
    %177 = arith.divf %175, %176 : vector<1x128xf32>
    %178 = arith.mulf %172, %177 : vector<1x128xf32>
    %179 = arith.truncf %178 : vector<1x128xf32> to vector<1x128xbf16>
    %c0_47 = arith.constant 0 : index
    %c0_48 = arith.constant 0 : index
    %180 = vector.load %arg10[%c0_47, %c0_48] : memref<128x128xbf16, #tpu.memory_space<vmem>>, vector<128x128xbf16>
    %cst_49 = arith.constant dense<0.000000e+00> : vector<1x128xf32>
    %181 = tpu.matmul %179, %180, %cst_49 {dimension_numbers = #tpu.dot_dimension_numbers<[1], [0], [0], [1], [0, 0, 1, 1], [], []>} : vector<1x128xbf16>, vector<128x128xbf16>, vector<1x128xf32> -> vector<1x128xf32>
    %c0_50 = arith.constant 0 : index
    %c0_51 = arith.constant 0 : index
    %182 = vector.load %arg11[%c0_50, %c0_51] : memref<1x128xf32, #tpu.memory_space<vmem>>, vector<1x128xf32>
    %183 = arith.addf %181, %182 : vector<1x128xf32>
    %184 = arith.negf %183 : vector<1x128xf32>
    %185 = math.exp %184 : vector<1x128xf32>
    %cst_52 = arith.constant 1.000000e+00 : f32
    %186 = vector.broadcast %cst_52 : f32 to vector<1x128xf32>
    %187 = arith.addf %186, %185 : vector<1x128xf32>
    %188 = arith.divf %186, %187 : vector<1x128xf32>
    %189 = vector.broadcast %188 : vector<1x128xf32> to vector<64x128xf32>
    %190 = arith.mulf %163, %189 : vector<64x128xf32>
    %191 = arith.truncf %190 : vector<64x128xf32> to vector<64x128xbf16>
    %c0_53 = arith.constant 0 : index
    %c0_54 = arith.constant 0 : index
    %192 = vector.load %arg12[%c0_53, %c0_54] : memref<128x128xbf16, #tpu.memory_space<vmem>>, vector<128x128xbf16>
    %cst_55 = arith.constant dense<0.000000e+00> : vector<64x128xf32>
    %193 = tpu.matmul %191, %192, %cst_55 {dimension_numbers = #tpu.dot_dimension_numbers<[1], [0], [0], [1], [0, 0, 1, 1], [], []>} : vector<64x128xbf16>, vector<128x128xbf16>, vector<64x128xf32> -> vector<64x128xf32>
    %c0_56 = arith.constant 0 : index
    %c0_57 = arith.constant 0 : index
    %194 = vector.load %arg13[%c0_56, %c0_57] : memref<1x128xf32, #tpu.memory_space<vmem>>, vector<1x128xf32>
    %195 = vector.broadcast %194 : vector<1x128xf32> to vector<64x128xf32>
    %196 = arith.addf %193, %195 : vector<64x128xf32>
    %197 = arith.truncf %196 : vector<64x128xf32> to vector<64x128xbf16>
    %c0_58 = arith.constant 0 : index
    %c0_59 = arith.constant 0 : index
    %198 = vector.load %arg14[%c0_58, %c0_59] : memref<128x128xbf16, #tpu.memory_space<vmem>>, vector<128x128xbf16>
    %cst_60 = arith.constant dense<0.000000e+00> : vector<64x128xf32>
    %199 = tpu.matmul %197, %198, %cst_60 {dimension_numbers = #tpu.dot_dimension_numbers<[1], [0], [0], [1], [0, 0, 1, 1], [], []>} : vector<64x128xbf16>, vector<128x128xbf16>, vector<64x128xf32> -> vector<64x128xf32>
    %c0_61 = arith.constant 0 : index
    %c0_62 = arith.constant 0 : index
    %200 = vector.load %arg15[%c0_61, %c0_62] : memref<1x128xf32, #tpu.memory_space<vmem>>, vector<1x128xf32>
    %201 = vector.broadcast %200 : vector<1x128xf32> to vector<64x128xf32>
    %202 = arith.addf %199, %201 : vector<64x128xf32>
    %203 = arith.negf %202 : vector<64x128xf32>
    %204 = math.exp %203 : vector<64x128xf32>
    %cst_63 = arith.constant 1.000000e+00 : f32
    %205 = vector.broadcast %cst_63 : f32 to vector<64x128xf32>
    %206 = arith.addf %205, %204 : vector<64x128xf32>
    %207 = arith.divf %205, %206 : vector<64x128xf32>
    %208 = arith.mulf %202, %207 : vector<64x128xf32>
    %cst_64 = arith.constant dense<0.000000e+00> : vector<128xf32>
    %209 = vector.multi_reduction <add>, %208, %cst_64 [0] : vector<64x128xf32> to vector<128xf32>
    %210 = vector.shape_cast %209 : vector<128xf32> to vector<1x128xf32>
    %cst_65 = arith.constant 1.562500e-02 : f32
    %211 = vector.broadcast %cst_65 : f32 to vector<1x128xf32>
    %212 = arith.mulf %210, %211 : vector<1x128xf32>
    %c0_66 = arith.constant 0 : index
    %c0_67 = arith.constant 0 : index
    %213 = vector.load %arg16[%c0_66, %c0_67] : memref<1x128xf32, #tpu.memory_space<vmem>>, vector<1x128xf32>
    %214 = arith.mulf %212, %213 : vector<1x128xf32>
    %cst_68 = arith.constant dense<0.000000e+00> : vector<1xf32>
    %215 = vector.multi_reduction <add>, %214, %cst_68 [1] : vector<1x128xf32> to vector<1xf32>
    %216 = vector.shape_cast %215 : vector<1xf32> to vector<1x1xf32>
    %217 = vector.shape_cast %216 : vector<1x1xf32> to vector<1x1xf32>
    %218 = vector.broadcast %217 : vector<1x1xf32> to vector<1x128xf32>
    %c0_69 = arith.constant 0 : index
    %c0_70 = arith.constant 0 : index
    %219 = vector.load %arg17[%c0_69, %c0_70] : memref<1x128xf32, #tpu.memory_space<vmem>>, vector<1x128xf32>
    %220 = arith.addf %218, %219 : vector<1x128xf32>
    %c0_71 = arith.constant 0 : index
    %c0_72 = arith.constant 0 : index
    %c0_73 = arith.constant 0 : index
    %221 = vector.load %arg18[%c0_71, %c0_72, %c0_73] : memref<1x1x128xf32, #tpu.memory_space<vmem>>, vector<1x1x128xf32>
    %222 = vector.shape_cast %221 : vector<1x1x128xf32> to vector<1x128xf32>
    %223 = vector.shape_cast %220 : vector<1x128xf32> to vector<1x1x128xf32>
    tpu.vector_store %arg18[%c0_71, %c0_72, %c0_73], %223 {strides = array<i32>} : memref<1x1x128xf32, #tpu.memory_space<vmem>>, vector<1x1x128xf32>,
    return
  }
  func.func @transform_0(%arg0: i32) -> (i32, i32, i32, i32) {
    %c0_i32 = arith.constant 0 : i32
    %c0_i32_0 = arith.constant 0 : i32
    %c0_i32_1 = arith.constant 0 : i32
    %c0_i32_2 = arith.constant 0 : i32
    return %arg0, %c0_i32, %c0_i32_0, %c0_i32_1 : i32, i32, i32, i32
  }
  func.func @transform_1(%arg0: i32) -> (i32, i32, i32, i32) {
    %c0_i32 = arith.constant 0 : i32
    %c0_i32_0 = arith.constant 0 : i32
    %c0_i32_1 = arith.constant 0 : i32
    %c0_i32_2 = arith.constant 0 : i32
    %c0_i32_3 = arith.constant 0 : i32
    return %c0_i32, %c0_i32_0, %c0_i32_1, %c0_i32_2 : i32, i32, i32, i32
  }
  func.func @transform_2(%arg0: i32) -> (i32, i32) {
    %c0_i32 = arith.constant 0 : i32
    %c0_i32_0 = arith.constant 0 : i32
    %c0_i32_1 = arith.constant 0 : i32
    return %c0_i32, %c0_i32_0 : i32, i32
  }
  func.func @transform_3(%arg0: i32) -> (i32, i32) {
    %c0_i32 = arith.constant 0 : i32
    %c0_i32_0 = arith.constant 0 : i32
    %c0_i32_1 = arith.constant 0 : i32
    return %c0_i32, %c0_i32_0 : i32, i32
  }
  func.func @transform_4(%arg0: i32) -> (i32, i32) {
    %c0_i32 = arith.constant 0 : i32
    %c0_i32_0 = arith.constant 0 : i32
    %c0_i32_1 = arith.constant 0 : i32
    return %c0_i32, %c0_i32_0 : i32, i32
  }
  func.func @transform_5(%arg0: i32) -> (i32, i32, i32) {
    %c0_i32 = arith.constant 0 : i32
    %c0_i32_0 = arith.constant 0 : i32
    %c0_i32_1 = arith.constant 0 : i32
    %c0_i32_2 = arith.constant 0 : i32
    return %c0_i32, %c0_i32_0, %c0_i32_1 : i32, i32, i32
  }
  func.func @transform_6(%arg0: i32) -> (i32, i32) {
    %c0_i32 = arith.constant 0 : i32
    %c0_i32_0 = arith.constant 0 : i32
    %c0_i32_1 = arith.constant 0 : i32
    return %c0_i32, %c0_i32_0 : i32, i32
  }
  func.func @transform_7(%arg0: i32) -> (i32, i32) {
    %c0_i32 = arith.constant 0 : i32
    %c0_i32_0 = arith.constant 0 : i32
    %c0_i32_1 = arith.constant 0 : i32
    return %c0_i32, %c0_i32_0 : i32, i32
  }
  func.func @transform_8(%arg0: i32) -> (i32, i32) {
    %c0_i32 = arith.constant 0 : i32
    %c0_i32_0 = arith.constant 0 : i32
    %c0_i32_1 = arith.constant 0 : i32
    return %c0_i32, %c0_i32_0 : i32, i32
  }
  func.func @transform_9(%arg0: i32) -> (i32, i32) {
    %c0_i32 = arith.constant 0 : i32
    %c0_i32_0 = arith.constant 0 : i32
    %c0_i32_1 = arith.constant 0 : i32
    return %c0_i32, %c0_i32_0 : i32, i32
  }
  func.func @transform_10(%arg0: i32) -> (i32, i32) {
    %c0_i32 = arith.constant 0 : i32
    %c0_i32_0 = arith.constant 0 : i32
    %c0_i32_1 = arith.constant 0 : i32
    return %c0_i32, %c0_i32_0 : i32, i32
  }
  func.func @transform_11(%arg0: i32) -> (i32, i32) {
    %c0_i32 = arith.constant 0 : i32
    %c0_i32_0 = arith.constant 0 : i32
    %c0_i32_1 = arith.constant 0 : i32
    return %c0_i32, %c0_i32_0 : i32, i32
  }
  func.func @transform_12(%arg0: i32) -> (i32, i32) {
    %c0_i32 = arith.constant 0 : i32
    %c0_i32_0 = arith.constant 0 : i32
    %c0_i32_1 = arith.constant 0 : i32
    return %c0_i32, %c0_i32_0 : i32, i32
  }
  func.func @transform_13(%arg0: i32) -> (i32, i32) {
    %c0_i32 = arith.constant 0 : i32
    %c0_i32_0 = arith.constant 0 : i32
    %c0_i32_1 = arith.constant 0 : i32
    return %c0_i32, %c0_i32_0 : i32, i32
  }
  func.func @transform_14(%arg0: i32) -> (i32, i32) {
    %c0_i32 = arith.constant 0 : i32
    %c0_i32_0 = arith.constant 0 : i32
    %c0_i32_1 = arith.constant 0 : i32
    return %c0_i32, %c0_i32_0 : i32, i32
  }
  func.func @transform_15(%arg0: i32) -> (i32, i32) {
    %c0_i32 = arith.constant 0 : i32
    %c0_i32_0 = arith.constant 0 : i32
    %c0_i32_1 = arith.constant 0 : i32
    return %c0_i32, %c0_i32_0 : i32, i32
  }
  func.func @transform_16(%arg0: i32) -> (i32, i32) {
    %c0_i32 = arith.constant 0 : i32
    %c0_i32_0 = arith.constant 0 : i32
    %c0_i32_1 = arith.constant 0 : i32
    return %c0_i32, %c0_i32_0 : i32, i32
  }
  func.func @transform_17(%arg0: i32) -> (i32, i32, i32) {
    %c0_i32 = arith.constant 0 : i32
    %c0_i32_0 = arith.constant 0 : i32
    %c0_i32_1 = arith.constant 0 : i32
    return %arg0, %c0_i32, %c0_i32_0 : i32, i32, i32
  }
}

</mosaic_0001>

<llo_original>
// kernel: efficientnet_gen_forward.1
$region0: #{efficientnet_gen_forward.1}
  #allocation0 [shape = 'u32[]', space=smem, size = 0x4, offset = 0x4, fixed_abs, tag = 'smem constant byte address 0x4 - core index']
  #allocation1 [shape = 'u32[72,128]{1,0:T(1,128)}', space=vmem, size = 0x9000, scoped, tag = 'internal scratch']
  #allocation2 [shape = 'f32[10,10,128]{2,1,0:T(8,128)}', space=vmem, size = 0x14000, scoped, tag = 'scratch operand']
  %s0 = inlined_call_operand.vmem [shape: f32[8,9,9,3], index: 0, kind: input, shape index: {}]
  %s1 = inlined_call_operand.vmem [shape: f32[3,3,3,128], index: 1, kind: input, shape index: {}]
  %s2 = inlined_call_operand.vmem [shape: f32[1,128], index: 2, kind: input, shape index: {}]
  %s3 = inlined_call_operand.vmem [shape: bf16[128,128], index: 3, kind: input, shape index: {}]
  %s4 = inlined_call_operand.vmem [shape: f32[1,128], index: 4, kind: input, shape index: {}]
  %s5 = inlined_call_operand.vmem [shape: f32[3,3,128], index: 5, kind: input, shape index: {}]
  %s6 = inlined_call_operand.vmem [shape: f32[1,128], index: 6, kind: input, shape index: {}]
  %s7 = inlined_call_operand.vmem [shape: bf16[128,128], index: 7, kind: input, shape index: {}]
  %s8 = inlined_call_operand.vmem [shape: f32[1,128], index: 8, kind: input, shape index: {}]
  %s9 = inlined_call_operand.vmem [shape: bf16[128,128], index: 9, kind: input, shape index: {}]
  %s10 = inlined_call_operand.vmem [shape: f32[1,128], index: 10, kind: input, shape index: {}]
  %s11 = inlined_call_operand.vmem [shape: bf16[128,128], index: 11, kind: input, shape index: {}]
  %s12 = inlined_call_operand.vmem [shape: f32[1,128], index: 12, kind: input, shape index: {}]
  %s13 = inlined_call_operand.vmem [shape: bf16[128,128], index: 13, kind: input, shape index: {}]
  %s14 = inlined_call_operand.vmem [shape: f32[1,128], index: 14, kind: input, shape index: {}]
  %s15 = inlined_call_operand.vmem [shape: f32[1,128], index: 15, kind: input, shape index: {}]
  %s16 = inlined_call_operand.vmem [shape: f32[1,128], index: 16, kind: input, shape index: {}]
  %s17 = inlined_call_operand.vmem [shape: f32[2,1,128], index: 17, kind: output, shape index: {}]
  %s18 = sld [smem:[#allocation0]]
  $region101: #{efficientnet_gen_forward.1} parent=0
    _
  %s20 = ssub.s32 1, %s18
  %s21 = scalar_select 0, %s20, %s18
  loop: start=0, step=1, limit=4
  $region2: #{efficientnet_gen_forward.1} parent=0 // loop_pre_header
    _
  $region3: #{efficientnet_gen_forward.1} parent=0 // loop_header
    %s23 = sphi 0, %s27
    %p24 = scmp.ge.s32.totalorder %s23, 4
    %s33 = sphi 0, %s35
    %s36 = sphi 0, %s33
    %s37 = sphi 0, %s36
    %s53 = sphi 0, %s37
    %s57 = sphi 0, %s57
    %s59 = sphi 0, %s57
    %s60 = sphi 0, %s59
    %s74 = sphi 0, %s60
    %s78 = sphi 0, %s78
    %s80 = sphi 0, %s78
    %s81 = sphi 0, %s80
    %s95 = sphi 0, %s81
    %s99 = sphi 0, %s99
    %s101 = sphi 0, %s99
    %s102 = sphi 0, %s101
    %s116 = sphi 0, %s102
    %s120 = sphi 0, %s120
    %s122 = sphi 0, %s120
    %s123 = sphi 0, %s122
    %s137 = sphi 0, %s123
    %s141 = sphi 0, %s141
    %s143 = sphi 0, %s141
    %s144 = sphi 0, %s143
    %s158 = sphi 0, %s144
    %s162 = sphi 0, %s162
    %s164 = sphi 0, %s162
    %s165 = sphi 0, %s164
    %s179 = sphi 0, %s165
    %s183 = sphi 0, %s183
    %s185 = sphi 0, %s183
    %s186 = sphi 0, %s185
    %s200 = sphi 0, %s186
    %s204 = sphi 0, %s204
    %s206 = sphi 0, %s204
    %s207 = sphi 0, %s206
    %s221 = sphi 0, %s207
    %s225 = sphi 0, %s225
    %s227 = sphi 0, %s225
    %s228 = sphi 0, %s227
    %s242 = sphi 0, %s228
    %s246 = sphi 0, %s246
    %s248 = sphi 0, %s246
    %s249 = sphi 0, %s248
    %s263 = sphi 0, %s249
    %s267 = sphi 0, %s267
    %s269 = sphi 0, %s267
    %s270 = sphi 0, %s269
    %s284 = sphi 0, %s270
    %s288 = sphi 0, %s288
    %s290 = sphi 0, %s288
    %s291 = sphi 0, %s290
    %s305 = sphi 0, %s291
    %s309 = sphi 0, %s309
    %s311 = sphi 0, %s309
    %s312 = sphi 0, %s311
    %s326 = sphi 0, %s312
    %s330 = sphi 0, %s330
    %s332 = sphi 0, %s330
    %s333 = sphi 0, %s332
    %s347 = sphi 0, %s333
    %s351 = sphi 0, %s351
    %s353 = sphi 0, %s351
    %s354 = sphi 0, %s353
    %s368 = sphi 0, %s354
    %s372 = sphi 0, %s372
    %s374 = sphi 0, %s372
    %s375 = sphi 0, %s374
    %s389 = sphi 0, %s375
    %s395 = sphi 0, %s397
    %s398 = sphi 0, %s395
    %s399 = sphi 0, %s398
    %s415 = sphi 0, %s399
  $region4: #{efficientnet_gen_forward.1} parent=0 // loop_header_branch
    %26 = sbr.rel (%p24) target = $region8
  $region5: #{efficientnet_gen_forward.1} parent=0 // loop_body
    %s28 = ssub.s32 %s23, 1
    %s29 = ssub.s32 %s23, 2
    %s30 = sadd.s32 %s23, 1
    %s31 = ssub.s32 %s23, %s30
    %p32 = scmp.eq.s32.totalorder %s31, 0
    %s34 = sadd.s32 %s33, 1
    %s35 = scalar_select %p32, %s33, %s34
    %p38 = pneg %p32
    %p39 = scmp.eq.s32.totalorder %s23, 1
    %p40 = por %p38, %p39
    %p41 = scmp.ne.s32.totalorder %s33, %s36
    %p42 = scmp.eq.s32.totalorder %s23, 0
    %p43 = por %p41, %p42
    %p44 = scmp.ne.s32.totalorder %s33, %s36
    %p45 = scmp.eq.s32.totalorder %s28, 1
    %p46 = por %p44, %p45
    %p47 = scmp.ne.s32.totalorder %s36, %s37
    %p48 = scmp.eq.s32.totalorder %s28, 0
    %p49 = por %p47, %p48
    %p50 = scmp.ne.s32.totalorder %s36, %s37
    %p51 = scmp.eq.s32.totalorder %s29, 1
    %p52 = por %p50, %p51
    %p54 = scmp.ne.s32.totalorder %s37, %s53
    %p55 = scmp.eq.s32.totalorder %s29, 0
    %p56 = por %p54, %p55
    %s58 = sadd.s32 %s57, 1
    %p61 = scmp.eq.s32.totalorder %s23, 1
    %p62 = scmp.ne.s32.totalorder %s57, %s59
    %p63 = scmp.eq.s32.totalorder %s23, 0
    %p64 = por %p62, %p63
    %p65 = scmp.ne.s32.totalorder %s57, %s59
    %p66 = scmp.eq.s32.totalorder %s28, 1
    %p67 = por %p65, %p66
    %p68 = scmp.ne.s32.totalorder %s59, %s60
    %p69 = scmp.eq.s32.totalorder %s28, 0
    %p70 = por %p68, %p69
    %p71 = scmp.ne.s32.totalorder %s59, %s60
    %p72 = scmp.eq.s32.totalorder %s29, 1
    %p73 = por %p71, %p72
    %p75 = scmp.ne.s32.totalorder %s60, %s74
    %p76 = scmp.eq.s32.totalorder %s29, 0
    %p77 = por %p75, %p76
    %s79 = sadd.s32 %s78, 1
    %p82 = scmp.eq.s32.totalorder %s23, 1
    %p83 = scmp.ne.s32.totalorder %s78, %s80
    %p84 = scmp.eq.s32.totalorder %s23, 0
    %p85 = por %p83, %p84
    %p86 = scmp.ne.s32.totalorder %s78, %s80
    %p87 = scmp.eq.s32.totalorder %s28, 1
    %p88 = por %p86, %p87
    %p89 = scmp.ne.s32.totalorder %s80, %s81
    %p90 = scmp.eq.s32.totalorder %s28, 0
    %p91 = por %p89, %p90
    %p92 = scmp.ne.s32.totalorder %s80, %s81
    %p93 = scmp.eq.s32.totalorder %s29, 1
    %p94 = por %p92, %p93
    %p96 = scmp.ne.s32.totalorder %s81, %s95
    %p97 = scmp.eq.s32.totalorder %s29, 0
    %p98 = por %p96, %p97
    %s100 = sadd.s32 %s99, 1
    %p103 = scmp.eq.s32.totalorder %s23, 1
    %p104 = scmp.ne.s32.totalorder %s99, %s101
    %p105 = scmp.eq.s32.totalorder %s23, 0
    %p106 = por %p104, %p105
    %p107 = scmp.ne.s32.totalorder %s99, %s101
    %p108 = scmp.eq.s32.totalorder %s28, 1
    %p109 = por %p107, %p108
    %p110 = scmp.ne.s32.totalorder %s101, %s102
    %p111 = scmp.eq.s32.totalorder %s28, 0
    %p112 = por %p110, %p111
    %p113 = scmp.ne.s32.totalorder %s101, %s102
    %p114 = scmp.eq.s32.totalorder %s29, 1
    %p115 = por %p113, %p114
    %p117 = scmp.ne.s32.totalorder %s102, %s116
    %p118 = scmp.eq.s32.totalorder %s29, 0
    %p119 = por %p117, %p118
    %s121 = sadd.s32 %s120, 1
    %p124 = scmp.eq.s32.totalorder %s23, 1
    %p125 = scmp.ne.s32.totalorder %s120, %s122
    %p126 = scmp.eq.s32.totalorder %s23, 0
    %p127 = por %p125, %p126
    %p128 = scmp.ne.s32.totalorder %s120, %s122
    %p129 = scmp.eq.s32.totalorder %s28, 1
    %p130 = por %p128, %p129
    %p131 = scmp.ne.s32.totalorder %s122, %s123
    %p132 = scmp.eq.s32.totalorder %s28, 0
    %p133 = por %p131, %p132
    %p134 = scmp.ne.s32.totalorder %s122, %s123
    %p135 = scmp.eq.s32.totalorder %s29, 1
    %p136 = por %p134, %p135
    %p138 = scmp.ne.s32.totalorder %s123, %s137
    %p139 = scmp.eq.s32.totalorder %s29, 0
    %p140 = por %p138, %p139
    %s142 = sadd.s32 %s141, 1
    %p145 = scmp.eq.s32.totalorder %s23, 1
    %p146 = scmp.ne.s32.totalorder %s141, %s143
    %p147 = scmp.eq.s32.totalorder %s23, 0
    %p148 = por %p146, %p147
    %p149 = scmp.ne.s32.totalorder %s141, %s143
    %p150 = scmp.eq.s32.totalorder %s28, 1
    %p151 = por %p149, %p150
    %p152 = scmp.ne.s32.totalorder %s143, %s144
    %p153 = scmp.eq.s32.totalorder %s28, 0
    %p154 = por %p152, %p153
    %p155 = scmp.ne.s32.totalorder %s143, %s144
    %p156 = scmp.eq.s32.totalorder %s29, 1
    %p157 = por %p155, %p156
    %p159 = scmp.ne.s32.totalorder %s144, %s158
    %p160 = scmp.eq.s32.totalorder %s29, 0
    %p161 = por %p159, %p160
    %s163 = sadd.s32 %s162, 1
    %p166 = scmp.eq.s32.totalorder %s23, 1
    %p167 = scmp.ne.s32.totalorder %s162, %s164
    %p168 = scmp.eq.s32.totalorder %s23, 0
    %p169 = por %p167, %p168
    %p170 = scmp.ne.s32.totalorder %s162, %s164
    %p171 = scmp.eq.s32.totalorder %s28, 1
    %p172 = por %p170, %p171
    %p173 = scmp.ne.s32.totalorder %s164, %s165
    %p174 = scmp.eq.s32.totalorder %s28, 0
    %p175 = por %p173, %p174
    %p176 = scmp.ne.s32.totalorder %s164, %s165
    %p177 = scmp.eq.s32.totalorder %s29, 1
    %p178 = por %p176, %p177
    %p180 = scmp.ne.s32.totalorder %s165, %s179
    %p181 = scmp.eq.s32.totalorder %s29, 0
    %p182 = por %p180, %p181
    %s184 = sadd.s32 %s183, 1
    %p187 = scmp.eq.s32.totalorder %s23, 1
    %p188 = scmp.ne.s32.totalorder %s183, %s185
    %p189 = scmp.eq.s32.totalorder %s23, 0
    %p190 = por %p188, %p189
    %p191 = scmp.ne.s32.totalorder %s183, %s185
    %p192 = scmp.eq.s32.totalorder %s28, 1
    %p193 = por %p191, %p192
    %p194 = scmp.ne.s32.totalorder %s185, %s186
    %p195 = scmp.eq.s32.totalorder %s28, 0
    %p196 = por %p194, %p195
    %p197 = scmp.ne.s32.totalorder %s185, %s186
    %p198 = scmp.eq.s32.totalorder %s29, 1
    %p199 = por %p197, %p198
    %p201 = scmp.ne.s32.totalorder %s186, %s200
    %p202 = scmp.eq.s32.totalorder %s29, 0
    %p203 = por %p201, %p202
    %s205 = sadd.s32 %s204, 1
    %p208 = scmp.eq.s32.totalorder %s23, 1
    %p209 = scmp.ne.s32.totalorder %s204, %s206
    %p210 = scmp.eq.s32.totalorder %s23, 0
    %p211 = por %p209, %p210
    %p212 = scmp.ne.s32.totalorder %s204, %s206
    %p213 = scmp.eq.s32.totalorder %s28, 1
    %p214 = por %p212, %p213
    %p215 = scmp.ne.s32.totalorder %s206, %s207
    %p216 = scmp.eq.s32.totalorder %s28, 0
    %p217 = por %p215, %p216
    %p218 = scmp.ne.s32.totalorder %s206, %s207
    %p219 = scmp.eq.s32.totalorder %s29, 1
    %p220 = por %p218, %p219
    %p222 = scmp.ne.s32.totalorder %s207, %s221
    %p223 = scmp.eq.s32.totalorder %s29, 0
    %p224 = por %p222, %p223
    %s226 = sadd.s32 %s225, 1
    %p229 = scmp.eq.s32.totalorder %s23, 1
    %p230 = scmp.ne.s32.totalorder %s225, %s227
    %p231 = scmp.eq.s32.totalorder %s23, 0
    %p232 = por %p230, %p231
    %p233 = scmp.ne.s32.totalorder %s225, %s227
    %p234 = scmp.eq.s32.totalorder %s28, 1
    %p235 = por %p233, %p234
    %p236 = scmp.ne.s32.totalorder %s227, %s228
    %p237 = scmp.eq.s32.totalorder %s28, 0
    %p238 = por %p236, %p237
    %p239 = scmp.ne.s32.totalorder %s227, %s228
    %p240 = scmp.eq.s32.totalorder %s29, 1
    %p241 = por %p239, %p240
    %p243 = scmp.ne.s32.totalorder %s228, %s242
    %p244 = scmp.eq.s32.totalorder %s29, 0
    %p245 = por %p243, %p244
    %s247 = sadd.s32 %s246, 1
    %p250 = scmp.eq.s32.totalorder %s23, 1
    %p251 = scmp.ne.s32.totalorder %s246, %s248
    %p252 = scmp.eq.s32.totalorder %s23, 0
    %p253 = por %p251, %p252
    %p254 = scmp.ne.s32.totalorder %s246, %s248
    %p255 = scmp.eq.s32.totalorder %s28, 1
    %p256 = por %p254, %p255
    %p257 = scmp.ne.s32.totalorder %s248, %s249
    %p258 = scmp.eq.s32.totalorder %s28, 0
    %p259 = por %p257, %p258
    %p260 = scmp.ne.s32.totalorder %s248, %s249
    %p261 = scmp.eq.s32.totalorder %s29, 1
    %p262 = por %p260, %p261
    %p264 = scmp.ne.s32.totalorder %s249, %s263
    %p265 = scmp.eq.s32.totalorder %s29, 0
    %p266 = por %p264, %p265
    %s268 = sadd.s32 %s267, 1
    %p271 = scmp.eq.s32.totalorder %s23, 1
    %p272 = scmp.ne.s32.totalorder %s267, %s269
    %p273 = scmp.eq.s32.totalorder %s23, 0
    %p274 = por %p272, %p273
    %p275 = scmp.ne.s32.totalorder %s267, %s269
    %p276 = scmp.eq.s32.totalorder %s28, 1
    %p277 = por %p275, %p276
    %p278 = scmp.ne.s32.totalorder %s269, %s270
    %p279 = scmp.eq.s32.totalorder %s28, 0
    %p280 = por %p278, %p279
    %p281 = scmp.ne.s32.totalorder %s269, %s270
    %p282 = scmp.eq.s32.totalorder %s29, 1
    %p283 = por %p281, %p282
    %p285 = scmp.ne.s32.totalorder %s270, %s284
    %p286 = scmp.eq.s32.totalorder %s29, 0
    %p287 = por %p285, %p286
    %s289 = sadd.s32 %s288, 1
    %p292 = scmp.eq.s32.totalorder %s23, 1
    %p293 = scmp.ne.s32.totalorder %s288, %s290
    %p294 = scmp.eq.s32.totalorder %s23, 0
    %p295 = por %p293, %p294
    %p296 = scmp.ne.s32.totalorder %s288, %s290
    %p297 = scmp.eq.s32.totalorder %s28, 1
    %p298 = por %p296, %p297
    %p299 = scmp.ne.s32.totalorder %s290, %s291
    %p300 = scmp.eq.s32.totalorder %s28, 0
    %p301 = por %p299, %p300
    %p302 = scmp.ne.s32.totalorder %s290, %s291
    %p303 = scmp.eq.s32.totalorder %s29, 1
    %p304 = por %p302, %p303
    %p306 = scmp.ne.s32.totalorder %s291, %s305
    %p307 = scmp.eq.s32.totalorder %s29, 0
    %p308 = por %p306, %p307
    %s310 = sadd.s32 %s309, 1
    %p313 = scmp.eq.s32.totalorder %s23, 1
    %p314 = scmp.ne.s32.totalorder %s309, %s311
    %p315 = scmp.eq.s32.totalorder %s23, 0
    %p316 = por %p314, %p315
    %p317 = scmp.ne.s32.totalorder %s309, %s311
    %p318 = scmp.eq.s32.totalorder %s28, 1
    %p319 = por %p317, %p318
    %p320 = scmp.ne.s32.totalorder %s311, %s312
    %p321 = scmp.eq.s32.totalorder %s28, 0
    %p322 = por %p320, %p321
    %p323 = scmp.ne.s32.totalorder %s311, %s312
    %p324 = scmp.eq.s32.totalorder %s29, 1
    %p325 = por %p323, %p324
    %p327 = scmp.ne.s32.totalorder %s312, %s326
    %p328 = scmp.eq.s32.totalorder %s29, 0
    %p329 = por %p327, %p328
    %s331 = sadd.s32 %s330, 1
    %p334 = scmp.eq.s32.totalorder %s23, 1
    %p335 = scmp.ne.s32.totalorder %s330, %s332
    %p336 = scmp.eq.s32.totalorder %s23, 0
    %p337 = por %p335, %p336
    %p338 = scmp.ne.s32.totalorder %s330, %s332
    %p339 = scmp.eq.s32.totalorder %s28, 1
    %p340 = por %p338, %p339
    %p341 = scmp.ne.s32.totalorder %s332, %s333
    %p342 = scmp.eq.s32.totalorder %s28, 0
    %p343 = por %p341, %p342
    %p344 = scmp.ne.s32.totalorder %s332, %s333
    %p345 = scmp.eq.s32.totalorder %s29, 1
    %p346 = por %p344, %p345
    %p348 = scmp.ne.s32.totalorder %s333, %s347
    %p349 = scmp.eq.s32.totalorder %s29, 0
    %p350 = por %p348, %p349
    %s352 = sadd.s32 %s351, 1
    %p355 = scmp.eq.s32.totalorder %s23, 1
    %p356 = scmp.ne.s32.totalorder %s351, %s353
    %p357 = scmp.eq.s32.totalorder %s23, 0
    %p358 = por %p356, %p357
    %p359 = scmp.ne.s32.totalorder %s351, %s353
    %p360 = scmp.eq.s32.totalorder %s28, 1
    %p361 = por %p359, %p360
    %p362 = scmp.ne.s32.totalorder %s353, %s354
    %p363 = scmp.eq.s32.totalorder %s28, 0
    %p364 = por %p362, %p363
    %p365 = scmp.ne.s32.totalorder %s353, %s354
    %p366 = scmp.eq.s32.totalorder %s29, 1
    %p367 = por %p365, %p366
    %p369 = scmp.ne.s32.totalorder %s354, %s368
    %p370 = scmp.eq.s32.totalorder %s29, 0
    %p371 = por %p369, %p370
    %s373 = sadd.s32 %s372, 1
    %p376 = scmp.eq.s32.totalorder %s23, 1
    %p377 = scmp.ne.s32.totalorder %s372, %s374
    %p378 = scmp.eq.s32.totalorder %s23, 0
    %p379 = por %p377, %p378
    %p380 = scmp.ne.s32.totalorder %s372, %s374
    %p381 = scmp.eq.s32.totalorder %s28, 1
    %p382 = por %p380, %p381
    %p383 = scmp.ne.s32.totalorder %s374, %s375
    %p384 = scmp.eq.s32.totalorder %s28, 0
    %p385 = por %p383, %p384
    %p386 = scmp.ne.s32.totalorder %s374, %s375
    %p387 = scmp.eq.s32.totalorder %s29, 1
    %p388 = por %p386, %p387
    %p390 = scmp.ne.s32.totalorder %s375, %s389
    %p391 = scmp.eq.s32.totalorder %s29, 0
    %p392 = por %p390, %p391
    %s393 = ssub.s32 %s23, %s30
    %p394 = scmp.eq.s32.totalorder %s393, 0
    %s396 = sadd.s32 %s395, 1
    %s397 = scalar_select %p394, %s395, %s396
    %p400 = pneg %p394
    %p401 = scmp.eq.s32.totalorder %s23, 1
    %p402 = por %p400, %p401
    %p403 = scmp.ne.s32.totalorder %s395, %s398
    %p404 = scmp.eq.s32.totalorder %s23, 0
    %p405 = por %p403, %p404
    %p406 = scmp.ne.s32.totalorder %s395, %s398
    %p407 = scmp.eq.s32.totalorder %s28, 1
    %p408 = por %p406, %p407
    %p409 = scmp.ne.s32.totalorder %s398, %s399
    %p410 = scmp.eq.s32.totalorder %s28, 0
    %p411 = por %p409, %p410
    %p412 = scmp.ne.s32.totalorder %s398, %s399
    %p413 = scmp.eq.s32.totalorder %s29, 1
    %p414 = por %p412, %p413
    %p416 = scmp.ne.s32.totalorder %s399, %s415
    %p417 = scmp.eq.s32.totalorder %s29, 0
    %p418 = por %p416, %p417
    %p419 = scmp.le.s32.totalorder 1, %s23
    %p420 = scmp.lt.s32.totalorder %s23, 3
    %p421 = pnand %p419, %p420
    %p422 = pneg %p421
    // Predicated region
    $region9: #{efficientnet_gen_forward.1} parent=5 // pred_check
      _
    $region10: #{efficientnet_gen_forward.1} parent=5 // pred_check_branch
      %424 = sbr.rel (%p421) target = $region12
    $region11: #{efficientnet_gen_forward.1} parent=5 // pred_region
      %s425 = ssub.s32 %s23, 1
      // Predicated region
      $region13: #{efficientnet_gen_forward.1} parent=11 // pred_check
        %p426 = pneg %p70
      $region14: #{efficientnet_gen_forward.1} parent=11 // pred_check_branch
        %428 = sbr.rel (%p426) target = $region16
      $region15: #{efficientnet_gen_forward.1} parent=11 // pred_region
        _
      $region16: #{efficientnet_gen_forward.1} parent=11 // pred_fallthru
        _
      // Predicated region
      $region17: #{efficientnet_gen_forward.1} parent=11 // pred_check
        %p429 = pneg %p91
      $region18: #{efficientnet_gen_forward.1} parent=11 // pred_check_branch
        %431 = sbr.rel (%p429) target = $region20
      $region19: #{efficientnet_gen_forward.1} parent=11 // pred_region
        _
      $region20: #{efficientnet_gen_forward.1} parent=11 // pred_fallthru
        _
      // Predicated region
      $region21: #{efficientnet_gen_forward.1} parent=11 // pred_check
        %p432 = pneg %p112
      $region22: #{efficientnet_gen_forward.1} parent=11 // pred_check_branch
        %434 = sbr.rel (%p432) target = $region24
      $region23: #{efficientnet_gen_forward.1} parent=11 // pred_region
        _
      $region24: #{efficientnet_gen_forward.1} parent=11 // pred_fallthru
        _
      // Predicated region
      $region25: #{efficientnet_gen_forward.1} parent=11 // pred_check
        %p435 = pneg %p133
      $region26: #{efficientnet_gen_forward.1} parent=11 // pred_check_branch
        %437 = sbr.rel (%p435) target = $region28
      $region27: #{efficientnet_gen_forward.1} parent=11 // pred_region
        _
      $region28: #{efficientnet_gen_forward.1} parent=11 // pred_fallthru
        _
      // Predicated region
      $region29: #{efficientnet_gen_forward.1} parent=11 // pred_check
        %p438 = pneg %p154
      $region30: #{efficientnet_gen_forward.1} parent=11 // pred_check_branch
        %440 = sbr.rel (%p438) target = $region32
      $region31: #{efficientnet_gen_forward.1} parent=11 // pred_region
        _
      $region32: #{efficientnet_gen_forward.1} parent=11 // pred_fallthru
        _
      // Predicated region
      $region33: #{efficientnet_gen_forward.1} parent=11 // pred_check
        %p441 = pneg %p175
      $region34: #{efficientnet_gen_forward.1} parent=11 // pred_check_branch
        %443 = sbr.rel (%p441) target = $region36
      $region35: #{efficientnet_gen_forward.1} parent=11 // pred_region
        _
      $region36: #{efficientnet_gen_forward.1} parent=11 // pred_fallthru
        _
      // Predicated region
      $region37: #{efficientnet_gen_forward.1} parent=11 // pred_check
        %p444 = pneg %p196
      $region38: #{efficientnet_gen_forward.1} parent=11 // pred_check_branch
        %446 = sbr.rel (%p444) target = $region40
      $region39: #{efficientnet_gen_forward.1} parent=11 // pred_region
        _
      $region40: #{efficientnet_gen_forward.1} parent=11 // pred_fallthru
        _
      // Predicated region
      $region41: #{efficientnet_gen_forward.1} parent=11 // pred_check
        %p447 = pneg %p217
      $region42: #{efficientnet_gen_forward.1} parent=11 // pred_check_branch
        %449 = sbr.rel (%p447) target = $region44
      $region43: #{efficientnet_gen_forward.1} parent=11 // pred_region
        _
      $region44: #{efficientnet_gen_forward.1} parent=11 // pred_fallthru
        _
      // Predicated region
      $region45: #{efficientnet_gen_forward.1} parent=11 // pred_check
        %p450 = pneg %p238
      $region46: #{efficientnet_gen_forward.1} parent=11 // pred_check_branch
        %452 = sbr.rel (%p450) target = $region48
      $region47: #{efficientnet_gen_forward.1} parent=11 // pred_region
        _
      $region48: #{efficientnet_gen_forward.1} parent=11 // pred_fallthru
        _
      // Predicated region
      $region49: #{efficientnet_gen_forward.1} parent=11 // pred_check
        %p453 = pneg %p259
      $region50: #{efficientnet_gen_forward.1} parent=11 // pred_check_branch
        %455 = sbr.rel (%p453) target = $region52
      $region51: #{efficientnet_gen_forward.1} parent=11 // pred_region
        _
      $region52: #{efficientnet_gen_forward.1} parent=11 // pred_fallthru
        _
      // Predicated region
      $region53: #{efficientnet_gen_forward.1} parent=11 // pred_check
        %p456 = pneg %p280
      $region54: #{efficientnet_gen_forward.1} parent=11 // pred_check_branch
        %458 = sbr.rel (%p456) target = $region56
      $region55: #{efficientnet_gen_forward.1} parent=11 // pred_region
        _
      $region56: #{efficientnet_gen_forward.1} parent=11 // pred_fallthru
        _
      // Predicated region
      $region57: #{efficientnet_gen_forward.1} parent=11 // pred_check
        %p459 = pneg %p301
      $region58: #{efficientnet_gen_forward.1} parent=11 // pred_check_branch
        %461 = sbr.rel (%p459) target = $region60
      $region59: #{efficientnet_gen_forward.1} parent=11 // pred_region
        _
      $region60: #{efficientnet_gen_forward.1} parent=11 // pred_fallthru
        _
      // Predicated region
      $region61: #{efficientnet_gen_forward.1} parent=11 // pred_check
        %p462 = pneg %p322
      $region62: #{efficientnet_gen_forward.1} parent=11 // pred_check_branch
        %464 = sbr.rel (%p462) target = $region64
      $region63: #{efficientnet_gen_forward.1} parent=11 // pred_region
        _
      $region64: #{efficientnet_gen_forward.1} parent=11 // pred_fallthru
        _
      // Predicated region
      $region65: #{efficientnet_gen_forward.1} parent=11 // pred_check
        %p465 = pneg %p343
      $region66: #{efficientnet_gen_forward.1} parent=11 // pred_check_branch
        %467 = sbr.rel (%p465) target = $region68
      $region67: #{efficientnet_gen_forward.1} parent=11 // pred_region
        _
      $region68: #{efficientnet_gen_forward.1} parent=11 // pred_fallthru
        _
      // Predicated region
      $region69: #{efficientnet_gen_forward.1} parent=11 // pred_check
        %p468 = pneg %p364
      $region70: #{efficientnet_gen_forward.1} parent=11 // pred_check_branch
        %470 = sbr.rel (%p468) target = $region72
      $region71: #{efficientnet_gen_forward.1} parent=11 // pred_region
        _
      $region72: #{efficientnet_gen_forward.1} parent=11 // pred_fallthru
        _
      // Predicated region
      $region73: #{efficientnet_gen_forward.1} parent=11 // pred_check
        %p471 = pneg %p385
      $region74: #{efficientnet_gen_forward.1} parent=11 // pred_check_branch
        %473 = sbr.rel (%p471) target = $region76
      $region75: #{efficientnet_gen_forward.1} parent=11 // pred_region
        _
      $region76: #{efficientnet_gen_forward.1} parent=11 // pred_fallthru
        _
    $region12: #{efficientnet_gen_forward.1} parent=5 // pred_fallthru
      _
    %p474 = scmp.lt.s32.totalorder %s23, 2
    // Predicated region
    $region77: #{efficientnet_gen_forward.1} parent=5 // pred_check
      %p475 = pneg %p474
    $region78: #{efficientnet_gen_forward.1} parent=5 // pred_check_branch
      %477 = sbr.rel (%p475) target = $region80
    $region79: #{efficientnet_gen_forward.1} parent=5 // pred_region
      // Predicated region
      $region81: #{efficientnet_gen_forward.1} parent=79 // pred_check
        %p478 = pneg %p43
      $region82: #{efficientnet_gen_forward.1} parent=79 // pred_check_branch
        %480 = sbr.rel (%p478) target = $region84
      $region83: #{efficientnet_gen_forward.1} parent=79 // pred_region
        %s481 = smul.u32 4, %s23
        %p482 = scmp.lt.s32.totalorder %s481, 7
        %s483 = scalar_select %p482, %s481, 7
        %s484 = smul.addr %s483, 18
        %s485 = smul.addr %s484, 8
        %s486 = scalar_lea.vmem %s0, %s485
        %s487 = smul.u32 4, %s23
      $region84: #{efficientnet_gen_forward.1} parent=79 // pred_fallthru
        _
    $region80: #{efficientnet_gen_forward.1} parent=5 // pred_fallthru
      _
    %p488 = scmp.le.s32.totalorder 1, %s23
    %p489 = scmp.lt.s32.totalorder %s23, 3
    %p490 = pnand %p488, %p489
    %p491 = pneg %p490
    // Predicated region
    $region85: #{efficientnet_gen_forward.1} parent=5 // pred_check
      _
    $region86: #{efficientnet_gen_forward.1} parent=5 // pred_check_branch
      %493 = sbr.rel (%p490) target = $region88
    $region87: #{efficientnet_gen_forward.1} parent=5 // pred_region
      %s494 = ssub.s32 %s23, 1
      %s495 = smul.u32 4, %s28
      %p496 = scmp.lt.s32.totalorder %s495, 7
      %s497 = scalar_select %p496, %s495, 7
      %s498 = smul.addr %s497, 18
      %s499 = smul.addr %s498, 8
      %s500 = scalar_lea.vmem %s0, %s499
      %p501 = pneg %p49
      %p502 = pneg %p46
      %p503 = pneg %p70
      %p504 = pneg %p67
      %p505 = pneg %p91
      %p506 = pneg %p88
      %p507 = pneg %p112
      %p508 = pneg %p109
      %p509 = pneg %p133
      %p510 = pneg %p130
      %p511 = pneg %p154
      %p512 = pneg %p151
      %p513 = pneg %p175
      %p514 = pneg %p172
      %p515 = pneg %p196
      %p516 = pneg %p193
      %p517 = pneg %p217
      %p518 = pneg %p214
      %p519 = pneg %p238
      %p520 = pneg %p235
      %p521 = pneg %p259
      %p522 = pneg %p256
      %p523 = pneg %p280
      %p524 = pneg %p277
      %p525 = pneg %p301
      %p526 = pneg %p298
      %p527 = pneg %p322
      %p528 = pneg %p319
      %p529 = pneg %p343
      %p530 = pneg %p340
      %p531 = pneg %p364
      %p532 = pneg %p361
      %p533 = pneg %p385
      %p534 = pneg %p382
      %p535 = pneg %p411
      %p536 = pneg %p408
      %p537 = scmp.lt.s32.totalorder %s28, 1
      %s538 = scalar_select %p537, %s28, 1
      %s539 = scalar_lea.vmem %s17, %s538
      %s540 = smul.u32 4, %s28
      %p541 = scmp.lt.s32.totalorder %s540, 7
      %s542 = scalar_select %p541, %s540, 7
      %s543 = smul.addr %s542, 18
      %s544 = smul.addr %s543, 8
      %s545 = scalar_lea.vmem %s0, %s544
      %s546 = smul.u32 4, %s28
      %p547 = scmp.lt.s32.totalorder %s28, 1
      %s548 = scalar_select %p547, %s28, 1
      %s549 = scalar_lea.vmem %s17, %s548
      %v550 = vld [vmem:[%s545] sm:$0xff]
      %v551 = vld [vmem:[%s545 + $0x8] sm:$0x1]
      %v552 = vld [vmem:[%s545 + $0x10] sm:$0xff]
      %v553 = vld [vmem:[%s545 + $0x18] sm:$0x1]
      %v554 = vld [vmem:[%s545 + $0x20] sm:$0xff]
      %v555 = vld [vmem:[%s545 + $0x28] sm:$0x1]
      %v556 = vld [vmem:[%s545 + $0x30] sm:$0xff]
      %v557 = vld [vmem:[%s545 + $0x38] sm:$0x1]
      %v558 = vld [vmem:[%s545 + $0x40] sm:$0xff]
      %v559 = vld [vmem:[%s545 + $0x48] sm:$0x1]
      %v560 = vld [vmem:[%s545 + $0x50] sm:$0xff]
      %v561 = vld [vmem:[%s545 + $0x58] sm:$0x1]
      %v562 = vld [vmem:[%s545 + $0x60] sm:$0xff]
      %v563 = vld [vmem:[%s545 + $0x68] sm:$0x1]
      %v564 = vld [vmem:[%s545 + $0x70] sm:$0xff]
      %v565 = vld [vmem:[%s545 + $0x78] sm:$0x1]
      %v566 = vld [vmem:[%s545 + $0x80] sm:$0xff]
      %v567 = vld [vmem:[%s545 + $0x88] sm:$0x1]
      %v568 = vld [vmem:[%s545 + $0x90] sm:$0xff]
      %v569 = vld [vmem:[%s545 + $0xa0] sm:$0xff]
      %v570 = vld [vmem:[%s545 + $0xb0] sm:$0xff]
      %v571 = vld [vmem:[%s545 + $0xc0] sm:$0xff]
      %v572 = vld [vmem:[%s545 + $0xd0] sm:$0xff]
      %v573 = vld [vmem:[%s545 + $0xe0] sm:$0xff]
      %v574 = vld [vmem:[%s545 + $0xf0] sm:$0xff]
      %v575 = vld [vmem:[%s545 + $0x100] sm:$0xff]
      %v576 = vld [vmem:[%s545 + $0x110] sm:$0xff]
      %v577 = vld [vmem:[%s545 + $0x120] sm:$0xff]
      %v578 = vld [vmem:[%s545 + $0x128] sm:$0x1]
      %v579 = vld [vmem:[%s545 + $0x130] sm:$0xff]
      %v580 = vld [vmem:[%s545 + $0x138] sm:$0x1]
      %v581 = vld [vmem:[%s545 + $0x140] sm:$0xff]
      %v582 = vld [vmem:[%s545 + $0x148] sm:$0x1]
      %v583 = vld [vmem:[%s545 + $0x150] sm:$0xff]
      %v584 = vld [vmem:[%s545 + $0x158] sm:$0x1]
      %v585 = vld [vmem:[%s545 + $0x160] sm:$0xff]
      %v586 = vld [vmem:[%s545 + $0x168] sm:$0x1]
      %v587 = vld [vmem:[%s545 + $0x170] sm:$0xff]
      %v588 = vld [vmem:[%s545 + $0x178] sm:$0x1]
      %v589 = vld [vmem:[%s545 + $0x180] sm:$0xff]
      %v590 = vld [vmem:[%s545 + $0x188] sm:$0x1]
      %v591 = vld [vmem:[%s545 + $0x190] sm:$0xff]
      %v592 = vld [vmem:[%s545 + $0x198] sm:$0x1]
      %v593 = vld [vmem:[%s545 + $0x1b0] sm:$0xff]
      %v594 = vld [vmem:[%s545 + $0x1c0] sm:$0xff]
      %v595 = vld [vmem:[%s545 + $0x1d0] sm:$0xff]
      %v596 = vld [vmem:[%s545 + $0x1e0] sm:$0xff]
      %v597 = vld [vmem:[%s545 + $0x1f0] sm:$0xff]
      %v598 = vld [vmem:[%s545 + $0x200] sm:$0xff]
      %v599 = vld [vmem:[%s545 + $0x210] sm:$0xff]
      %v600 = vld [vmem:[%s545 + $0x220] sm:$0xff]
      %v601 = vld [vmem:[%s1] sm:$0x7]
      %v602 = vld [vmem:[%s1 + $0x4] sm:$0x7]
      %v603 = vld [vmem:[%s1 + $0x8] sm:$0x7]
      %v604 = vld [vmem:[%s1 + $0xc] sm:$0x7]
      %v605 = vld [vmem:[%s1 + $0x10] sm:$0x7]
      %v606 = vld [vmem:[%s1 + $0x14] sm:$0x7]
      %v607 = vld [vmem:[%s1 + $0x18] sm:$0x7]
      %v608 = vld [vmem:[%s1 + $0x1c] sm:$0x7]
      %v609 = vld [vmem:[%s1 + $0x20] sm:$0x7]
      %v610 = vld [vmem:[%s2] sm:$0x1]
      %vm611 = vcmask 23552
      %v613 = vsel %vm611, %v550, 0
      %v616 = vsel %vm611, %v552, 0
      %v619 = vsel %vm611, %v554, 0
      %v622 = vsel %vm611, %v556, 0
      %v625 = vsel %vm611, %v558, 0
      %v628 = vsel %vm611, %v560, 0
      %v631 = vsel %vm611, %v562, 0
      %v634 = vsel %vm611, %v564, 0
      %vm636 = vcmask 1042432
      %v638 = vsel %vm636, %v601, 0
      %640 = vmatpush.msra.mxu0 0.0
      %641 = vmatpush.msra.mxu0 0.0
      %642 = vmatpush.msra.mxu0 0.0
      %643 = vmatpush.msra.mxu0 0.0
      %644 = vmatpush.msra.mxu0 0.0
      %645 = vmatpush.msra.mxu0 0.0
      %646 = vmatpush.msra.mxu0 0.0
      %647 = vmatpush.msra.mxu0 0.0
      %648 = vmatpush.msra.mxu0 0.0
      %649 = vmatpush.msra.mxu0 0.0
      %650 = vmatpush.msra.mxu0 0.0
      %651 = vmatpush.msra.mxu0 0.0
      %652 = vmatpush.msra.mxu0 0.0
      %653 = vmatpush.msra.mxu0 0.0
      %654 = vmatpush.msra.mxu0 0.0
      %655 = vmatpush.msra.mxu0 %v638
      %656 = vmatmul.f32.gmra.mxu0 %v613
      %v657 = vpop.f32.mrf.mxu0
      %v658 = vadd.f32 0.0, %v657
      %659 = vmatmul.f32.gmra.mxu0 %v616
      %v660 = vpop.f32.mrf.mxu0
      %v661 = vadd.f32 0.0, %v660
      %662 = vmatmul.f32.gmra.mxu0 %v619
      %v663 = vpop.f32.mrf.mxu0
      %v664 = vadd.f32 0.0, %v663
      %665 = vmatmul.f32.gmra.mxu0 %v622
      %v666 = vpop.f32.mrf.mxu0
      %v667 = vadd.f32 0.0, %v666
      %668 = vmatmul.f32.gmra.mxu0 %v625
      %v669 = vpop.f32.mrf.mxu0
      %v670 = vadd.f32 0.0, %v669
      %671 = vmatmul.f32.gmra.mxu0 %v628
      %v672 = vpop.f32.mrf.mxu0
      %v673 = vadd.f32 0.0, %v672
      %674 = vmatmul.f32.gmra.mxu0 %v631
      %v675 = vpop.f32.mrf.mxu0
      %v676 = vadd.f32 0.0, %v675
      %677 = vmatmul.f32.gmra.mxu0 %v634
      %v678 = vpop.f32.mrf.mxu0
      %v679 = vadd.f32 0.0, %v678
      %680 = vdwg.mxu0
      %v682 = vperm.slane %v610, 0
      %v684 = vadd.f32 %v682, %v658
      %v685 = vadd.f32 %v682, %v661
      %v686 = vadd.f32 %v682, %v664
      %v687 = vadd.f32 %v682, %v667
      %v688 = vadd.f32 %v682, %v670
      %v689 = vadd.f32 %v682, %v673
      %v690 = vadd.f32 %v682, %v676
      %v691 = vadd.f32 %v682, %v679
      %v693 = vsel %vm611, %v568, 0
      %v696 = vsel %vm611, %v569, 0
      %v699 = vsel %vm611, %v570, 0
      %v702 = vsel %vm611, %v571, 0
      %v705 = vsel %vm611, %v572, 0
      %v708 = vsel %vm611, %v573, 0
      %v711 = vsel %vm611, %v574, 0
      %v714 = vsel %vm611, %v575, 0
      %v717 = vsel %vm636, %v602, 0
      %719 = vmatpush.msra.mxu0 0.0
      %720 = vmatpush.msra.mxu0 0.0
      %721 = vmatpush.msra.mxu0 0.0
      %722 = vmatpush.msra.mxu0 0.0
      %723 = vmatpush.msra.mxu0 0.0
      %724 = vmatpush.msra.mxu0 0.0
      %725 = vmatpush.msra.mxu0 0.0
      %726 = vmatpush.msra.mxu0 0.0
      %727 = vmatpush.msra.mxu0 0.0
      %728 = vmatpush.msra.mxu0 0.0
      %729 = vmatpush.msra.mxu0 0.0
      %730 = vmatpush.msra.mxu0 0.0
      %731 = vmatpush.msra.mxu0 0.0
      %732 = vmatpush.msra.mxu0 0.0
      %733 = vmatpush.msra.mxu0 0.0
      %734 = vmatpush.msra.mxu0 %v717
      %735 = vmatmul.f32.gmra.mxu0 %v693
      %v736 = vpop.f32.mrf.mxu0
      %v737 = vadd.f32 0.0, %v736
      %738 = vmatmul.f32.gmra.mxu0 %v696
      %v739 = vpop.f32.mrf.mxu0
      %v740 = vadd.f32 0.0, %v739
      %741 = vmatmul.f32.gmra.mxu0 %v699
      %v742 = vpop.f32.mrf.mxu0
      %v743 = vadd.f32 0.0, %v742
      %744 = vmatmul.f32.gmra.mxu0 %v702
      %v745 = vpop.f32.mrf.mxu0
      %v746 = vadd.f32 0.0, %v745
      %747 = vmatmul.f32.gmra.mxu0 %v705
      %v748 = vpop.f32.mrf.mxu0
      %v749 = vadd.f32 0.0, %v748
      %750 = vmatmul.f32.gmra.mxu0 %v708
      %v751 = vpop.f32.mrf.mxu0
      %v752 = vadd.f32 0.0, %v751
      %753 = vmatmul.f32.gmra.mxu0 %v711
      %v754 = vpop.f32.mrf.mxu0
      %v755 = vadd.f32 0.0, %v754
      %756 = vmatmul.f32.gmra.mxu0 %v714
      %v757 = vpop.f32.mrf.mxu0
      %v758 = vadd.f32 0.0, %v757
      %759 = vdwg.mxu0
      %v760 = vadd.f32 %v684, %v737
      %v761 = vadd.f32 %v685, %v740
      %v762 = vadd.f32 %v686, %v743
      %v763 = vadd.f32 %v687, %v746
      %v764 = vadd.f32 %v688, %v749
      %v765 = vadd.f32 %v689, %v752
      %v766 = vadd.f32 %v690, %v755
      %v767 = vadd.f32 %v691, %v758
      %vm776 = vcmask 1046528
      %v777 = vrot.slane %v550, 1
      %v778 = vrot.slane %v551, 1
      %v779 = vsel %vm776, %v777, %v778
      %v780 = vrot.slane %v552, 1
      %v781 = vrot.slane %v553, 1
      %v782 = vsel %vm776, %v780, %v781
      %v783 = vrot.slane %v554, 1
      %v784 = vrot.slane %v555, 1
      %v785 = vsel %vm776, %v783, %v784
      %v786 = vrot.slane %v556, 1
      %v787 = vrot.slane %v557, 1
      %v788 = vsel %vm776, %v786, %v787
      %v789 = vrot.slane %v558, 1
      %v790 = vrot.slane %v559, 1
      %v791 = vsel %vm776, %v789, %v790
      %v792 = vrot.slane %v560, 1
      %v793 = vrot.slane %v561, 1
      %v794 = vsel %vm776, %v792, %v793
      %v795 = vrot.slane %v562, 1
      %v796 = vrot.slane %v563, 1
      %v797 = vsel %vm776, %v795, %v796
      %v798 = vrot.slane %v564, 1
      %v799 = vrot.slane %v565, 1
      %v800 = vsel %vm776, %v798, %v799
      %v801 = vsel %vm611, %v779, 0
      %v803 = vsel %vm611, %v782, 0
      %v805 = vsel %vm611, %v785, 0
      %v807 = vsel %vm611, %v788, 0
      %v809 = vsel %vm611, %v791, 0
      %v811 = vsel %vm611, %v794, 0
      %v813 = vsel %vm611, %v797, 0
      %v815 = vsel %vm611, %v800, 0
      %v818 = vsel %vm636, %v603, 0
      %820 = vmatpush.msra.mxu0 0.0
      %821 = vmatpush.msra.mxu0 0.0
      %822 = vmatpush.msra.mxu0 0.0
      %823 = vmatpush.msra.mxu0 0.0
      %824 = vmatpush.msra.mxu0 0.0
      %825 = vmatpush.msra.mxu0 0.0
      %826 = vmatpush.msra.mxu0 0.0
      %827 = vmatpush.msra.mxu0 0.0
      %828 = vmatpush.msra.mxu0 0.0
      %829 = vmatpush.msra.mxu0 0.0
      %830 = vmatpush.msra.mxu0 0.0
      %831 = vmatpush.msra.mxu0 0.0
      %832 = vmatpush.msra.mxu0 0.0
      %833 = vmatpush.msra.mxu0 0.0
      %834 = vmatpush.msra.mxu0 0.0
      %835 = vmatpush.msra.mxu0 %v818
      %836 = vmatmul.f32.gmra.mxu0 %v801
      %v837 = vpop.f32.mrf.mxu0
      %v838 = vadd.f32 0.0, %v837
      %839 = vmatmul.f32.gmra.mxu0 %v803
      %v840 = vpop.f32.mrf.mxu0
      %v841 = vadd.f32 0.0, %v840
      %842 = vmatmul.f32.gmra.mxu0 %v805
      %v843 = vpop.f32.mrf.mxu0
      %v844 = vadd.f32 0.0, %v843
      %845 = vmatmul.f32.gmra.mxu0 %v807
      %v846 = vpop.f32.mrf.mxu0
      %v847 = vadd.f32 0.0, %v846
      %848 = vmatmul.f32.gmra.mxu0 %v809
      %v849 = vpop.f32.mrf.mxu0
      %v850 = vadd.f32 0.0, %v849
      %851 = vmatmul.f32.gmra.mxu0 %v811
      %v852 = vpop.f32.mrf.mxu0
      %v853 = vadd.f32 0.0, %v852
      %854 = vmatmul.f32.gmra.mxu0 %v813
      %v855 = vpop.f32.mrf.mxu0
      %v856 = vadd.f32 0.0, %v855
      %857 = vmatmul.f32.gmra.mxu0 %v815
      %v858 = vpop.f32.mrf.mxu0
      %v859 = vadd.f32 0.0, %v858
      %860 = vdwg.mxu0
      %v861 = vadd.f32 %v760, %v838
      %v862 = vadd.f32 %v761, %v841
      %v863 = vadd.f32 %v762, %v844
      %v864 = vadd.f32 %v763, %v847
      %v865 = vadd.f32 %v764, %v850
      %v866 = vadd.f32 %v765, %v853
      %v867 = vadd.f32 %v766, %v856
      %v868 = vadd.f32 %v767, %v859
      %v870 = vsel %vm611, %v577, 0
      %v873 = vsel %vm611, %v579, 0
      %v876 = vsel %vm611, %v581, 0
      %v879 = vsel %vm611, %v583, 0
      %v882 = vsel %vm611, %v585, 0
      %v885 = vsel %vm611, %v587, 0
      %v888 = vsel %vm611, %v589, 0
      %v891 = vsel %vm611, %v591, 0
      %v894 = vsel %vm636, %v604, 0
      %896 = vmatpush.msra.mxu0 0.0
      %897 = vmatpush.msra.mxu0 0.0
      %898 = vmatpush.msra.mxu0 0.0
      %899 = vmatpush.msra.mxu0 0.0
      %900 = vmatpush.msra.mxu0 0.0
      %901 = vmatpush.msra.mxu0 0.0
      %902 = vmatpush.msra.mxu0 0.0
      %903 = vmatpush.msra.mxu0 0.0
      %904 = vmatpush.msra.mxu0 0.0
      %905 = vmatpush.msra.mxu0 0.0
      %906 = vmatpush.msra.mxu0 0.0
      %907 = vmatpush.msra.mxu0 0.0
      %908 = vmatpush.msra.mxu0 0.0
      %909 = vmatpush.msra.mxu0 0.0
      %910 = vmatpush.msra.mxu0 0.0
      %911 = vmatpush.msra.mxu0 %v894
      %912 = vmatmul.f32.gmra.mxu0 %v870
      %v913 = vpop.f32.mrf.mxu0
      %v914 = vadd.f32 0.0, %v913
      %915 = vmatmul.f32.gmra.mxu0 %v873
      %v916 = vpop.f32.mrf.mxu0
      %v917 = vadd.f32 0.0, %v916
      %918 = vmatmul.f32.gmra.mxu0 %v876
      %v919 = vpop.f32.mrf.mxu0
      %v920 = vadd.f32 0.0, %v919
      %921 = vmatmul.f32.gmra.mxu0 %v879
      %v922 = vpop.f32.mrf.mxu0
      %v923 = vadd.f32 0.0, %v922
      %924 = vmatmul.f32.gmra.mxu0 %v882
      %v925 = vpop.f32.mrf.mxu0
      %v926 = vadd.f32 0.0, %v925
      %927 = vmatmul.f32.gmra.mxu0 %v885
      %v928 = vpop.f32.mrf.mxu0
      %v929 = vadd.f32 0.0, %v928
      %930 = vmatmul.f32.gmra.mxu0 %v888
      %v931 = vpop.f32.mrf.mxu0
      %v932 = vadd.f32 0.0, %v931
      %933 = vmatmul.f32.gmra.mxu0 %v891
      %v934 = vpop.f32.mrf.mxu0
      %v935 = vadd.f32 0.0, %v934
      %936 = vdwg.mxu0
      %v937 = vadd.f32 %v861, %v914
      %v938 = vadd.f32 %v862, %v917
      %v939 = vadd.f32 %v863, %v920
      %v940 = vadd.f32 %v864, %v923
      %v941 = vadd.f32 %v865, %v926
      %v942 = vadd.f32 %v866, %v929
      %v943 = vadd.f32 %v867, %v932
      %v944 = vadd.f32 %v868, %v935
      %v946 = vsel %vm611, %v593, 0
      %v949 = vsel %vm611, %v594, 0
      %v952 = vsel %vm611, %v595, 0
      %v955 = vsel %vm611, %v596, 0
      %v958 = vsel %vm611, %v597, 0
      %v961 = vsel %vm611, %v598, 0
      %v964 = vsel %vm611, %v599, 0
      %v967 = vsel %vm611, %v600, 0
      %v970 = vsel %vm636, %v605, 0
      %972 = vmatpush.msra.mxu0 0.0
      %973 = vmatpush.msra.mxu0 0.0
      %974 = vmatpush.msra.mxu0 0.0
      %975 = vmatpush.msra.mxu0 0.0
      %976 = vmatpush.msra.mxu0 0.0
      %977 = vmatpush.msra.mxu0 0.0
      %978 = vmatpush.msra.mxu0 0.0
      %979 = vmatpush.msra.mxu0 0.0
      %980 = vmatpush.msra.mxu0 0.0
      %981 = vmatpush.msra.mxu0 0.0
      %982 = vmatpush.msra.mxu0 0.0
      %983 = vmatpush.msra.mxu0 0.0
      %984 = vmatpush.msra.mxu0 0.0
      %985 = vmatpush.msra.mxu0 0.0
      %986 = vmatpush.msra.mxu0 0.0
      %987 = vmatpush.msra.mxu0 %v970
      %988 = vmatmul.f32.gmra.mxu0 %v946
      %v989 = vpop.f32.mrf.mxu0
      %v990 = vadd.f32 0.0, %v989
      %991 = vmatmul.f32.gmra.mxu0 %v949
      %v992 = vpop.f32.mrf.mxu0
      %v993 = vadd.f32 0.0, %v992
      %994 = vmatmul.f32.gmra.mxu0 %v952
      %v995 = vpop.f32.mrf.mxu0
      %v996 = vadd.f32 0.0, %v995
      %997 = vmatmul.f32.gmra.mxu0 %v955
      %v998 = vpop.f32.mrf.mxu0
      %v999 = vadd.f32 0.0, %v998
      %1000 = vmatmul.f32.gmra.mxu0 %v958
      %v1001 = vpop.f32.mrf.mxu0
      %v1002 = vadd.f32 0.0, %v1001
      %1003 = vmatmul.f32.gmra.mxu0 %v961
      %v1004 = vpop.f32.mrf.mxu0
      %v1005 = vadd.f32 0.0, %v1004
      %1006 = vmatmul.f32.gmra.mxu0 %v964
      %v1007 = vpop.f32.mrf.mxu0
      %v1008 = vadd.f32 0.0, %v1007
      %1009 = vmatmul.f32.gmra.mxu0 %v967
      %v1010 = vpop.f32.mrf.mxu0
      %v1011 = vadd.f32 0.0, %v1010
      %1012 = vdwg.mxu0
      %v1013 = vadd.f32 %v937, %v990
      %v1014 = vadd.f32 %v938, %v993
      %v1015 = vadd.f32 %v939, %v996
      %v1016 = vadd.f32 %v940, %v999
      %v1017 = vadd.f32 %v941, %v1002
      %v1018 = vadd.f32 %v942, %v1005
      %v1019 = vadd.f32 %v943, %v1008
      %v1020 = vadd.f32 %v944, %v1011
      %v1029 = vrot.slane %v577, 1
      %v1030 = vrot.slane %v578, 1
      %v1031 = vsel %vm776, %v1029, %v1030
      %v1032 = vrot.slane %v579, 1
      %v1033 = vrot.slane %v580, 1
      %v1034 = vsel %vm776, %v1032, %v1033
      %v1035 = vrot.slane %v581, 1
      %v1036 = vrot.slane %v582, 1
      %v1037 = vsel %vm776, %v1035, %v1036
      %v1038 = vrot.slane %v583, 1
      %v1039 = vrot.slane %v584, 1
      %v1040 = vsel %vm776, %v1038, %v1039
      %v1041 = vrot.slane %v585, 1
      %v1042 = vrot.slane %v586, 1
      %v1043 = vsel %vm776, %v1041, %v1042
      %v1044 = vrot.slane %v587, 1
      %v1045 = vrot.slane %v588, 1
      %v1046 = vsel %vm776, %v1044, %v1045
      %v1047 = vrot.slane %v589, 1
      %v1048 = vrot.slane %v590, 1
      %v1049 = vsel %vm776, %v1047, %v1048
      %v1050 = vrot.slane %v591, 1
      %v1051 = vrot.slane %v592, 1
      %v1052 = vsel %vm776, %v1050, %v1051
      %v1053 = vsel %vm611, %v1031, 0
      %v1055 = vsel %vm611, %v1034, 0
      %v1057 = vsel %vm611, %v1037, 0
      %v1059 = vsel %vm611, %v1040, 0
      %v1061 = vsel %vm611, %v1043, 0
      %v1063 = vsel %vm611, %v1046, 0
      %v1065 = vsel %vm611, %v1049, 0
      %v1067 = vsel %vm611, %v1052, 0
      %v1070 = vsel %vm636, %v606, 0
      %1072 = vmatpush.msra.mxu0 0.0
      %1073 = vmatpush.msra.mxu0 0.0
      %1074 = vmatpush.msra.mxu0 0.0
      %1075 = vmatpush.msra.mxu0 0.0
      %1076 = vmatpush.msra.mxu0 0.0
      %1077 = vmatpush.msra.mxu0 0.0
      %1078 = vmatpush.msra.mxu0 0.0
      %1079 = vmatpush.msra.mxu0 0.0
      %1080 = vmatpush.msra.mxu0 0.0
      %1081 = vmatpush.msra.mxu0 0.0
      %1082 = vmatpush.msra.mxu0 0.0
      %1083 = vmatpush.msra.mxu0 0.0
      %1084 = vmatpush.msra.mxu0 0.0
      %1085 = vmatpush.msra.mxu0 0.0
      %1086 = vmatpush.msra.mxu0 0.0
      %1087 = vmatpush.msra.mxu0 %v1070
      %1088 = vmatmul.f32.gmra.mxu0 %v1053
      %v1089 = vpop.f32.mrf.mxu0
      %v1090 = vadd.f32 0.0, %v1089
      %1091 = vmatmul.f32.gmra.mxu0 %v1055
      %v1092 = vpop.f32.mrf.mxu0
      %v1093 = vadd.f32 0.0, %v1092
      %1094 = vmatmul.f32.gmra.mxu0 %v1057
      %v1095 = vpop.f32.mrf.mxu0
      %v1096 = vadd.f32 0.0, %v1095
      %1097 = vmatmul.f32.gmra.mxu0 %v1059
      %v1098 = vpop.f32.mrf.mxu0
      %v1099 = vadd.f32 0.0, %v1098
      %1100 = vmatmul.f32.gmra.mxu0 %v1061
      %v1101 = vpop.f32.mrf.mxu0
      %v1102 = vadd.f32 0.0, %v1101
      %1103 = vmatmul.f32.gmra.mxu0 %v1063
      %v1104 = vpop.f32.mrf.mxu0
      %v1105 = vadd.f32 0.0, %v1104
      %1106 = vmatmul.f32.gmra.mxu0 %v1065
      %v1107 = vpop.f32.mrf.mxu0
      %v1108 = vadd.f32 0.0, %v1107
      %1109 = vmatmul.f32.gmra.mxu0 %v1067
      %v1110 = vpop.f32.mrf.mxu0
      %v1111 = vadd.f32 0.0, %v1110
      %1112 = vdwg.mxu0
      %v1113 = vadd.f32 %v1013, %v1090
      %v1114 = vadd.f32 %v1014, %v1093
      %v1115 = vadd.f32 %v1015, %v1096
      %v1116 = vadd.f32 %v1016, %v1099
      %v1117 = vadd.f32 %v1017, %v1102
      %v1118 = vadd.f32 %v1018, %v1105
      %v1119 = vadd.f32 %v1019, %v1108
      %v1120 = vadd.f32 %v1020, %v1111
      %v1122 = vsel %vm611, %v566, 0
      %v1125 = vsel %vm636, %v607, 0
      %1127 = vmatpush.msra.mxu0 0.0
      %1128 = vmatpush.msra.mxu0 0.0
      %1129 = vmatpush.msra.mxu0 0.0
      %1130 = vmatpush.msra.mxu0 0.0
      %1131 = vmatpush.msra.mxu0 0.0
      %1132 = vmatpush.msra.mxu0 0.0
      %1133 = vmatpush.msra.mxu0 0.0
      %1134 = vmatpush.msra.mxu0 0.0
      %1135 = vmatpush.msra.mxu0 0.0
      %1136 = vmatpush.msra.mxu0 0.0
      %1137 = vmatpush.msra.mxu0 0.0
      %1138 = vmatpush.msra.mxu0 0.0
      %1139 = vmatpush.msra.mxu0 0.0
      %1140 = vmatpush.msra.mxu0 0.0
      %1141 = vmatpush.msra.mxu0 0.0
      %1142 = vmatpush.msra.mxu0 %v1125
      %1143 = vmatmul.f32.gmra.mxu0 %v616
      %v1144 = vpop.f32.mrf.mxu0
      %v1145 = vadd.f32 0.0, %v1144
      %1146 = vmatmul.f32.gmra.mxu0 %v619
      %v1147 = vpop.f32.mrf.mxu0
      %v1148 = vadd.f32 0.0, %v1147
      %1149 = vmatmul.f32.gmra.mxu0 %v622
      %v1150 = vpop.f32.mrf.mxu0
      %v1151 = vadd.f32 0.0, %v1150
      %1152 = vmatmul.f32.gmra.mxu0 %v625
      %v1153 = vpop.f32.mrf.mxu0
      %v1154 = vadd.f32 0.0, %v1153
      %1155 = vmatmul.f32.gmra.mxu0 %v628
      %v1156 = vpop.f32.mrf.mxu0
      %v1157 = vadd.f32 0.0, %v1156
      %1158 = vmatmul.f32.gmra.mxu0 %v631
      %v1159 = vpop.f32.mrf.mxu0
      %v1160 = vadd.f32 0.0, %v1159
      %1161 = vmatmul.f32.gmra.mxu0 %v634
      %v1162 = vpop.f32.mrf.mxu0
      %v1163 = vadd.f32 0.0, %v1162
      %1164 = vmatmul.f32.gmra.mxu0 %v1122
      %v1165 = vpop.f32.mrf.mxu0
      %v1166 = vadd.f32 0.0, %v1165
      %1167 = vdwg.mxu0
      %v1168 = vadd.f32 %v1113, %v1145
      %v1169 = vadd.f32 %v1114, %v1148
      %v1170 = vadd.f32 %v1115, %v1151
      %v1171 = vadd.f32 %v1116, %v1154
      %v1172 = vadd.f32 %v1117, %v1157
      %v1173 = vadd.f32 %v1118, %v1160
      %v1174 = vadd.f32 %v1119, %v1163
      %v1175 = vadd.f32 %v1120, %v1166
      %v1177 = vsel %vm611, %v576, 0
      %v1180 = vsel %vm636, %v608, 0
      %1182 = vmatpush.msra.mxu0 0.0
      %1183 = vmatpush.msra.mxu0 0.0
      %1184 = vmatpush.msra.mxu0 0.0
      %1185 = vmatpush.msra.mxu0 0.0
      %1186 = vmatpush.msra.mxu0 0.0
      %1187 = vmatpush.msra.mxu0 0.0
      %1188 = vmatpush.msra.mxu0 0.0
      %1189 = vmatpush.msra.mxu0 0.0
      %1190 = vmatpush.msra.mxu0 0.0
      %1191 = vmatpush.msra.mxu0 0.0
      %1192 = vmatpush.msra.mxu0 0.0
      %1193 = vmatpush.msra.mxu0 0.0
      %1194 = vmatpush.msra.mxu0 0.0
      %1195 = vmatpush.msra.mxu0 0.0
      %1196 = vmatpush.msra.mxu0 0.0
      %1197 = vmatpush.msra.mxu0 %v1180
      %1198 = vmatmul.f32.gmra.mxu0 %v696
      %v1199 = vpop.f32.mrf.mxu0
      %v1200 = vadd.f32 0.0, %v1199
      %1201 = vmatmul.f32.gmra.mxu0 %v699
      %v1202 = vpop.f32.mrf.mxu0
      %v1203 = vadd.f32 0.0, %v1202
      %1204 = vmatmul.f32.gmra.mxu0 %v702
      %v1205 = vpop.f32.mrf.mxu0
      %v1206 = vadd.f32 0.0, %v1205
      %1207 = vmatmul.f32.gmra.mxu0 %v705
      %v1208 = vpop.f32.mrf.mxu0
      %v1209 = vadd.f32 0.0, %v1208
      %1210 = vmatmul.f32.gmra.mxu0 %v708
      %v1211 = vpop.f32.mrf.mxu0
      %v1212 = vadd.f32 0.0, %v1211
      %1213 = vmatmul.f32.gmra.mxu0 %v711
      %v1214 = vpop.f32.mrf.mxu0
      %v1215 = vadd.f32 0.0, %v1214
      %1216 = vmatmul.f32.gmra.mxu0 %v714
      %v1217 = vpop.f32.mrf.mxu0
      %v1218 = vadd.f32 0.0, %v1217
      %1219 = vmatmul.f32.gmra.mxu0 %v1177
      %v1220 = vpop.f32.mrf.mxu0
      %v1221 = vadd.f32 0.0, %v1220
      %1222 = vdwg.mxu0
      %v1223 = vadd.f32 %v1168, %v1200
      %v1224 = vadd.f32 %v1169, %v1203
      %v1225 = vadd.f32 %v1170, %v1206
      %v1226 = vadd.f32 %v1171, %v1209
      %v1227 = vadd.f32 %v1172, %v1212
      %v1228 = vadd.f32 %v1173, %v1215
      %v1229 = vadd.f32 %v1174, %v1218
      %v1230 = vadd.f32 %v1175, %v1221
      %v1232 = vrot.slane %v566, 1
      %v1233 = vrot.slane %v567, 1
      %v1234 = vsel %vm776, %v1232, %v1233
      %v1235 = vsel %vm611, %v1234, 0
      %v1238 = vsel %vm636, %v609, 0
      %1240 = vmatpush.msra.mxu0 0.0
      %1241 = vmatpush.msra.mxu0 0.0
      %1242 = vmatpush.msra.mxu0 0.0
      %1243 = vmatpush.msra.mxu0 0.0
      %1244 = vmatpush.msra.mxu0 0.0
      %1245 = vmatpush.msra.mxu0 0.0
      %1246 = vmatpush.msra.mxu0 0.0
      %1247 = vmatpush.msra.mxu0 0.0
      %1248 = vmatpush.msra.mxu0 0.0
      %1249 = vmatpush.msra.mxu0 0.0
      %1250 = vmatpush.msra.mxu0 0.0
      %1251 = vmatpush.msra.mxu0 0.0
      %1252 = vmatpush.msra.mxu0 0.0
      %1253 = vmatpush.msra.mxu0 0.0
      %1254 = vmatpush.msra.mxu0 0.0
      %1255 = vmatpush.msra.mxu0 %v1238
      %1256 = vmatmul.f32.gmra.mxu0 %v803
      %v1257 = vpop.f32.mrf.mxu0
      %v1258 = vadd.f32 0.0, %v1257
      %1259 = vmatmul.f32.gmra.mxu0 %v805
      %v1260 = vpop.f32.mrf.mxu0
      %v1261 = vadd.f32 0.0, %v1260
      %1262 = vmatmul.f32.gmra.mxu0 %v807
      %v1263 = vpop.f32.mrf.mxu0
      %v1264 = vadd.f32 0.0, %v1263
      %1265 = vmatmul.f32.gmra.mxu0 %v809
      %v1266 = vpop.f32.mrf.mxu0
      %v1267 = vadd.f32 0.0, %v1266
      %1268 = vmatmul.f32.gmra.mxu0 %v811
      %v1269 = vpop.f32.mrf.mxu0
      %v1270 = vadd.f32 0.0, %v1269
      %1271 = vmatmul.f32.gmra.mxu0 %v813
      %v1272 = vpop.f32.mrf.mxu0
      %v1273 = vadd.f32 0.0, %v1272
      %1274 = vmatmul.f32.gmra.mxu0 %v815
      %v1275 = vpop.f32.mrf.mxu0
      %v1276 = vadd.f32 0.0, %v1275
      %1277 = vmatmul.f32.gmra.mxu0 %v1235
      %v1278 = vpop.f32.mrf.mxu0
      %v1279 = vadd.f32 0.0, %v1278
      %1280 = vdwg.mxu0
      %v1281 = vadd.f32 %v1223, %v1258
      %v1282 = vadd.f32 %v1224, %v1261
      %v1283 = vadd.f32 %v1225, %v1264
      %v1284 = vadd.f32 %v1226, %v1267
      %v1285 = vadd.f32 %v1227, %v1270
      %v1286 = vadd.f32 %v1228, %v1273
      %v1287 = vadd.f32 %v1229, %v1276
      %v1288 = vadd.f32 %v1230, %v1279
      %v1289 = vxor.u32 %v1281, 2147483648
      %v1290 = vxor.u32 %v1282, 2147483648
      %v1291 = vxor.u32 %v1283, 2147483648
      %v1292 = vxor.u32 %v1284, 2147483648
      %v1293 = vxor.u32 %v1285, 2147483648
      %v1294 = vxor.u32 %v1286, 2147483648
      %v1295 = vxor.u32 %v1287, 2147483648
      %v1296 = vxor.u32 %v1288, 2147483648
      %v1297 = vmul.f32 %v1289, 1.442695
      %v1298 = vpow.pop %v1297
      %v1299 = vmul.f32 %v1290, 1.442695
      %v1300 = vpow.pop %v1299
      %v1301 = vmul.f32 %v1291, 1.442695
      %v1302 = vpow.pop %v1301
      %v1303 = vmul.f32 %v1292, 1.442695
      %v1304 = vpow.pop %v1303
      %v1305 = vmul.f32 %v1293, 1.442695
      %v1306 = vpow.pop %v1305
      %v1307 = vmul.f32 %v1294, 1.442695
      %v1308 = vpow.pop %v1307
      %v1309 = vmul.f32 %v1295, 1.442695
      %v1310 = vpow.pop %v1309
      %v1311 = vmul.f32 %v1296, 1.442695
      %v1312 = vpow.pop %v1311
      %v1313 = vadd.f32 %v1298, 1.0
      %v1314 = vadd.f32 %v1300, 1.0
      %v1315 = vadd.f32 %v1302, 1.0
      %v1316 = vadd.f32 %v1304, 1.0
      %v1317 = vadd.f32 %v1306, 1.0
      %v1318 = vadd.f32 %v1308, 1.0
      %v1319 = vadd.f32 %v1310, 1.0
      %v1320 = vadd.f32 %v1312, 1.0
      %v1321 = vrcp.pop %v1313
      %v1322 = vmul.f32 %v1313, %v1321
      %v1323 = vsub.f32 1.0, %v1322
      %v1324 = vmul.f32 %v1321, %v1323
      %v1325 = vadd.f32 %v1321, %v1324
      %vm1326 = vweird.f32 %v1313
      %vm1327 = vweird.f32 %v1321
      %vm1328 = vmor %vm1326, %vm1327
      %v1329 = vsel %vm1328, %v1321, %v1325
      %v1330 = vand.u32 2147483647, %v1313
      %vm1331 = vcmp.eq.f32.partialorder %v1330, 8.507059e+37
      %v1332 = vand.u32 %v1313, 2147483648
      %v1333 = vor.u32 1.1754944e-38, %v1332
      %v1334 = vsel %vm1331, %v1333, %v1329
      %v1335 = vmul.f32 1.0, %v1334
      %v1336 = vrcp.pop %v1314
      %v1337 = vmul.f32 %v1314, %v1336
      %v1338 = vsub.f32 1.0, %v1337
      %v1339 = vmul.f32 %v1336, %v1338
      %v1340 = vadd.f32 %v1336, %v1339
      %vm1341 = vweird.f32 %v1314
      %vm1342 = vweird.f32 %v1336
      %vm1343 = vmor %vm1341, %vm1342
      %v1344 = vsel %vm1343, %v1336, %v1340
      %v1345 = vand.u32 2147483647, %v1314
      %vm1346 = vcmp.eq.f32.partialorder %v1345, 8.507059e+37
      %v1347 = vand.u32 %v1314, 2147483648
      %v1348 = vor.u32 1.1754944e-38, %v1347
      %v1349 = vsel %vm1346, %v1348, %v1344
      %v1350 = vmul.f32 1.0, %v1349
      %v1351 = vrcp.pop %v1315
      %v1352 = vmul.f32 %v1315, %v1351
      %v1353 = vsub.f32 1.0, %v1352
      %v1354 = vmul.f32 %v1351, %v1353
      %v1355 = vadd.f32 %v1351, %v1354
      %vm1356 = vweird.f32 %v1315
      %vm1357 = vweird.f32 %v1351
      %vm1358 = vmor %vm1356, %vm1357
      %v1359 = vsel %vm1358, %v1351, %v1355
      %v1360 = vand.u32 2147483647, %v1315
      %vm1361 = vcmp.eq.f32.partialorder %v1360, 8.507059e+37
      %v1362 = vand.u32 %v1315, 2147483648
      %v1363 = vor.u32 1.1754944e-38, %v1362
      %v1364 = vsel %vm1361, %v1363, %v1359
      %v1365 = vmul.f32 1.0, %v1364
      %v1366 = vrcp.pop %v1316
      %v1367 = vmul.f32 %v1316, %v1366
      %v1368 = vsub.f32 1.0, %v1367
      %v1369 = vmul.f32 %v1366, %v1368
      %v1370 = vadd.f32 %v1366, %v1369
      %vm1371 = vweird.f32 %v1316
      %vm1372 = vweird.f32 %v1366
      %vm1373 = vmor %vm1371, %vm1372
      %v1374 = vsel %vm1373, %v1366, %v1370
      %v1375 = vand.u32 2147483647, %v1316
      %vm1376 = vcmp.eq.f32.partialorder %v1375, 8.507059e+37
      %v1377 = vand.u32 %v1316, 2147483648
      %v1378 = vor.u32 1.1754944e-38, %v1377
      %v1379 = vsel %vm1376, %v1378, %v1374
      %v1380 = vmul.f32 1.0, %v1379
      %v1381 = vrcp.pop %v1317
      %v1382 = vmul.f32 %v1317, %v1381
      %v1383 = vsub.f32 1.0, %v1382
      %v1384 = vmul.f32 %v1381, %v1383
      %v1385 = vadd.f32 %v1381, %v1384
      %vm1386 = vweird.f32 %v1317
      %vm1387 = vweird.f32 %v1381
      %vm1388 = vmor %vm1386, %vm1387
      %v1389 = vsel %vm1388, %v1381, %v1385
      %v1390 = vand.u32 2147483647, %v1317
      %vm1391 = vcmp.eq.f32.partialorder %v1390, 8.507059e+37
      %v1392 = vand.u32 %v1317, 2147483648
      %v1393 = vor.u32 1.1754944e-38, %v1392
      %v1394 = vsel %vm1391, %v1393, %v1389
      %v1395 = vmul.f32 1.0, %v1394
      %v1396 = vrcp.pop %v1318
      %v1397 = vmul.f32 %v1318, %v1396
      %v1398 = vsub.f32 1.0, %v1397
      %v1399 = vmul.f32 %v1396, %v1398
      %v1400 = vadd.f32 %v1396, %v1399
      %vm1401 = vweird.f32 %v1318
      %vm1402 = vweird.f32 %v1396
      %vm1403 = vmor %vm1401, %vm1402
      %v1404 = vsel %vm1403, %v1396, %v1400
      %v1405 = vand.u32 2147483647, %v1318
      %vm1406 = vcmp.eq.f32.partialorder %v1405, 8.507059e+37
      %v1407 = vand.u32 %v1318, 2147483648
      %v1408 = vor.u32 1.1754944e-38, %v1407
      %v1409 = vsel %vm1406, %v1408, %v1404
      %v1410 = vmul.f32 1.0, %v1409
      %v1411 = vrcp.pop %v1319
      %v1412 = vmul.f32 %v1319, %v1411
      %v1413 = vsub.f32 1.0, %v1412
      %v1414 = vmul.f32 %v1411, %v1413
      %v1415 = vadd.f32 %v1411, %v1414
      %vm1416 = vweird.f32 %v1319
      %vm1417 = vweird.f32 %v1411
      %vm1418 = vmor %vm1416, %vm1417
      %v1419 = vsel %vm1418, %v1411, %v1415
      %v1420 = vand.u32 2147483647, %v1319
      %vm1421 = vcmp.eq.f32.partialorder %v1420, 8.507059e+37
      %v1422 = vand.u32 %v1319, 2147483648
      %v1423 = vor.u32 1.1754944e-38, %v1422
      %v1424 = vsel %vm1421, %v1423, %v1419
      %v1425 = vmul.f32 1.0, %v1424
      %v1426 = vrcp.pop %v1320
      %v1427 = vmul.f32 %v1320, %v1426
      %v1428 = vsub.f32 1.0, %v1427
      %v1429 = vmul.f32 %v1426, %v1428
      %v1430 = vadd.f32 %v1426, %v1429
      %vm1431 = vweird.f32 %v1320
      %vm1432 = vweird.f32 %v1426
      %vm1433 = vmor %vm1431, %vm1432
      %v1434 = vsel %vm1433, %v1426, %v1430
      %v1435 = vand.u32 2147483647, %v1320
      %vm1436 = vcmp.eq.f32.partialorder %v1435, 8.507059e+37
      %v1437 = vand.u32 %v1320, 2147483648
      %v1438 = vor.u32 1.1754944e-38, %v1437
      %v1439 = vsel %vm1436, %v1438, %v1434
      %v1440 = vmul.f32 1.0, %v1439
      %v1441 = vmul.f32 %v1281, %v1335
      %v1442 = vmul.f32 %v1282, %v1350
      %v1443 = vmul.f32 %v1283, %v1365
      %v1444 = vmul.f32 %v1284, %v1380
      %v1445 = vmul.f32 %v1285, %v1395
      %v1446 = vmul.f32 %v1286, %v1410
      %v1447 = vmul.f32 %v1287, %v1425
      %v1448 = vmul.f32 %v1288, %v1440
      %v1449 = vpack.c.bf16 %v1442, %v1441
      %v1450 = vpack.c.bf16 %v1444, %v1443
      %v1451 = vpack.c.bf16 %v1446, %v1445
      %v1452 = vpack.c.bf16 %v1448, %v1447
      %v1453 = vld [vmem:[%s3] sm:$0xf]
      %v1454 = vld [vmem:[%s3 + $0x4] sm:$0xf]
      %v1455 = vld [vmem:[%s3 + $0x8] sm:$0xf]
      %v1456 = vld [vmem:[%s3 + $0xc] sm:$0xf]
      %v1457 = vld [vmem:[%s3 + $0x10] sm:$0xf]
      %v1458 = vld [vmem:[%s3 + $0x14] sm:$0xf]
      %v1459 = vld [vmem:[%s3 + $0x18] sm:$0xf]
      %v1460 = vld [vmem:[%s3 + $0x1c] sm:$0xf]
      %v1461 = vld [vmem:[%s3 + $0x20] sm:$0xf]
      %v1462 = vld [vmem:[%s3 + $0x24] sm:$0xf]
      %v1463 = vld [vmem:[%s3 + $0x28] sm:$0xf]
      %v1464 = vld [vmem:[%s3 + $0x2c] sm:$0xf]
      %v1465 = vld [vmem:[%s3 + $0x30] sm:$0xf]
      %v1466 = vld [vmem:[%s3 + $0x34] sm:$0xf]
      %v1467 = vld [vmem:[%s3 + $0x38] sm:$0xf]
      %v1468 = vld [vmem:[%s3 + $0x3c] sm:$0xf]
      %v1469 = vld [vmem:[%s4] sm:$0x1]
      %v1471 = vperm.slane %v1469, 0
      %v1489 = vunpack.c.l.b16 %v1453
      %v1490 = vunpack.c.l.b16 %v1454
      %v1491 = vunpack.c.l.b16 %v1455
      %v1492 = vunpack.c.l.b16 %v1456
      %v1493 = vunpack.c.l.b16 %v1457
      %v1494 = vunpack.c.l.b16 %v1458
      %v1495 = vunpack.c.l.b16 %v1459
      %v1496 = vunpack.c.l.b16 %v1460
      %v1497 = vunpack.c.l.b16 %v1461
      %v1498 = vunpack.c.l.b16 %v1462
      %v1499 = vunpack.c.l.b16 %v1463
      %v1500 = vunpack.c.l.b16 %v1464
      %v1501 = vunpack.c.l.b16 %v1465
      %v1502 = vunpack.c.l.b16 %v1466
      %v1503 = vunpack.c.l.b16 %v1467
      %v1504 = vunpack.c.l.b16 %v1468
      %v1505 = vpack.c.b16 %v1490, %v1489
      %v1506 = vpack.c.b16 %v1492, %v1491
      %v1507 = vpack.c.b16 %v1494, %v1493
      %v1508 = vpack.c.b16 %v1496, %v1495
      %v1509 = vpack.c.b16 %v1498, %v1497
      %v1510 = vpack.c.b16 %v1500, %v1499
      %v1511 = vpack.c.b16 %v1502, %v1501
      %v1512 = vpack.c.b16 %v1504, %v1503
      %1521 = vmatpush.bf16.msra.mxu0 %v1512
      %1522 = vmatpush.bf16.msra.mxu0 %v1511
      %1523 = vmatpush.bf16.msra.mxu0 %v1510
      %1524 = vmatpush.bf16.msra.mxu0 %v1509
      %1525 = vmatpush.bf16.msra.mxu0 %v1508
      %1526 = vmatpush.bf16.msra.mxu0 %v1507
      %1527 = vmatpush.bf16.msra.mxu0 %v1506
      %1528 = vmatpush.bf16.msra.mxu0 %v1505
      %1529 = vmatmul.bf16.gmra.mxu0 %v1449
      %v1530 = vpop.f32.mrf.mxu0
      %v1531 = vadd.f32 %v1471, %v1530
      %v1532 = vpop.f32.mrf.mxu0
      %v1533 = vadd.f32 %v1471, %v1532
      %1534 = vmatmul.bf16.gmra.mxu0 %v1450
      %v1535 = vpop.f32.mrf.mxu0
      %v1536 = vadd.f32 %v1471, %v1535
      %v1537 = vpop.f32.mrf.mxu0
      %v1538 = vadd.f32 %v1471, %v1537
      %1539 = vmatmul.bf16.gmra.mxu0 %v1451
      %v1540 = vpop.f32.mrf.mxu0
      %v1541 = vadd.f32 %v1471, %v1540
      %v1542 = vpop.f32.mrf.mxu0
      %v1543 = vadd.f32 %v1471, %v1542
      %1544 = vmatmul.bf16.gmra.mxu0 %v1452
      %v1545 = vpop.f32.mrf.mxu0
      %v1546 = vadd.f32 %v1471, %v1545
      %v1547 = vpop.f32.mrf.mxu0
      %v1548 = vadd.f32 %v1471, %v1547
      %1549 = vdwg.mxu0
      %v1550 = vxor.u32 %v1531, 2147483648
      %v1551 = vxor.u32 %v1533, 2147483648
      %v1552 = vxor.u32 %v1536, 2147483648
      %v1553 = vxor.u32 %v1538, 2147483648
      %v1554 = vxor.u32 %v1541, 2147483648
      %v1555 = vxor.u32 %v1543, 2147483648
      %v1556 = vxor.u32 %v1546, 2147483648
      %v1557 = vxor.u32 %v1548, 2147483648
      %v1558 = vmul.f32 %v1550, 1.442695
      %v1559 = vpow.pop %v1558
      %v1560 = vmul.f32 %v1551, 1.442695
      %v1561 = vpow.pop %v1560
      %v1562 = vmul.f32 %v1552, 1.442695
      %v1563 = vpow.pop %v1562
      %v1564 = vmul.f32 %v1553, 1.442695
      %v1565 = vpow.pop %v1564
      %v1566 = vmul.f32 %v1554, 1.442695
      %v1567 = vpow.pop %v1566
      %v1568 = vmul.f32 %v1555, 1.442695
      %v1569 = vpow.pop %v1568
      %v1570 = vmul.f32 %v1556, 1.442695
      %v1571 = vpow.pop %v1570
      %v1572 = vmul.f32 %v1557, 1.442695
      %v1573 = vpow.pop %v1572
      %v1574 = vadd.f32 %v1559, 1.0
      %v1575 = vadd.f32 %v1561, 1.0
      %v1576 = vadd.f32 %v1563, 1.0
      %v1577 = vadd.f32 %v1565, 1.0
      %v1578 = vadd.f32 %v1567, 1.0
      %v1579 = vadd.f32 %v1569, 1.0
      %v1580 = vadd.f32 %v1571, 1.0
      %v1581 = vadd.f32 %v1573, 1.0
      %v1582 = vrcp.pop %v1574
      %v1583 = vmul.f32 %v1574, %v1582
      %v1584 = vsub.f32 1.0, %v1583
      %v1585 = vmul.f32 %v1582, %v1584
      %v1586 = vadd.f32 %v1582, %v1585
      %vm1587 = vweird.f32 %v1574
      %vm1588 = vweird.f32 %v1582
      %vm1589 = vmor %vm1587, %vm1588
      %v1590 = vsel %vm1589, %v1582, %v1586
      %v1591 = vand.u32 2147483647, %v1574
      %vm1592 = vcmp.eq.f32.partialorder %v1591, 8.507059e+37
      %v1593 = vand.u32 %v1574, 2147483648
      %v1594 = vor.u32 1.1754944e-38, %v1593
      %v1595 = vsel %vm1592, %v1594, %v1590
      %v1596 = vmul.f32 1.0, %v1595
      %v1597 = vrcp.pop %v1575
      %v1598 = vmul.f32 %v1575, %v1597
      %v1599 = vsub.f32 1.0, %v1598
      %v1600 = vmul.f32 %v1597, %v1599
      %v1601 = vadd.f32 %v1597, %v1600
      %vm1602 = vweird.f32 %v1575
      %vm1603 = vweird.f32 %v1597
      %vm1604 = vmor %vm1602, %vm1603
      %v1605 = vsel %vm1604, %v1597, %v1601
      %v1606 = vand.u32 2147483647, %v1575
      %vm1607 = vcmp.eq.f32.partialorder %v1606, 8.507059e+37
      %v1608 = vand.u32 %v1575, 2147483648
      %v1609 = vor.u32 1.1754944e-38, %v1608
      %v1610 = vsel %vm1607, %v1609, %v1605
      %v1611 = vmul.f32 1.0, %v1610
      %v1612 = vrcp.pop %v1576
      %v1613 = vmul.f32 %v1576, %v1612
      %v1614 = vsub.f32 1.0, %v1613
      %v1615 = vmul.f32 %v1612, %v1614
      %v1616 = vadd.f32 %v1612, %v1615
      %vm1617 = vweird.f32 %v1576
      %vm1618 = vweird.f32 %v1612
      %vm1619 = vmor %vm1617, %vm1618
      %v1620 = vsel %vm1619, %v1612, %v1616
      %v1621 = vand.u32 2147483647, %v1576
      %vm1622 = vcmp.eq.f32.partialorder %v1621, 8.507059e+37
      %v1623 = vand.u32 %v1576, 2147483648
      %v1624 = vor.u32 1.1754944e-38, %v1623
      %v1625 = vsel %vm1622, %v1624, %v1620
      %v1626 = vmul.f32 1.0, %v1625
      %v1627 = vrcp.pop %v1577
      %v1628 = vmul.f32 %v1577, %v1627
      %v1629 = vsub.f32 1.0, %v1628
      %v1630 = vmul.f32 %v1627, %v1629
      %v1631 = vadd.f32 %v1627, %v1630
      %vm1632 = vweird.f32 %v1577
      %vm1633 = vweird.f32 %v1627
      %vm1634 = vmor %vm1632, %vm1633
      %v1635 = vsel %vm1634, %v1627, %v1631
      %v1636 = vand.u32 2147483647, %v1577
      %vm1637 = vcmp.eq.f32.partialorder %v1636, 8.507059e+37
      %v1638 = vand.u32 %v1577, 2147483648
      %v1639 = vor.u32 1.1754944e-38, %v1638
      %v1640 = vsel %vm1637, %v1639, %v1635
      %v1641 = vmul.f32 1.0, %v1640
      %v1642 = vrcp.pop %v1578
      %v1643 = vmul.f32 %v1578, %v1642
      %v1644 = vsub.f32 1.0, %v1643
      %v1645 = vmul.f32 %v1642, %v1644
      %v1646 = vadd.f32 %v1642, %v1645
      %vm1647 = vweird.f32 %v1578
      %vm1648 = vweird.f32 %v1642
      %vm1649 = vmor %vm1647, %vm1648
      %v1650 = vsel %vm1649, %v1642, %v1646
      %v1651 = vand.u32 2147483647, %v1578
      %vm1652 = vcmp.eq.f32.partialorder %v1651, 8.507059e+37
      %v1653 = vand.u32 %v1578, 2147483648
      %v1654 = vor.u32 1.1754944e-38, %v1653
      %v1655 = vsel %vm1652, %v1654, %v1650
      %v1656 = vmul.f32 1.0, %v1655
      %v1657 = vrcp.pop %v1579
      %v1658 = vmul.f32 %v1579, %v1657
      %v1659 = vsub.f32 1.0, %v1658
      %v1660 = vmul.f32 %v1657, %v1659
      %v1661 = vadd.f32 %v1657, %v1660
      %vm1662 = vweird.f32 %v1579
      %vm1663 = vweird.f32 %v1657
      %vm1664 = vmor %vm1662, %vm1663
      %v1665 = vsel %vm1664, %v1657, %v1661
      %v1666 = vand.u32 2147483647, %v1579
      %vm1667 = vcmp.eq.f32.partialorder %v1666, 8.507059e+37
      %v1668 = vand.u32 %v1579, 2147483648
      %v1669 = vor.u32 1.1754944e-38, %v1668
      %v1670 = vsel %vm1667, %v1669, %v1665
      %v1671 = vmul.f32 1.0, %v1670
      %v1672 = vrcp.pop %v1580
      %v1673 = vmul.f32 %v1580, %v1672
      %v1674 = vsub.f32 1.0, %v1673
      %v1675 = vmul.f32 %v1672, %v1674
      %v1676 = vadd.f32 %v1672, %v1675
      %vm1677 = vweird.f32 %v1580
      %vm1678 = vweird.f32 %v1672
      %vm1679 = vmor %vm1677, %vm1678
      %v1680 = vsel %vm1679, %v1672, %v1676
      %v1681 = vand.u32 2147483647, %v1580
      %vm1682 = vcmp.eq.f32.partialorder %v1681, 8.507059e+37
      %v1683 = vand.u32 %v1580, 2147483648
      %v1684 = vor.u32 1.1754944e-38, %v1683
      %v1685 = vsel %vm1682, %v1684, %v1680
      %v1686 = vmul.f32 1.0, %v1685
      %v1687 = vrcp.pop %v1581
      %v1688 = vmul.f32 %v1581, %v1687
      %v1689 = vsub.f32 1.0, %v1688
      %v1690 = vmul.f32 %v1687, %v1689
      %v1691 = vadd.f32 %v1687, %v1690
      %vm1692 = vweird.f32 %v1581
      %vm1693 = vweird.f32 %v1687
      %vm1694 = vmor %vm1692, %vm1693
      %v1695 = vsel %vm1694, %v1687, %v1691
      %v1696 = vand.u32 2147483647, %v1581
      %vm1697 = vcmp.eq.f32.partialorder %v1696, 8.507059e+37
      %v1698 = vand.u32 %v1581, 2147483648
      %v1699 = vor.u32 1.1754944e-38, %v1698
      %v1700 = vsel %vm1697, %v1699, %v1695
      %v1701 = vmul.f32 1.0, %v1700
      %v1702 = vmul.f32 %v1531, %v1596
      %v1703 = vmul.f32 %v1533, %v1611
      %v1704 = vmul.f32 %v1536, %v1626
      %v1705 = vmul.f32 %v1538, %v1641
      %v1706 = vmul.f32 %v1541, %v1656
      %v1707 = vmul.f32 %v1543, %v1671
      %v1708 = vmul.f32 %v1546, %v1686
      %v1709 = vmul.f32 %v1548, %v1701
      %1710 = vst [vmem:[#allocation2] sm:$0xff] 0.0
      %1711 = vst [vmem:[#allocation2 + $0x8] sm:$0x3] 0.0
      %1712 = vst [vmem:[#allocation2 + $0x10] sm:$0xff] 0.0
      %1713 = vst [vmem:[#allocation2 + $0x18] sm:$0x3] 0.0
      %1714 = vst [vmem:[#allocation2 + $0x20] sm:$0xff] 0.0
      %1715 = vst [vmem:[#allocation2 + $0x28] sm:$0x3] 0.0
      %1716 = vst [vmem:[#allocation2 + $0x30] sm:$0xff] 0.0
      %1717 = vst [vmem:[#allocation2 + $0x38] sm:$0x3] 0.0
      %1718 = vst [vmem:[#allocation2 + $0x40] sm:$0xff] 0.0
      %1719 = vst [vmem:[#allocation2 + $0x48] sm:$0x3] 0.0
      %1720 = vst [vmem:[#allocation2 + $0x50] sm:$0xff] 0.0
      %1721 = vst [vmem:[#allocation2 + $0x58] sm:$0x3] 0.0
      %1722 = vst [vmem:[#allocation2 + $0x60] sm:$0xff] 0.0
      %1723 = vst [vmem:[#allocation2 + $0x68] sm:$0x3] 0.0
      %1724 = vst [vmem:[#allocation2 + $0x70] sm:$0xff] 0.0
      %1725 = vst [vmem:[#allocation2 + $0x78] sm:$0x3] 0.0
      %1726 = vst [vmem:[#allocation2 + $0x80] sm:$0xff] 0.0
      %1727 = vst [vmem:[#allocation2 + $0x88] sm:$0x3] 0.0
      %1728 = vst [vmem:[#allocation2 + $0x90] sm:$0xff] 0.0
      %1729 = vst [vmem:[#allocation2 + $0x98] sm:$0x3] 0.0
      %s1730 = scalar_lea.vmem [#allocation2], 16
      %1731 = vst [vmem:[%s1730 + $0x1] sm:$0xff] %v1702
      %1732 = vst [vmem:[%s1730 + $0x11] sm:$0xff] %v1703
      %1733 = vst [vmem:[%s1730 + $0x21] sm:$0xff] %v1704
      %1734 = vst [vmem:[%s1730 + $0x31] sm:$0xff] %v1705
      %1735 = vst [vmem:[%s1730 + $0x41] sm:$0xff] %v1706
      %1736 = vst [vmem:[%s1730 + $0x51] sm:$0xff] %v1707
      %1737 = vst [vmem:[%s1730 + $0x61] sm:$0xff] %v1708
      %1738 = vst [vmem:[%s1730 + $0x71] sm:$0xff] %v1709
      %v1739 = vld [vmem:[#allocation2] sm:$0xff]
      %v1740 = vld [vmem:[#allocation2 + $0x8] sm:$0x3]
      %v1741 = vld [vmem:[#allocation2 + $0x10] sm:$0xff]
      %v1742 = vld [vmem:[#allocation2 + $0x18] sm:$0x3]
      %v1743 = vld [vmem:[#allocation2 + $0x20] sm:$0xff]
      %v1744 = vld [vmem:[#allocation2 + $0x28] sm:$0x3]
      %v1745 = vld [vmem:[#allocation2 + $0x30] sm:$0xff]
      %v1746 = vld [vmem:[#allocation2 + $0x38] sm:$0x3]
      %v1747 = vld [vmem:[#allocation2 + $0x40] sm:$0xff]
      %v1748 = vld [vmem:[#allocation2 + $0x48] sm:$0x3]
      %v1749 = vld [vmem:[#allocation2 + $0x50] sm:$0xff]
      %v1750 = vld [vmem:[#allocation2 + $0x58] sm:$0x3]
      %v1751 = vld [vmem:[#allocation2 + $0x60] sm:$0xff]
      %v1752 = vld [vmem:[#allocation2 + $0x68] sm:$0x3]
      %v1753 = vld [vmem:[#allocation2 + $0x70] sm:$0xff]
      %v1754 = vld [vmem:[#allocation2 + $0x78] sm:$0x3]
      %v1755 = vld [vmem:[#allocation2 + $0x80] sm:$0xff]
      %v1756 = vld [vmem:[#allocation2 + $0x88] sm:$0x3]
      %v1757 = vld [vmem:[#allocation2 + $0x90] sm:$0xff]
      %v1758 = vld [vmem:[#allocation2 + $0x98] sm:$0x3]
      %v1759 = vld [vmem:[%s5] sm:$0x7]
      %v1760 = vld [vmem:[%s5 + $0x4] sm:$0x7]
      %v1761 = vld [vmem:[%s5 + $0x8] sm:$0x7]
      %v1762 = vld [vmem:[%s6] sm:$0x1]
      %v1763 = vperm.slane %v1759, 0
      %v1764 = vmul.f32 %v1739, %v1763
      %v1765 = vmul.f32 %v1741, %v1763
      %v1766 = vmul.f32 %v1743, %v1763
      %v1767 = vmul.f32 %v1745, %v1763
      %v1768 = vmul.f32 %v1747, %v1763
      %v1769 = vmul.f32 %v1749, %v1763
      %v1770 = vmul.f32 %v1751, %v1763
      %v1771 = vmul.f32 %v1753, %v1763
      %v1773 = vperm.slane %v1762, 0
      %v1775 = vadd.f32 %v1773, %v1764
      %v1776 = vadd.f32 %v1773, %v1765
      %v1777 = vadd.f32 %v1773, %v1766
      %v1778 = vadd.f32 %v1773, %v1767
      %v1779 = vadd.f32 %v1773, %v1768
      %v1780 = vadd.f32 %v1773, %v1769
      %v1781 = vadd.f32 %v1773, %v1770
      %v1782 = vadd.f32 %v1773, %v1771
      %v1783 = vperm.slane %v1759, 1
      %v1784 = vmul.f32 %v1739, %v1783
      %v1785 = vmul.f32 %v1740, %v1783
      %v1786 = vmul.f32 %v1741, %v1783
      %v1787 = vmul.f32 %v1742, %v1783
      %v1788 = vmul.f32 %v1743, %v1783
      %v1789 = vmul.f32 %v1744, %v1783
      %v1790 = vmul.f32 %v1745, %v1783
      %v1791 = vmul.f32 %v1746, %v1783
      %v1792 = vmul.f32 %v1747, %v1783
      %v1793 = vmul.f32 %v1748, %v1783
      %v1794 = vmul.f32 %v1749, %v1783
      %v1795 = vmul.f32 %v1750, %v1783
      %v1796 = vmul.f32 %v1751, %v1783
      %v1797 = vmul.f32 %v1752, %v1783
      %v1798 = vmul.f32 %v1753, %v1783
      %v1799 = vmul.f32 %v1754, %v1783
      %v1816 = vrot.slane %v1784, 1
      %v1817 = vrot.slane %v1785, 1
      %v1818 = vsel %vm776, %v1816, %v1817
      %v1819 = vrot.slane %v1786, 1
      %v1820 = vrot.slane %v1787, 1
      %v1821 = vsel %vm776, %v1819, %v1820
      %v1822 = vrot.slane %v1788, 1
      %v1823 = vrot.slane %v1789, 1
      %v1824 = vsel %vm776, %v1822, %v1823
      %v1825 = vrot.slane %v1790, 1
      %v1826 = vrot.slane %v1791, 1
      %v1827 = vsel %vm776, %v1825, %v1826
      %v1828 = vrot.slane %v1792, 1
      %v1829 = vrot.slane %v1793, 1
      %v1830 = vsel %vm776, %v1828, %v1829
      %v1831 = vrot.slane %v1794, 1
      %v1832 = vrot.slane %v1795, 1
      %v1833 = vsel %vm776, %v1831, %v1832
      %v1834 = vrot.slane %v1796, 1
      %v1835 = vrot.slane %v1797, 1
      %v1836 = vsel %vm776, %v1834, %v1835
      %v1837 = vrot.slane %v1798, 1
      %v1838 = vrot.slane %v1799, 1
      %v1839 = vsel %vm776, %v1837, %v1838
      %v1848 = vadd.f32 %v1775, %v1818
      %v1849 = vadd.f32 %v1776, %v1821
      %v1850 = vadd.f32 %v1777, %v1824
      %v1851 = vadd.f32 %v1778, %v1827
      %v1852 = vadd.f32 %v1779, %v1830
      %v1853 = vadd.f32 %v1780, %v1833
      %v1854 = vadd.f32 %v1781, %v1836
      %v1855 = vadd.f32 %v1782, %v1839
      %v1856 = vperm.slane %v1759, 2
      %v1857 = vmul.f32 %v1739, %v1856
      %v1858 = vmul.f32 %v1740, %v1856
      %v1859 = vmul.f32 %v1741, %v1856
      %v1860 = vmul.f32 %v1742, %v1856
      %v1861 = vmul.f32 %v1743, %v1856
      %v1862 = vmul.f32 %v1744, %v1856
      %v1863 = vmul.f32 %v1745, %v1856
      %v1864 = vmul.f32 %v1746, %v1856
      %v1865 = vmul.f32 %v1747, %v1856
      %v1866 = vmul.f32 %v1748, %v1856
      %v1867 = vmul.f32 %v1749, %v1856
      %v1868 = vmul.f32 %v1750, %v1856
      %v1869 = vmul.f32 %v1751, %v1856
      %v1870 = vmul.f32 %v1752, %v1856
      %v1871 = vmul.f32 %v1753, %v1856
      %v1872 = vmul.f32 %v1754, %v1856
      %vm1889 = vcmask 1045504
      %v1890 = vrot.slane %v1857, 2
      %v1891 = vrot.slane %v1858, 2
      %v1892 = vsel %vm1889, %v1890, %v1891
      %v1893 = vrot.slane %v1859, 2
      %v1894 = vrot.slane %v1860, 2
      %v1895 = vsel %vm1889, %v1893, %v1894
      %v1896 = vrot.slane %v1861, 2
      %v1897 = vrot.slane %v1862, 2
      %v1898 = vsel %vm1889, %v1896, %v1897
      %v1899 = vrot.slane %v1863, 2
      %v1900 = vrot.slane %v1864, 2
      %v1901 = vsel %vm1889, %v1899, %v1900
      %v1902 = vrot.slane %v1865, 2
      %v1903 = vrot.slane %v1866, 2
      %v1904 = vsel %vm1889, %v1902, %v1903
      %v1905 = vrot.slane %v1867, 2
      %v1906 = vrot.slane %v1868, 2
      %v1907 = vsel %vm1889, %v1905, %v1906
      %v1908 = vrot.slane %v1869, 2
      %v1909 = vrot.slane %v1870, 2
      %v1910 = vsel %vm1889, %v1908, %v1909
      %v1911 = vrot.slane %v1871, 2
      %v1912 = vrot.slane %v1872, 2
      %v1913 = vsel %vm1889, %v1911, %v1912
      %v1922 = vadd.f32 %v1848, %v1892
      %v1923 = vadd.f32 %v1849, %v1895
      %v1924 = vadd.f32 %v1850, %v1898
      %v1925 = vadd.f32 %v1851, %v1901
      %v1926 = vadd.f32 %v1852, %v1904
      %v1927 = vadd.f32 %v1853, %v1907
      %v1928 = vadd.f32 %v1854, %v1910
      %v1929 = vadd.f32 %v1855, %v1913
      %v1930 = vperm.slane %v1760, 0
      %v1931 = vmul.f32 %v1741, %v1930
      %v1932 = vmul.f32 %v1743, %v1930
      %v1933 = vmul.f32 %v1745, %v1930
      %v1934 = vmul.f32 %v1747, %v1930
      %v1935 = vmul.f32 %v1749, %v1930
      %v1936 = vmul.f32 %v1751, %v1930
      %v1937 = vmul.f32 %v1753, %v1930
      %v1938 = vmul.f32 %v1755, %v1930
      %v1939 = vadd.f32 %v1922, %v1931
      %v1940 = vadd.f32 %v1923, %v1932
      %v1941 = vadd.f32 %v1924, %v1933
      %v1942 = vadd.f32 %v1925, %v1934
      %v1943 = vadd.f32 %v1926, %v1935
      %v1944 = vadd.f32 %v1927, %v1936
      %v1945 = vadd.f32 %v1928, %v1937
      %v1946 = vadd.f32 %v1929, %v1938
      %v1947 = vperm.slane %v1760, 1
      %v1948 = vmul.f32 %v1741, %v1947
      %v1949 = vmul.f32 %v1742, %v1947
      %v1950 = vmul.f32 %v1743, %v1947
      %v1951 = vmul.f32 %v1744, %v1947
      %v1952 = vmul.f32 %v1745, %v1947
      %v1953 = vmul.f32 %v1746, %v1947
      %v1954 = vmul.f32 %v1747, %v1947
      %v1955 = vmul.f32 %v1748, %v1947
      %v1956 = vmul.f32 %v1749, %v1947
      %v1957 = vmul.f32 %v1750, %v1947
      %v1958 = vmul.f32 %v1751, %v1947
      %v1959 = vmul.f32 %v1752, %v1947
      %v1960 = vmul.f32 %v1753, %v1947
      %v1961 = vmul.f32 %v1754, %v1947
      %v1962 = vmul.f32 %v1755, %v1947
      %v1963 = vmul.f32 %v1756, %v1947
      %v1980 = vrot.slane %v1948, 1
      %v1981 = vrot.slane %v1949, 1
      %v1982 = vsel %vm776, %v1980, %v1981
      %v1983 = vrot.slane %v1950, 1
      %v1984 = vrot.slane %v1951, 1
      %v1985 = vsel %vm776, %v1983, %v1984
      %v1986 = vrot.slane %v1952, 1
      %v1987 = vrot.slane %v1953, 1
      %v1988 = vsel %vm776, %v1986, %v1987
      %v1989 = vrot.slane %v1954, 1
      %v1990 = vrot.slane %v1955, 1
      %v1991 = vsel %vm776, %v1989, %v1990
      %v1992 = vrot.slane %v1956, 1
      %v1993 = vrot.slane %v1957, 1
      %v1994 = vsel %vm776, %v1992, %v1993
      %v1995 = vrot.slane %v1958, 1
      %v1996 = vrot.slane %v1959, 1
      %v1997 = vsel %vm776, %v1995, %v1996
      %v1998 = vrot.slane %v1960, 1
      %v1999 = vrot.slane %v1961, 1
      %v2000 = vsel %vm776, %v1998, %v1999
      %v2001 = vrot.slane %v1962, 1
      %v2002 = vrot.slane %v1963, 1
      %v2003 = vsel %vm776, %v2001, %v2002
      %v2012 = vadd.f32 %v1939, %v1982
      %v2013 = vadd.f32 %v1940, %v1985
      %v2014 = vadd.f32 %v1941, %v1988
      %v2015 = vadd.f32 %v1942, %v1991
      %v2016 = vadd.f32 %v1943, %v1994
      %v2017 = vadd.f32 %v1944, %v1997
      %v2018 = vadd.f32 %v1945, %v2000
      %v2019 = vadd.f32 %v1946, %v2003
      %v2020 = vperm.slane %v1760, 2
      %v2021 = vmul.f32 %v1741, %v2020
      %v2022 = vmul.f32 %v1742, %v2020
      %v2023 = vmul.f32 %v1743, %v2020
      %v2024 = vmul.f32 %v1744, %v2020
      %v2025 = vmul.f32 %v1745, %v2020
      %v2026 = vmul.f32 %v1746, %v2020
      %v2027 = vmul.f32 %v1747, %v2020
      %v2028 = vmul.f32 %v1748, %v2020
      %v2029 = vmul.f32 %v1749, %v2020
      %v2030 = vmul.f32 %v1750, %v2020
      %v2031 = vmul.f32 %v1751, %v2020
      %v2032 = vmul.f32 %v1752, %v2020
      %v2033 = vmul.f32 %v1753, %v2020
      %v2034 = vmul.f32 %v1754, %v2020
      %v2035 = vmul.f32 %v1755, %v2020
      %v2036 = vmul.f32 %v1756, %v2020
      %v2053 = vrot.slane %v2021, 2
      %v2054 = vrot.slane %v2022, 2
      %v2055 = vsel %vm1889, %v2053, %v2054
      %v2056 = vrot.slane %v2023, 2
      %v2057 = vrot.slane %v2024, 2
      %v2058 = vsel %vm1889, %v2056, %v2057
      %v2059 = vrot.slane %v2025, 2
      %v2060 = vrot.slane %v2026, 2
      %v2061 = vsel %vm1889, %v2059, %v2060
      %v2062 = vrot.slane %v2027, 2
      %v2063 = vrot.slane %v2028, 2
      %v2064 = vsel %vm1889, %v2062, %v2063
      %v2065 = vrot.slane %v2029, 2
      %v2066 = vrot.slane %v2030, 2
      %v2067 = vsel %vm1889, %v2065, %v2066
      %v2068 = vrot.slane %v2031, 2
      %v2069 = vrot.slane %v2032, 2
      %v2070 = vsel %vm1889, %v2068, %v2069
      %v2071 = vrot.slane %v2033, 2
      %v2072 = vrot.slane %v2034, 2
      %v2073 = vsel %vm1889, %v2071, %v2072
      %v2074 = vrot.slane %v2035, 2
      %v2075 = vrot.slane %v2036, 2
      %v2076 = vsel %vm1889, %v2074, %v2075
      %v2085 = vadd.f32 %v2012, %v2055
      %v2086 = vadd.f32 %v2013, %v2058
      %v2087 = vadd.f32 %v2014, %v2061
      %v2088 = vadd.f32 %v2015, %v2064
      %v2089 = vadd.f32 %v2016, %v2067
      %v2090 = vadd.f32 %v2017, %v2070
      %v2091 = vadd.f32 %v2018, %v2073
      %v2092 = vadd.f32 %v2019, %v2076
      %v2093 = vperm.slane %v1761, 0
      %v2094 = vmul.f32 %v1743, %v2093
      %v2095 = vmul.f32 %v1745, %v2093
      %v2096 = vmul.f32 %v1747, %v2093
      %v2097 = vmul.f32 %v1749, %v2093
      %v2098 = vmul.f32 %v1751, %v2093
      %v2099 = vmul.f32 %v1753, %v2093
      %v2100 = vmul.f32 %v1755, %v2093
      %v2101 = vmul.f32 %v1757, %v2093
      %v2102 = vadd.f32 %v2085, %v2094
      %v2103 = vadd.f32 %v2086, %v2095
      %v2104 = vadd.f32 %v2087, %v2096
      %v2105 = vadd.f32 %v2088, %v2097
      %v2106 = vadd.f32 %v2089, %v2098
      %v2107 = vadd.f32 %v2090, %v2099
      %v2108 = vadd.f32 %v2091, %v2100
      %v2109 = vadd.f32 %v2092, %v2101
      %v2110 = vperm.slane %v1761, 1
      %v2111 = vmul.f32 %v1743, %v2110
      %v2112 = vmul.f32 %v1744, %v2110
      %v2113 = vmul.f32 %v1745, %v2110
      %v2114 = vmul.f32 %v1746, %v2110
      %v2115 = vmul.f32 %v1747, %v2110
      %v2116 = vmul.f32 %v1748, %v2110
      %v2117 = vmul.f32 %v1749, %v2110
      %v2118 = vmul.f32 %v1750, %v2110
      %v2119 = vmul.f32 %v1751, %v2110
      %v2120 = vmul.f32 %v1752, %v2110
      %v2121 = vmul.f32 %v1753, %v2110
      %v2122 = vmul.f32 %v1754, %v2110
      %v2123 = vmul.f32 %v1755, %v2110
      %v2124 = vmul.f32 %v1756, %v2110
      %v2125 = vmul.f32 %v1757, %v2110
      %v2126 = vmul.f32 %v1758, %v2110
      %v2143 = vrot.slane %v2111, 1
      %v2144 = vrot.slane %v2112, 1
      %v2145 = vsel %vm776, %v2143, %v2144
      %v2146 = vrot.slane %v2113, 1
      %v2147 = vrot.slane %v2114, 1
      %v2148 = vsel %vm776, %v2146, %v2147
      %v2149 = vrot.slane %v2115, 1
      %v2150 = vrot.slane %v2116, 1
      %v2151 = vsel %vm776, %v2149, %v2150
      %v2152 = vrot.slane %v2117, 1
      %v2153 = vrot.slane %v2118, 1
      %v2154 = vsel %vm776, %v2152, %v2153
      %v2155 = vrot.slane %v2119, 1
      %v2156 = vrot.slane %v2120, 1
      %v2157 = vsel %vm776, %v2155, %v2156
      %v2158 = vrot.slane %v2121, 1
      %v2159 = vrot.slane %v2122, 1
      %v2160 = vsel %vm776, %v2158, %v2159
      %v2161 = vrot.slane %v2123, 1
      %v2162 = vrot.slane %v2124, 1
      %v2163 = vsel %vm776, %v2161, %v2162
      %v2164 = vrot.slane %v2125, 1
      %v2165 = vrot.slane %v2126, 1
      %v2166 = vsel %vm776, %v2164, %v2165
      %v2175 = vadd.f32 %v2102, %v2145
      %v2176 = vadd.f32 %v2103, %v2148
      %v2177 = vadd.f32 %v2104, %v2151
      %v2178 = vadd.f32 %v2105, %v2154
      %v2179 = vadd.f32 %v2106, %v2157
      %v2180 = vadd.f32 %v2107, %v2160
      %v2181 = vadd.f32 %v2108, %v2163
      %v2182 = vadd.f32 %v2109, %v2166
      %v2183 = vperm.slane %v1761, 2
      %v2184 = vmul.f32 %v1743, %v2183
      %v2185 = vmul.f32 %v1744, %v2183
      %v2186 = vmul.f32 %v1745, %v2183
      %v2187 = vmul.f32 %v1746, %v2183
      %v2188 = vmul.f32 %v1747, %v2183
      %v2189 = vmul.f32 %v1748, %v2183
      %v2190 = vmul.f32 %v1749, %v2183
      %v2191 = vmul.f32 %v1750, %v2183
      %v2192 = vmul.f32 %v1751, %v2183
      %v2193 = vmul.f32 %v1752, %v2183
      %v2194 = vmul.f32 %v1753, %v2183
      %v2195 = vmul.f32 %v1754, %v2183
      %v2196 = vmul.f32 %v1755, %v2183
      %v2197 = vmul.f32 %v1756, %v2183
      %v2198 = vmul.f32 %v1757, %v2183
      %v2199 = vmul.f32 %v1758, %v2183
      %v2216 = vrot.slane %v2184, 2
      %v2217 = vrot.slane %v2185, 2
      %v2218 = vsel %vm1889, %v2216, %v2217
      %v2219 = vrot.slane %v2186, 2
      %v2220 = vrot.slane %v2187, 2
      %v2221 = vsel %vm1889, %v2219, %v2220
      %v2222 = vrot.slane %v2188, 2
      %v2223 = vrot.slane %v2189, 2
      %v2224 = vsel %vm1889, %v2222, %v2223
      %v2225 = vrot.slane %v2190, 2
      %v2226 = vrot.slane %v2191, 2
      %v2227 = vsel %vm1889, %v2225, %v2226
      %v2228 = vrot.slane %v2192, 2
      %v2229 = vrot.slane %v2193, 2
      %v2230 = vsel %vm1889, %v2228, %v2229
      %v2231 = vrot.slane %v2194, 2
      %v2232 = vrot.slane %v2195, 2
      %v2233 = vsel %vm1889, %v2231, %v2232
      %v2234 = vrot.slane %v2196, 2
      %v2235 = vrot.slane %v2197, 2
      %v2236 = vsel %vm1889, %v2234, %v2235
      %v2237 = vrot.slane %v2198, 2
      %v2238 = vrot.slane %v2199, 2
      %v2239 = vsel %vm1889, %v2237, %v2238
      %v2248 = vadd.f32 %v2175, %v2218
      %v2249 = vadd.f32 %v2176, %v2221
      %v2250 = vadd.f32 %v2177, %v2224
      %v2251 = vadd.f32 %v2178, %v2227
      %v2252 = vadd.f32 %v2179, %v2230
      %v2253 = vadd.f32 %v2180, %v2233
      %v2254 = vadd.f32 %v2181, %v2236
      %v2255 = vadd.f32 %v2182, %v2239
      %v2256 = vxor.u32 %v2248, 2147483648
      %v2257 = vxor.u32 %v2249, 2147483648
      %v2258 = vxor.u32 %v2250, 2147483648
      %v2259 = vxor.u32 %v2251, 2147483648
      %v2260 = vxor.u32 %v2252, 2147483648
      %v2261 = vxor.u32 %v2253, 2147483648
      %v2262 = vxor.u32 %v2254, 2147483648
      %v2263 = vxor.u32 %v2255, 2147483648
      %v2264 = vmul.f32 %v2256, 1.442695
      %v2265 = vpow.pop %v2264
      %v2266 = vmul.f32 %v2257, 1.442695
      %v2267 = vpow.pop %v2266
      %v2268 = vmul.f32 %v2258, 1.442695
      %v2269 = vpow.pop %v2268
      %v2270 = vmul.f32 %v2259, 1.442695
      %v2271 = vpow.pop %v2270
      %v2272 = vmul.f32 %v2260, 1.442695
      %v2273 = vpow.pop %v2272
      %v2274 = vmul.f32 %v2261, 1.442695
      %v2275 = vpow.pop %v2274
      %v2276 = vmul.f32 %v2262, 1.442695
      %v2277 = vpow.pop %v2276
      %v2278 = vmul.f32 %v2263, 1.442695
      %v2279 = vpow.pop %v2278
      %v2280 = vadd.f32 %v2265, 1.0
      %v2281 = vadd.f32 %v2267, 1.0
      %v2282 = vadd.f32 %v2269, 1.0
      %v2283 = vadd.f32 %v2271, 1.0
      %v2284 = vadd.f32 %v2273, 1.0
      %v2285 = vadd.f32 %v2275, 1.0
      %v2286 = vadd.f32 %v2277, 1.0
      %v2287 = vadd.f32 %v2279, 1.0
      %v2288 = vrcp.pop %v2280
      %v2289 = vmul.f32 %v2280, %v2288
      %v2290 = vsub.f32 1.0, %v2289
      %v2291 = vmul.f32 %v2288, %v2290
      %v2292 = vadd.f32 %v2288, %v2291
      %vm2293 = vweird.f32 %v2280
      %vm2294 = vweird.f32 %v2288
      %vm2295 = vmor %vm2293, %vm2294
      %v2296 = vsel %vm2295, %v2288, %v2292
      %v2297 = vand.u32 2147483647, %v2280
      %vm2298 = vcmp.eq.f32.partialorder %v2297, 8.507059e+37
      %v2299 = vand.u32 %v2280, 2147483648
      %v2300 = vor.u32 1.1754944e-38, %v2299
      %v2301 = vsel %vm2298, %v2300, %v2296
      %v2302 = vmul.f32 1.0, %v2301
      %v2303 = vrcp.pop %v2281
      %v2304 = vmul.f32 %v2281, %v2303
      %v2305 = vsub.f32 1.0, %v2304
      %v2306 = vmul.f32 %v2303, %v2305
      %v2307 = vadd.f32 %v2303, %v2306
      %vm2308 = vweird.f32 %v2281
      %vm2309 = vweird.f32 %v2303
      %vm2310 = vmor %vm2308, %vm2309
      %v2311 = vsel %vm2310, %v2303, %v2307
      %v2312 = vand.u32 2147483647, %v2281
      %vm2313 = vcmp.eq.f32.partialorder %v2312, 8.507059e+37
      %v2314 = vand.u32 %v2281, 2147483648
      %v2315 = vor.u32 1.1754944e-38, %v2314
      %v2316 = vsel %vm2313, %v2315, %v2311
      %v2317 = vmul.f32 1.0, %v2316
      %v2318 = vrcp.pop %v2282
      %v2319 = vmul.f32 %v2282, %v2318
      %v2320 = vsub.f32 1.0, %v2319
      %v2321 = vmul.f32 %v2318, %v2320
      %v2322 = vadd.f32 %v2318, %v2321
      %vm2323 = vweird.f32 %v2282
      %vm2324 = vweird.f32 %v2318
      %vm2325 = vmor %vm2323, %vm2324
      %v2326 = vsel %vm2325, %v2318, %v2322
      %v2327 = vand.u32 2147483647, %v2282
      %vm2328 = vcmp.eq.f32.partialorder %v2327, 8.507059e+37
      %v2329 = vand.u32 %v2282, 2147483648
      %v2330 = vor.u32 1.1754944e-38, %v2329
      %v2331 = vsel %vm2328, %v2330, %v2326
      %v2332 = vmul.f32 1.0, %v2331
      %v2333 = vrcp.pop %v2283
      %v2334 = vmul.f32 %v2283, %v2333
      %v2335 = vsub.f32 1.0, %v2334
      %v2336 = vmul.f32 %v2333, %v2335
      %v2337 = vadd.f32 %v2333, %v2336
      %vm2338 = vweird.f32 %v2283
      %vm2339 = vweird.f32 %v2333
      %vm2340 = vmor %vm2338, %vm2339
      %v2341 = vsel %vm2340, %v2333, %v2337
      %v2342 = vand.u32 2147483647, %v2283
      %vm2343 = vcmp.eq.f32.partialorder %v2342, 8.507059e+37
      %v2344 = vand.u32 %v2283, 2147483648
      %v2345 = vor.u32 1.1754944e-38, %v2344
      %v2346 = vsel %vm2343, %v2345, %v2341
      %v2347 = vmul.f32 1.0, %v2346
      %v2348 = vrcp.pop %v2284
      %v2349 = vmul.f32 %v2284, %v2348
      %v2350 = vsub.f32 1.0, %v2349
      %v2351 = vmul.f32 %v2348, %v2350
      %v2352 = vadd.f32 %v2348, %v2351
      %vm2353 = vweird.f32 %v2284
      %vm2354 = vweird.f32 %v2348
      %vm2355 = vmor %vm2353, %vm2354
      %v2356 = vsel %vm2355, %v2348, %v2352
      %v2357 = vand.u32 2147483647, %v2284
      %vm2358 = vcmp.eq.f32.partialorder %v2357, 8.507059e+37
      %v2359 = vand.u32 %v2284, 2147483648
      %v2360 = vor.u32 1.1754944e-38, %v2359
      %v2361 = vsel %vm2358, %v2360, %v2356
      %v2362 = vmul.f32 1.0, %v2361
      %v2363 = vrcp.pop %v2285
      %v2364 = vmul.f32 %v2285, %v2363
      %v2365 = vsub.f32 1.0, %v2364
      %v2366 = vmul.f32 %v2363, %v2365
      %v2367 = vadd.f32 %v2363, %v2366
      %vm2368 = vweird.f32 %v2285
      %vm2369 = vweird.f32 %v2363
      %vm2370 = vmor %vm2368, %vm2369
      %v2371 = vsel %vm2370, %v2363, %v2367
      %v2372 = vand.u32 2147483647, %v2285
      %vm2373 = vcmp.eq.f32.partialorder %v2372, 8.507059e+37
      %v2374 = vand.u32 %v2285, 2147483648
      %v2375 = vor.u32 1.1754944e-38, %v2374
      %v2376 = vsel %vm2373, %v2375, %v2371
      %v2377 = vmul.f32 1.0, %v2376
      %v2378 = vrcp.pop %v2286
      %v2379 = vmul.f32 %v2286, %v2378
      %v2380 = vsub.f32 1.0, %v2379
      %v2381 = vmul.f32 %v2378, %v2380
      %v2382 = vadd.f32 %v2378, %v2381
      %vm2383 = vweird.f32 %v2286
      %vm2384 = vweird.f32 %v2378
      %vm2385 = vmor %vm2383, %vm2384
      %v2386 = vsel %vm2385, %v2378, %v2382
      %v2387 = vand.u32 2147483647, %v2286
      %vm2388 = vcmp.eq.f32.partialorder %v2387, 8.507059e+37
      %v2389 = vand.u32 %v2286, 2147483648
      %v2390 = vor.u32 1.1754944e-38, %v2389
      %v2391 = vsel %vm2388, %v2390, %v2386
      %v2392 = vmul.f32 1.0, %v2391
      %v2393 = vrcp.pop %v2287
      %v2394 = vmul.f32 %v2287, %v2393
      %v2395 = vsub.f32 1.0, %v2394
      %v2396 = vmul.f32 %v2393, %v2395
      %v2397 = vadd.f32 %v2393, %v2396
      %vm2398 = vweird.f32 %v2287
      %vm2399 = vweird.f32 %v2393
      %vm2400 = vmor %vm2398, %vm2399
      %v2401 = vsel %vm2400, %v2393, %v2397
      %v2402 = vand.u32 2147483647, %v2287
      %vm2403 = vcmp.eq.f32.partialorder %v2402, 8.507059e+37
      %v2404 = vand.u32 %v2287, 2147483648
      %v2405 = vor.u32 1.1754944e-38, %v2404
      %v2406 = vsel %vm2403, %v2405, %v2401
      %v2407 = vmul.f32 1.0, %v2406
      %v2408 = vmul.f32 %v2248, %v2302
      %v2409 = vmul.f32 %v2249, %v2317
      %v2410 = vmul.f32 %v2250, %v2332
      %v2411 = vmul.f32 %v2251, %v2347
      %v2412 = vmul.f32 %v2252, %v2362
      %v2413 = vmul.f32 %v2253, %v2377
      %v2414 = vmul.f32 %v2254, %v2392
      %v2415 = vmul.f32 %v2255, %v2407
      %v2416 = vadd.f32 %v2408, %v2409
      %v2417 = vadd.f32 %v2416, %v2410
      %v2418 = vadd.f32 %v2417, %v2411
      %v2419 = vadd.f32 %v2418, %v2412
      %v2420 = vadd.f32 %v2419, %v2413
      %v2421 = vadd.f32 %v2420, %v2414
      %v2422 = vadd.f32 %v2421, %v2415
      %v2423 = vrot.slane %v2422, 4
      %v2424 = vadd.f32 %v2422, %v2423
      %v2425 = vrot.slane %v2424, 2
      %v2426 = vadd.f32 %v2424, %v2425
      %v2427 = vrot.slane %v2426, 1
      %v2428 = vadd.f32 %v2426, %v2427
      %v2429 = vmul.f32 %v2428, 0.015625
      %v2430 = vpack.c.bf16 %v2429, %v2429
      %v2431 = vld [vmem:[%s7] sm:$0xf]
      %v2432 = vld [vmem:[%s7 + $0x4] sm:$0xf]
      %v2433 = vld [vmem:[%s7 + $0x8] sm:$0xf]
      %v2434 = vld [vmem:[%s7 + $0xc] sm:$0xf]
      %v2435 = vld [vmem:[%s7 + $0x10] sm:$0xf]
      %v2436 = vld [vmem:[%s7 + $0x14] sm:$0xf]
      %v2437 = vld [vmem:[%s7 + $0x18] sm:$0xf]
      %v2438 = vld [vmem:[%s7 + $0x1c] sm:$0xf]
      %v2439 = vld [vmem:[%s7 + $0x20] sm:$0xf]
      %v2440 = vld [vmem:[%s7 + $0x24] sm:$0xf]
      %v2441 = vld [vmem:[%s7 + $0x28] sm:$0xf]
      %v2442 = vld [vmem:[%s7 + $0x2c] sm:$0xf]
      %v2443 = vld [vmem:[%s7 + $0x30] sm:$0xf]
      %v2444 = vld [vmem:[%s7 + $0x34] sm:$0xf]
      %v2445 = vld [vmem:[%s7 + $0x38] sm:$0xf]
      %v2446 = vld [vmem:[%s7 + $0x3c] sm:$0xf]
      %v2447 = vld [vmem:[%s8] sm:$0x1]
      %v2464 = vunpack.c.l.b16 %v2431
      %v2465 = vunpack.c.l.b16 %v2432
      %v2466 = vunpack.c.l.b16 %v2433
      %v2467 = vunpack.c.l.b16 %v2434
      %v2468 = vunpack.c.l.b16 %v2435
      %v2469 = vunpack.c.l.b16 %v2436
      %v2470 = vunpack.c.l.b16 %v2437
      %v2471 = vunpack.c.l.b16 %v2438
      %v2472 = vunpack.c.l.b16 %v2439
      %v2473 = vunpack.c.l.b16 %v2440
      %v2474 = vunpack.c.l.b16 %v2441
      %v2475 = vunpack.c.l.b16 %v2442
      %v2476 = vunpack.c.l.b16 %v2443
      %v2477 = vunpack.c.l.b16 %v2444
      %v2478 = vunpack.c.l.b16 %v2445
      %v2479 = vunpack.c.l.b16 %v2446
      %v2480 = vpack.c.b16 %v2465, %v2464
      %v2481 = vpack.c.b16 %v2467, %v2466
      %v2482 = vpack.c.b16 %v2469, %v2468
      %v2483 = vpack.c.b16 %v2471, %v2470
      %v2484 = vpack.c.b16 %v2473, %v2472
      %v2485 = vpack.c.b16 %v2475, %v2474
      %v2486 = vpack.c.b16 %v2477, %v2476
      %v2487 = vpack.c.b16 %v2479, %v2478
      %2496 = vmatpush.bf16.msra.mxu0 %v2487
      %2497 = vmatpush.bf16.msra.mxu0 %v2486
      %2498 = vmatpush.bf16.msra.mxu0 %v2485
      %2499 = vmatpush.bf16.msra.mxu0 %v2484
      %2500 = vmatpush.bf16.msra.mxu0 %v2483
      %2501 = vmatpush.bf16.msra.mxu0 %v2482
      %2502 = vmatpush.bf16.msra.mxu0 %v2481
      %2503 = vmatpush.bf16.msra.mxu0 %v2480
      %2504 = vmatmul.bf16.gmra.mxu0 %v2430
      %v2505 = vpop.f32.mrf.mxu0
      %v2506 = vadd.f32 %v2447, %v2505
      %v2507 = vpop.f32.mrf.mxu0
      %2508 = vdwg.mxu0
      %v2509 = vxor.u32 %v2506, 2147483648
      %v2510 = vmul.f32 %v2509, 1.442695
      %v2511 = vpow.pop %v2510
      %v2512 = vadd.f32 %v2511, 1.0
      %v2513 = vrcp.pop %v2512
      %v2514 = vmul.f32 %v2512, %v2513
      %v2515 = vsub.f32 1.0, %v2514
      %v2516 = vmul.f32 %v2513, %v2515
      %v2517 = vadd.f32 %v2513, %v2516
      %vm2518 = vweird.f32 %v2512
      %vm2519 = vweird.f32 %v2513
      %vm2520 = vmor %vm2518, %vm2519
      %v2521 = vsel %vm2520, %v2513, %v2517
      %v2522 = vand.u32 2147483647, %v2512
      %vm2523 = vcmp.eq.f32.partialorder %v2522, 8.507059e+37
      %v2524 = vand.u32 %v2512, 2147483648
      %v2525 = vor.u32 1.1754944e-38, %v2524
      %v2526 = vsel %vm2523, %v2525, %v2521
      %v2527 = vmul.f32 1.0, %v2526
      %v2528 = vmul.f32 %v2506, %v2527
      %v2529 = vpack.c.bf16 %v2528, %v2528
      %v2530 = vld [vmem:[%s9] sm:$0xf]
      %v2531 = vld [vmem:[%s9 + $0x4] sm:$0xf]
      %v2532 = vld [vmem:[%s9 + $0x8] sm:$0xf]
      %v2533 = vld [vmem:[%s9 + $0xc] sm:$0xf]
      %v2534 = vld [vmem:[%s9 + $0x10] sm:$0xf]
      %v2535 = vld [vmem:[%s9 + $0x14] sm:$0xf]
      %v2536 = vld [vmem:[%s9 + $0x18] sm:$0xf]
      %v2537 = vld [vmem:[%s9 + $0x1c] sm:$0xf]
      %v2538 = vld [vmem:[%s9 + $0x20] sm:$0xf]
      %v2539 = vld [vmem:[%s9 + $0x24] sm:$0xf]
      %v2540 = vld [vmem:[%s9 + $0x28] sm:$0xf]
      %v2541 = vld [vmem:[%s9 + $0x2c] sm:$0xf]
      %v2542 = vld [vmem:[%s9 + $0x30] sm:$0xf]
      %v2543 = vld [vmem:[%s9 + $0x34] sm:$0xf]
      %v2544 = vld [vmem:[%s9 + $0x38] sm:$0xf]
      %v2545 = vld [vmem:[%s9 + $0x3c] sm:$0xf]
      %v2546 = vld [vmem:[%s10] sm:$0x1]
      %v2563 = vunpack.c.l.b16 %v2530
      %v2564 = vunpack.c.l.b16 %v2531
      %v2565 = vunpack.c.l.b16 %v2532
      %v2566 = vunpack.c.l.b16 %v2533
      %v2567 = vunpack.c.l.b16 %v2534
      %v2568 = vunpack.c.l.b16 %v2535
      %v2569 = vunpack.c.l.b16 %v2536
      %v2570 = vunpack.c.l.b16 %v2537
      %v2571 = vunpack.c.l.b16 %v2538
      %v2572 = vunpack.c.l.b16 %v2539
      %v2573 = vunpack.c.l.b16 %v2540
      %v2574 = vunpack.c.l.b16 %v2541
      %v2575 = vunpack.c.l.b16 %v2542
      %v2576 = vunpack.c.l.b16 %v2543
      %v2577 = vunpack.c.l.b16 %v2544
      %v2578 = vunpack.c.l.b16 %v2545
      %v2579 = vpack.c.b16 %v2564, %v2563
      %v2580 = vpack.c.b16 %v2566, %v2565
      %v2581 = vpack.c.b16 %v2568, %v2567
      %v2582 = vpack.c.b16 %v2570, %v2569
      %v2583 = vpack.c.b16 %v2572, %v2571
      %v2584 = vpack.c.b16 %v2574, %v2573
      %v2585 = vpack.c.b16 %v2576, %v2575
      %v2586 = vpack.c.b16 %v2578, %v2577
      %2595 = vmatpush.bf16.msra.mxu0 %v2586
      %2596 = vmatpush.bf16.msra.mxu0 %v2585
      %2597 = vmatpush.bf16.msra.mxu0 %v2584
      %2598 = vmatpush.bf16.msra.mxu0 %v2583
      %2599 = vmatpush.bf16.msra.mxu0 %v2582
      %2600 = vmatpush.bf16.msra.mxu0 %v2581
      %2601 = vmatpush.bf16.msra.mxu0 %v2580
      %2602 = vmatpush.bf16.msra.mxu0 %v2579
      %2603 = vmatmul.bf16.gmra.mxu0 %v2529
      %v2604 = vpop.f32.mrf.mxu0
      %v2605 = vadd.f32 %v2546, %v2604
      %v2606 = vpop.f32.mrf.mxu0
      %2607 = vdwg.mxu0
      %v2608 = vxor.u32 %v2605, 2147483648
      %v2609 = vmul.f32 %v2608, 1.442695
      %v2610 = vpow.pop %v2609
      %v2611 = vadd.f32 %v2610, 1.0
      %v2612 = vrcp.pop %v2611
      %v2613 = vmul.f32 %v2611, %v2612
      %v2614 = vsub.f32 1.0, %v2613
      %v2615 = vmul.f32 %v2612, %v2614
      %v2616 = vadd.f32 %v2612, %v2615
      %vm2617 = vweird.f32 %v2611
      %vm2618 = vweird.f32 %v2612
      %vm2619 = vmor %vm2617, %vm2618
      %v2620 = vsel %vm2619, %v2612, %v2616
      %v2621 = vand.u32 2147483647, %v2611
      %vm2622 = vcmp.eq.f32.partialorder %v2621, 8.507059e+37
      %v2623 = vand.u32 %v2611, 2147483648
      %v2624 = vor.u32 1.1754944e-38, %v2623
      %v2625 = vsel %vm2622, %v2624, %v2620
      %v2626 = vmul.f32 1.0, %v2625
      %v2627 = vperm.slane %v2626, 0
      %v2628 = vmul.f32 %v2408, %v2627
      %v2629 = vmul.f32 %v2409, %v2627
      %v2630 = vmul.f32 %v2410, %v2627
      %v2631 = vmul.f32 %v2411, %v2627
      %v2632 = vmul.f32 %v2412, %v2627
      %v2633 = vmul.f32 %v2413, %v2627
      %v2634 = vmul.f32 %v2414, %v2627
      %v2635 = vmul.f32 %v2415, %v2627
      %v2636 = vpack.c.bf16 %v2629, %v2628
      %v2637 = vpack.c.bf16 %v2631, %v2630
      %v2638 = vpack.c.bf16 %v2633, %v2632
      %v2639 = vpack.c.bf16 %v2635, %v2634
      %v2640 = vld [vmem:[%s11] sm:$0xf]
      %v2641 = vld [vmem:[%s11 + $0x4] sm:$0xf]
      %v2642 = vld [vmem:[%s11 + $0x8] sm:$0xf]
      %v2643 = vld [vmem:[%s11 + $0xc] sm:$0xf]
      %v2644 = vld [vmem:[%s11 + $0x10] sm:$0xf]
      %v2645 = vld [vmem:[%s11 + $0x14] sm:$0xf]
      %v2646 = vld [vmem:[%s11 + $0x18] sm:$0xf]
      %v2647 = vld [vmem:[%s11 + $0x1c] sm:$0xf]
      %v2648 = vld [vmem:[%s11 + $0x20] sm:$0xf]
      %v2649 = vld [vmem:[%s11 + $0x24] sm:$0xf]
      %v2650 = vld [vmem:[%s11 + $0x28] sm:$0xf]
      %v2651 = vld [vmem:[%s11 + $0x2c] sm:$0xf]
      %v2652 = vld [vmem:[%s11 + $0x30] sm:$0xf]
      %v2653 = vld [vmem:[%s11 + $0x34] sm:$0xf]
      %v2654 = vld [vmem:[%s11 + $0x38] sm:$0xf]
      %v2655 = vld [vmem:[%s11 + $0x3c] sm:$0xf]
      %v2656 = vld [vmem:[%s12] sm:$0x1]
      %v2658 = vperm.slane %v2656, 0
      %v2676 = vunpack.c.l.b16 %v2640
      %v2677 = vunpack.c.l.b16 %v2641
      %v2678 = vunpack.c.l.b16 %v2642
      %v2679 = vunpack.c.l.b16 %v2643
      %v2680 = vunpack.c.l.b16 %v2644
      %v2681 = vunpack.c.l.b16 %v2645
      %v2682 = vunpack.c.l.b16 %v2646
      %v2683 = vunpack.c.l.b16 %v2647
      %v2684 = vunpack.c.l.b16 %v2648
      %v2685 = vunpack.c.l.b16 %v2649
      %v2686 = vunpack.c.l.b16 %v2650
      %v2687 = vunpack.c.l.b16 %v2651
      %v2688 = vunpack.c.l.b16 %v2652
      %v2689 = vunpack.c.l.b16 %v2653
      %v2690 = vunpack.c.l.b16 %v2654
      %v2691 = vunpack.c.l.b16 %v2655
      %v2692 = vpack.c.b16 %v2677, %v2676
      %v2693 = vpack.c.b16 %v2679, %v2678
      %v2694 = vpack.c.b16 %v2681, %v2680
      %v2695 = vpack.c.b16 %v2683, %v2682
      %v2696 = vpack.c.b16 %v2685, %v2684
      %v2697 = vpack.c.b16 %v2687, %v2686
      %v2698 = vpack.c.b16 %v2689, %v2688
      %v2699 = vpack.c.b16 %v2691, %v2690
      %2708 = vmatpush.bf16.msra.mxu0 %v2699
      %2709 = vmatpush.bf16.msra.mxu0 %v2698
      %2710 = vmatpush.bf16.msra.mxu0 %v2697
      %2711 = vmatpush.bf16.msra.mxu0 %v2696
      %2712 = vmatpush.bf16.msra.mxu0 %v2695
      %2713 = vmatpush.bf16.msra.mxu0 %v2694
      %2714 = vmatpush.bf16.msra.mxu0 %v2693
      %2715 = vmatpush.bf16.msra.mxu0 %v2692
      %2716 = vmatmul.bf16.gmra.mxu0 %v2636
      %v2717 = vpop.f32.mrf.mxu0
      %v2718 = vadd.f32 %v2658, %v2717
      %v2719 = vpop.f32.mrf.mxu0
      %v2720 = vadd.f32 %v2658, %v2719
      %2721 = vmatmul.bf16.gmra.mxu0 %v2637
      %v2722 = vpop.f32.mrf.mxu0
      %v2723 = vadd.f32 %v2658, %v2722
      %v2724 = vpop.f32.mrf.mxu0
      %v2725 = vadd.f32 %v2658, %v2724
      %2726 = vmatmul.bf16.gmra.mxu0 %v2638
      %v2727 = vpop.f32.mrf.mxu0
      %v2728 = vadd.f32 %v2658, %v2727
      %v2729 = vpop.f32.mrf.mxu0
      %v2730 = vadd.f32 %v2658, %v2729
      %2731 = vmatmul.bf16.gmra.mxu0 %v2639
      %v2732 = vpop.f32.mrf.mxu0
      %v2733 = vadd.f32 %v2658, %v2732
      %v2734 = vpop.f32.mrf.mxu0
      %v2735 = vadd.f32 %v2658, %v2734
      %2736 = vdwg.mxu0
      %v2737 = vpack.c.bf16 %v2720, %v2718
      %v2738 = vpack.c.bf16 %v2725, %v2723
      %v2739 = vpack.c.bf16 %v2730, %v2728
      %v2740 = vpack.c.bf16 %v2735, %v2733
      %v2741 = vld [vmem:[%s13] sm:$0xf]
      %v2742 = vld [vmem:[%s13 + $0x4] sm:$0xf]
      %v2743 = vld [vmem:[%s13 + $0x8] sm:$0xf]
      %v2744 = vld [vmem:[%s13 + $0xc] sm:$0xf]
      %v2745 = vld [vmem:[%s13 + $0x10] sm:$0xf]
      %v2746 = vld [vmem:[%s13 + $0x14] sm:$0xf]
      %v2747 = vld [vmem:[%s13 + $0x18] sm:$0xf]
      %v2748 = vld [vmem:[%s13 + $0x1c] sm:$0xf]
      %v2749 = vld [vmem:[%s13 + $0x20] sm:$0xf]
      %v2750 = vld [vmem:[%s13 + $0x24] sm:$0xf]
      %v2751 = vld [vmem:[%s13 + $0x28] sm:$0xf]
      %v2752 = vld [vmem:[%s13 + $0x2c] sm:$0xf]
      %v2753 = vld [vmem:[%s13 + $0x30] sm:$0xf]
      %v2754 = vld [vmem:[%s13 + $0x34] sm:$0xf]
      %v2755 = vld [vmem:[%s13 + $0x38] sm:$0xf]
      %v2756 = vld [vmem:[%s13 + $0x3c] sm:$0xf]
      %v2757 = vld [vmem:[%s14] sm:$0x1]
      %v2759 = vperm.slane %v2757, 0
      %v2777 = vunpack.c.l.b16 %v2741
      %v2778 = vunpack.c.l.b16 %v2742
      %v2779 = vunpack.c.l.b16 %v2743
      %v2780 = vunpack.c.l.b16 %v2744
      %v2781 = vunpack.c.l.b16 %v2745
      %v2782 = vunpack.c.l.b16 %v2746
      %v2783 = vunpack.c.l.b16 %v2747
      %v2784 = vunpack.c.l.b16 %v2748
      %v2785 = vunpack.c.l.b16 %v2749
      %v2786 = vunpack.c.l.b16 %v2750
      %v2787 = vunpack.c.l.b16 %v2751
      %v2788 = vunpack.c.l.b16 %v2752
      %v2789 = vunpack.c.l.b16 %v2753
      %v2790 = vunpack.c.l.b16 %v2754
      %v2791 = vunpack.c.l.b16 %v2755
      %v2792 = vunpack.c.l.b16 %v2756
      %v2793 = vpack.c.b16 %v2778, %v2777
      %v2794 = vpack.c.b16 %v2780, %v2779
      %v2795 = vpack.c.b16 %v2782, %v2781
      %v2796 = vpack.c.b16 %v2784, %v2783
      %v2797 = vpack.c.b16 %v2786, %v2785
      %v2798 = vpack.c.b16 %v2788, %v2787
      %v2799 = vpack.c.b16 %v2790, %v2789
      %v2800 = vpack.c.b16 %v2792, %v2791
      %2809 = vmatpush.bf16.msra.mxu0 %v2800
      %2810 = vmatpush.bf16.msra.mxu0 %v2799
      %2811 = vmatpush.bf16.msra.mxu0 %v2798
      %2812 = vmatpush.bf16.msra.mxu0 %v2797
      %2813 = vmatpush.bf16.msra.mxu0 %v2796
      %2814 = vmatpush.bf16.msra.mxu0 %v2795
      %2815 = vmatpush.bf16.msra.mxu0 %v2794
      %2816 = vmatpush.bf16.msra.mxu0 %v2793
      %2817 = vmatmul.bf16.gmra.mxu0 %v2737
      %v2818 = vpop.f32.mrf.mxu0
      %v2819 = vadd.f32 %v2759, %v2818
      %v2820 = vpop.f32.mrf.mxu0
      %v2821 = vadd.f32 %v2759, %v2820
      %2822 = vmatmul.bf16.gmra.mxu0 %v2738
      %v2823 = vpop.f32.mrf.mxu0
      %v2824 = vadd.f32 %v2759, %v2823
      %v2825 = vpop.f32.mrf.mxu0
      %v2826 = vadd.f32 %v2759, %v2825
      %2827 = vmatmul.bf16.gmra.mxu0 %v2739
      %v2828 = vpop.f32.mrf.mxu0
      %v2829 = vadd.f32 %v2759, %v2828
      %v2830 = vpop.f32.mrf.mxu0
      %v2831 = vadd.f32 %v2759, %v2830
      %2832 = vmatmul.bf16.gmra.mxu0 %v2740
      %v2833 = vpop.f32.mrf.mxu0
      %v2834 = vadd.f32 %v2759, %v2833
      %v2835 = vpop.f32.mrf.mxu0
      %v2836 = vadd.f32 %v2759, %v2835
      %2837 = vdwg.mxu0
      %v2838 = vxor.u32 %v2819, 2147483648
      %v2839 = vxor.u32 %v2821, 2147483648
      %v2840 = vxor.u32 %v2824, 2147483648
      %v2841 = vxor.u32 %v2826, 2147483648
      %v2842 = vxor.u32 %v2829, 2147483648
      %v2843 = vxor.u32 %v2831, 2147483648
      %v2844 = vxor.u32 %v2834, 2147483648
      %v2845 = vxor.u32 %v2836, 2147483648
      %v2846 = vmul.f32 %v2838, 1.442695
      %v2847 = vpow.pop %v2846
      %v2848 = vmul.f32 %v2839, 1.442695
      %v2849 = vpow.pop %v2848
      %v2850 = vmul.f32 %v2840, 1.442695
      %v2851 = vpow.pop %v2850
      %v2852 = vmul.f32 %v2841, 1.442695
      %v2853 = vpow.pop %v2852
      %v2854 = vmul.f32 %v2842, 1.442695
      %v2855 = vpow.pop %v2854
      %v2856 = vmul.f32 %v2843, 1.442695
      %v2857 = vpow.pop %v2856
      %v2858 = vmul.f32 %v2844, 1.442695
      %v2859 = vpow.pop %v2858
      %v2860 = vmul.f32 %v2845, 1.442695
      %v2861 = vpow.pop %v2860
      %v2862 = vadd.f32 %v2847, 1.0
      %v2863 = vadd.f32 %v2849, 1.0
      %v2864 = vadd.f32 %v2851, 1.0
      %v2865 = vadd.f32 %v2853, 1.0
      %v2866 = vadd.f32 %v2855, 1.0
      %v2867 = vadd.f32 %v2857, 1.0
      %v2868 = vadd.f32 %v2859, 1.0
      %v2869 = vadd.f32 %v2861, 1.0
      %v2870 = vrcp.pop %v2862
      %v2871 = vmul.f32 %v2862, %v2870
      %v2872 = vsub.f32 1.0, %v2871
      %v2873 = vmul.f32 %v2870, %v2872
      %v2874 = vadd.f32 %v2870, %v2873
      %vm2875 = vweird.f32 %v2862
      %vm2876 = vweird.f32 %v2870
      %vm2877 = vmor %vm2875, %vm2876
      %v2878 = vsel %vm2877, %v2870, %v2874
      %v2879 = vand.u32 2147483647, %v2862
      %vm2880 = vcmp.eq.f32.partialorder %v2879, 8.507059e+37
      %v2881 = vand.u32 %v2862, 2147483648
      %v2882 = vor.u32 1.1754944e-38, %v2881
      %v2883 = vsel %vm2880, %v2882, %v2878
      %v2884 = vmul.f32 1.0, %v2883
      %v2885 = vrcp.pop %v2863
      %v2886 = vmul.f32 %v2863, %v2885
      %v2887 = vsub.f32 1.0, %v2886
      %v2888 = vmul.f32 %v2885, %v2887
      %v2889 = vadd.f32 %v2885, %v2888
      %vm2890 = vweird.f32 %v2863
      %vm2891 = vweird.f32 %v2885
      %vm2892 = vmor %vm2890, %vm2891
      %v2893 = vsel %vm2892, %v2885, %v2889
      %v2894 = vand.u32 2147483647, %v2863
      %vm2895 = vcmp.eq.f32.partialorder %v2894, 8.507059e+37
      %v2896 = vand.u32 %v2863, 2147483648
      %v2897 = vor.u32 1.1754944e-38, %v2896
      %v2898 = vsel %vm2895, %v2897, %v2893
      %v2899 = vmul.f32 1.0, %v2898
      %v2900 = vrcp.pop %v2864
      %v2901 = vmul.f32 %v2864, %v2900
      %v2902 = vsub.f32 1.0, %v2901
      %v2903 = vmul.f32 %v2900, %v2902
      %v2904 = vadd.f32 %v2900, %v2903
      %vm2905 = vweird.f32 %v2864
      %vm2906 = vweird.f32 %v2900
      %vm2907 = vmor %vm2905, %vm2906
      %v2908 = vsel %vm2907, %v2900, %v2904
      %v2909 = vand.u32 2147483647, %v2864
      %vm2910 = vcmp.eq.f32.partialorder %v2909, 8.507059e+37
      %v2911 = vand.u32 %v2864, 2147483648
      %v2912 = vor.u32 1.1754944e-38, %v2911
      %v2913 = vsel %vm2910, %v2912, %v2908
      %v2914 = vmul.f32 1.0, %v2913
      %v2915 = vrcp.pop %v2865
      %v2916 = vmul.f32 %v2865, %v2915
      %v2917 = vsub.f32 1.0, %v2916
      %v2918 = vmul.f32 %v2915, %v2917
      %v2919 = vadd.f32 %v2915, %v2918
      %vm2920 = vweird.f32 %v2865
      %vm2921 = vweird.f32 %v2915
      %vm2922 = vmor %vm2920, %vm2921
      %v2923 = vsel %vm2922, %v2915, %v2919
      %v2924 = vand.u32 2147483647, %v2865
      %vm2925 = vcmp.eq.f32.partialorder %v2924, 8.507059e+37
      %v2926 = vand.u32 %v2865, 2147483648
      %v2927 = vor.u32 1.1754944e-38, %v2926
      %v2928 = vsel %vm2925, %v2927, %v2923
      %v2929 = vmul.f32 1.0, %v2928
      %v2930 = vrcp.pop %v2866
      %v2931 = vmul.f32 %v2866, %v2930
      %v2932 = vsub.f32 1.0, %v2931
      %v2933 = vmul.f32 %v2930, %v2932
      %v2934 = vadd.f32 %v2930, %v2933
      %vm2935 = vweird.f32 %v2866
      %vm2936 = vweird.f32 %v2930
      %vm2937 = vmor %vm2935, %vm2936
      %v2938 = vsel %vm2937, %v2930, %v2934
      %v2939 = vand.u32 2147483647, %v2866
      %vm2940 = vcmp.eq.f32.partialorder %v2939, 8.507059e+37
      %v2941 = vand.u32 %v2866, 2147483648
      %v2942 = vor.u32 1.1754944e-38, %v2941
      %v2943 = vsel %vm2940, %v2942, %v2938
      %v2944 = vmul.f32 1.0, %v2943
      %v2945 = vrcp.pop %v2867
      %v2946 = vmul.f32 %v2867, %v2945
      %v2947 = vsub.f32 1.0, %v2946
      %v2948 = vmul.f32 %v2945, %v2947
      %v2949 = vadd.f32 %v2945, %v2948
      %vm2950 = vweird.f32 %v2867
      %vm2951 = vweird.f32 %v2945
      %vm2952 = vmor %vm2950, %vm2951
      %v2953 = vsel %vm2952, %v2945, %v2949
      %v2954 = vand.u32 2147483647, %v2867
      %vm2955 = vcmp.eq.f32.partialorder %v2954, 8.507059e+37
      %v2956 = vand.u32 %v2867, 2147483648
      %v2957 = vor.u32 1.1754944e-38, %v2956
      %v2958 = vsel %vm2955, %v2957, %v2953
      %v2959 = vmul.f32 1.0, %v2958
      %v2960 = vrcp.pop %v2868
      %v2961 = vmul.f32 %v2868, %v2960
      %v2962 = vsub.f32 1.0, %v2961
      %v2963 = vmul.f32 %v2960, %v2962
      %v2964 = vadd.f32 %v2960, %v2963
      %vm2965 = vweird.f32 %v2868
      %vm2966 = vweird.f32 %v2960
      %vm2967 = vmor %vm2965, %vm2966
      %v2968 = vsel %vm2967, %v2960, %v2964
      %v2969 = vand.u32 2147483647, %v2868
      %vm2970 = vcmp.eq.f32.partialorder %v2969, 8.507059e+37
      %v2971 = vand.u32 %v2868, 2147483648
      %v2972 = vor.u32 1.1754944e-38, %v2971
      %v2973 = vsel %vm2970, %v2972, %v2968
      %v2974 = vmul.f32 1.0, %v2973
      %v2975 = vrcp.pop %v2869
      %v2976 = vmul.f32 %v2869, %v2975
      %v2977 = vsub.f32 1.0, %v2976
      %v2978 = vmul.f32 %v2975, %v2977
      %v2979 = vadd.f32 %v2975, %v2978
      %vm2980 = vweird.f32 %v2869
      %vm2981 = vweird.f32 %v2975
      %vm2982 = vmor %vm2980, %vm2981
      %v2983 = vsel %vm2982, %v2975, %v2979
      %v2984 = vand.u32 2147483647, %v2869
      %vm2985 = vcmp.eq.f32.partialorder %v2984, 8.507059e+37
      %v2986 = vand.u32 %v2869, 2147483648
      %v2987 = vor.u32 1.1754944e-38, %v2986
      %v2988 = vsel %vm2985, %v2987, %v2983
      %v2989 = vmul.f32 1.0, %v2988
      %v2990 = vmul.f32 %v2819, %v2884
      %v2991 = vmul.f32 %v2821, %v2899
      %v2992 = vmul.f32 %v2824, %v2914
      %v2993 = vmul.f32 %v2826, %v2929
      %v2994 = vmul.f32 %v2829, %v2944
      %v2995 = vmul.f32 %v2831, %v2959
      %v2996 = vmul.f32 %v2834, %v2974
      %v2997 = vmul.f32 %v2836, %v2989
      %v2998 = vadd.f32 %v2990, %v2991
      %v2999 = vadd.f32 %v2998, %v2992
      %v3000 = vadd.f32 %v2999, %v2993
      %v3001 = vadd.f32 %v3000, %v2994
      %v3002 = vadd.f32 %v3001, %v2995
      %v3003 = vadd.f32 %v3002, %v2996
      %v3004 = vadd.f32 %v3003, %v2997
      %v3005 = vrot.slane %v3004, 4
      %v3006 = vadd.f32 %v3004, %v3005
      %v3007 = vrot.slane %v3006, 2
      %v3008 = vadd.f32 %v3006, %v3007
      %v3009 = vrot.slane %v3008, 1
      %v3010 = vadd.f32 %v3008, %v3009
      %v3011 = vmul.f32 %v3010, 0.015625
      %v3012 = vld [vmem:[%s15] sm:$0x1]
      %v3013 = vmul.f32 %v3011, %v3012
      %vm3014 = vcmask 1040384
      %v3015 = vsel %vm3014, %v3013, 0.0
      %3016 = vadd.xlane.f32.xlu0 %v3015
      %v3017 = vpop.xlane.xlu0 %3016
      %v3018 = vld [vmem:[%s16] sm:$0x1]
      %v3019 = vadd.f32 %v3017, %v3018
      %3020 = vst [vmem:[%s549] sm:$0x1] %v3019
      %p3021 = scmp.lt.s32.totalorder %s28, 1
      %s3022 = scalar_select %p3021, %s28, 1
      %s3023 = scalar_lea.vmem %s17, %s3022
      // Predicated region
      $region89: #{efficientnet_gen_forward.1} parent=87 // pred_check
        %p3024 = pneg %p408
      $region90: #{efficientnet_gen_forward.1} parent=87 // pred_check_branch
        %3026 = sbr.rel (%p3024) target = $region92
      $region91: #{efficientnet_gen_forward.1} parent=87 // pred_region
        _
      $region92: #{efficientnet_gen_forward.1} parent=87 // pred_fallthru
        _
    $region88: #{efficientnet_gen_forward.1} parent=5 // pred_fallthru
      _
    %p3027 = scmp.le.s32.totalorder 2, %s23
    // Predicated region
    $region93: #{efficientnet_gen_forward.1} parent=5 // pred_check
      %p3028 = pneg %p3027
    $region94: #{efficientnet_gen_forward.1} parent=5 // pred_check_branch
      %3030 = sbr.rel (%p3028) target = $region96
    $region95: #{efficientnet_gen_forward.1} parent=5 // pred_region
      %s3031 = ssub.s32 %s23, 2
      // Predicated region
      $region97: #{efficientnet_gen_forward.1} parent=95 // pred_check
        %p3032 = pneg %p414
      $region98: #{efficientnet_gen_forward.1} parent=95 // pred_check_branch
        %3034 = sbr.rel (%p3032) target = $region100
      $region99: #{efficientnet_gen_forward.1} parent=95 // pred_region
        %p3035 = scmp.lt.s32.totalorder %s29, 1
        %s3036 = scalar_select %p3035, %s29, 1
        %s3037 = scalar_lea.vmem %s17, %s3036
      $region100: #{efficientnet_gen_forward.1} parent=95 // pred_fallthru
        _
    $region96: #{efficientnet_gen_forward.1} parent=5 // pred_fallthru
      _
  $region6: #{efficientnet_gen_forward.1} parent=0 // loop_footer
    %s27 = sadd.s32 1, %s23
  $region7: #{efficientnet_gen_forward.1} parent=0 // loop_footer_branch
    %22 = sbr.rel target = $region3
  $region8: #{efficientnet_gen_forward.1} parent=0 // loop_exit
    _

</llo_original>
